<compile_context>
chip_gen: v6e
topology: v6e:2x2x1
jax: 0.10.0
libtpu: 0.0.40
codegen_flags: <defaults>
</compile_context>

<pallas_src>
import jax
import jax.numpy as jnp
from jax.experimental import pallas as pl
from jax.experimental.pallas import tpu as pltpu

_BN_EPS = 1e-5


# ----------------------------------------------------------------------------
# Fused kernel (closed over static image width W and planes P)
# ----------------------------------------------------------------------------
def _make_kernel(W, P):

    def kernel(x_ref, mxm_ref, mxp_ref, mym_ref, myp_ref,
               w1d_ref, wc1_ref, w3a_ref, w1b_ref, wc2_ref, w3b_ref, wout_ref,
               c1d_ref, c2a_ref, c3a_ref, c1b_ref, c2b_ref, c3b_ref, cout_ref,
               o_ref):
        f32 = jnp.float32
        bf16 = jnp.bfloat16

        def mm(a, w_ref):
            # MXU: bf16 operands, f32 accumulation.
            return jnp.dot(a.astype(bf16), w_ref[...],
                           preferred_element_type=f32)

        def roll0(v, shift):
            # Static, non-negative sublane roll (XLU); jnp.roll semantics.
            return pltpu.roll(v, shift % v.shape[0], 0)

        # Boundary masks (precomputed in the wrapper, resident in VMEM).
        m_xm1 = mxm_ref[...]
        m_xp1 = mxp_ref[...]
        m_ym1 = mym_ref[...]
        m_yp1 = myp_ref[...]

        def conv3x3(h, wc_ref, bias_ref):
            # h: (R, P) f32.  One merged matmul covers all nine taps:
            #   q = [in(x-1) | in(x) | in(x+1)]            (R, 3P)
            #   p = q @ wc                                  (R, 3P)
            #   p[:, ky*P:(ky+1)*P] = sum_kx q_kx @ w[ky, kx]
            # and the +-1 vertical taps are rolls of the p column blocks.
            q_m1 = m_xm1 * roll0(h, 1)      # reads column x-1 (zero at x==0)
            q_p1 = m_xp1 * roll0(h, -1)     # reads column x+1 (zero at x==W-1)
            q = jnp.concatenate([q_m1, h, q_p1], axis=1)
            p = mm(q, wc_ref)
            p_m1 = p[:, :P]
            p_0 = p[:, P:2 * P]
            p_p1 = p[:, 2 * P:]
            acc = (p_0
                   + m_ym1 * roll0(p_m1, W)    # reads row y-1 (zero at y==0)
                   + m_yp1 * roll0(p_p1, -W))  # reads row y+1 (zero at y==H-1)
            return jnp.maximum(acc + bias_ref[...], 0.0)

        x = x_ref[...]                                     # (R, Cin) bf16

        # ---- bottleneck 1 (conv1 and downsample share LHS -> one matmul) ----
        t = mm(x, w1d_ref) + c1d_ref[...]                  # (R, P + 4P)
        h = jnp.maximum(t[:, :P], 0.0)                     # conv1 + bn1 + relu
        res = t[:, P:]                                     # downsample + bn
        h = conv3x3(h, wc1_ref, c2a_ref)                   # conv2 + bn2 + relu
        b1 = jnp.maximum(mm(h, w3a_ref) + c3a_ref[...] + res, 0.0)

        # ---- bottleneck 2 (identity residual stays in VMEM/vregs) ----
        g = jnp.maximum(mm(b1, w1b_ref) + c1b_ref[...], 0.0)
        g = conv3x3(g, wc2_ref, c2b_ref)
        b2 = jnp.maximum(mm(g, w3b_ref) + c3b_ref[...] + b1, 0.0)

        # ---- conv_out (1x1, Cout=1, bias, no relu) ----
        o_ref[...] = mm(b2, wout_ref) + cout_ref[...]      # (R, 1)

    return kernel


# ----------------------------------------------------------------------------
# Parameter folding (raw weights; BN folded; bf16 matmul operands)
# ----------------------------------------------------------------------------
def _fold_1x1(w, scale, shift):
    wf = (w * scale[None, :]).astype(jnp.bfloat16)
    return wf, shift[None, :].astype(jnp.float32)


def _fold_3x3(w, scale, shift):
    """(3,3,Cin,Cout) HWIO conv + affine -> (3*Cin, 3*Cout) merged-tap matrix.

    wc[kx*Cin + cin, ky*Cout + cout] = w[ky, kx, cin, cout] * scale[cout],
    so [in(x-1) | in(x) | in(x+1)] @ wc stacks the three per-ky partial sums.
    """
    cin, cout = w.shape[2], w.shape[3]
    wf = w * scale[None, None, None, :]
    wc = jnp.transpose(wf, (1, 2, 0, 3)).reshape(3 * cin, 3 * cout)
    return wc.astype(jnp.bfloat16), shift[None, :].astype(jnp.float32)


# ----------------------------------------------------------------------------
# Forward pass (single pallas_call)
# ----------------------------------------------------------------------------
def initial_task_prediction_forward(x_nhwc, params, *, images_per_step=1):
    N, H, W, Cin = x_nhwc.shape
    if N % images_per_step != 0:
        raise ValueError("images_per_step must divide the batch size")
    ipb = images_per_step
    R = ipb * H * W                            # activation rows per grid step
    P = params["b1"]["w1"].shape[1]            # planes
    C4 = 4 * P                                 # intermediate_channels

    # ---- fold parameters ----
    p1, p2 = params["b1"], params["b2"]
    w1a, c1a = _fold_1x1(p1["w1"], *p1["bn1"])
    if "wd" in p1:
        wda, cda = _fold_1x1(p1["wd"], *p1["bnd"])
    else:
        wda = jnp.eye(Cin, dtype=jnp.float32).astype(jnp.bfloat16)
        cda = jnp.zeros((1, Cin), jnp.float32)
    w1d = jnp.concatenate([w1a, wda], axis=1)              # (Cin, P + 4P)
    c1d = jnp.concatenate([c1a, cda], axis=1)
    wc1, c2a = _fold_3x3(p1["w2"], *p1["bn2"])
    w3a, c3a = _fold_1x1(p1["w3"], *p1["bn3"])
    w1b, c1b = _fold_1x1(p2["w1"], *p2["bn1"])
    wc2, c2b = _fold_3x3(p2["w2"], *p2["bn2"])
    w3b, c3b = _fold_1x1(p2["w3"], *p2["bn3"])
    wout = params["w_out"].astype(jnp.bfloat16)            # (4P, 1)
    cout = params["b_out"].reshape(1, 1).astype(jnp.float32)

    # ---- per-image boundary masks for the rolled 3x3 taps ----
    r = jnp.arange(R, dtype=jnp.int32)
    x_idx = r % W
    y_idx = (r % (H * W)) // W
    as_mask = lambda b: b.astype(jnp.float32).reshape(R, 1)
    m_xm1 = as_mask(x_idx >= 1)
    m_xp1 = as_mask(x_idx <= W - 2)
    m_ym1 = as_mask(y_idx >= 1)
    m_yp1 = as_mask(y_idx <= H - 2)

    x_flat = x_nhwc.reshape(N * H * W, Cin).astype(jnp.bfloat16)

    masks = (m_xm1, m_xp1, m_ym1, m_yp1)
    weights = (w1d, wc1, w3a, w1b, wc2, w3b, wout)
    biases = (c1d, c2a, c3a, c1b, c2b, c3b, cout)
    args = (x_flat,) + masks + weights + biases

    const2d = lambda a: pl.BlockSpec(a.shape, lambda n: (0, 0))
    in_specs = ([pl.BlockSpec((R, Cin), lambda n: (n, 0))]
                + [const2d(a) for a in masks + weights + biases])
    out_specs = pl.BlockSpec((R, 1), lambda n: (n, 0))

    steps = N // ipb
    mm_kn = (Cin * (P + C4) + (3 * P) * (3 * P) + P * C4
             + C4 * P + (3 * P) * (3 * P) + P * C4 + C4 * 1)
    flops = 2 * R * mm_kn * steps
    bytes_accessed = (sum(int(a.size) * a.dtype.itemsize for a in args)
                      + N * H * W * 4)

    out = pl.pallas_call(
        _make_kernel(W, P),
        out_shape=jax.ShapeDtypeStruct((N * H * W, 1), jnp.float32),
        grid=(steps,),
        in_specs=in_specs,
        out_specs=out_specs,
        compiler_params=pltpu.CompilerParams(
            dimension_semantics=("parallel",)),
        cost_estimate=pl.CostEstimate(
            flops=int(flops), transcendentals=0,
            bytes_accessed=int(bytes_accessed)),
    )(*args)
    return out.reshape(N, H, W, 1)


# ----------------------------------------------------------------------------
# Parameter initialization (deterministic, synthetic)
# ----------------------------------------------------------------------------
def _init_bn(key, c):
    k1, k2, k3, k4 = jax.random.split(key, 4)
    gamma = 1.0 + 0.1 * jax.random.normal(k1, (c,), jnp.float32)
    beta = 0.1 * jax.random.normal(k2, (c,), jnp.float32)
    mean = 0.1 * jax.random.normal(k3, (c,), jnp.float32)
    var = 1.0 + 0.1 * jnp.abs(jax.random.normal(k4, (c,), jnp.float32))
    scale = gamma / jnp.sqrt(var + _BN_EPS)
    shift = beta - mean * scale
    return scale, shift


def _init_bottleneck(key, inplanes, planes, with_downsample):
    ks = jax.random.split(key, 8)
    p = {
        "w1": 0.1 * jax.random.normal(ks[0], (inplanes, planes), jnp.float32),
        "w2": 0.1 * jax.random.normal(ks[1], (3, 3, planes, planes), jnp.float32),
        "w3": 0.1 * jax.random.normal(ks[2], (planes, planes * 4), jnp.float32),
        "bn1": _init_bn(ks[3], planes),
        "bn2": _init_bn(ks[4], planes),
        "bn3": _init_bn(ks[5], planes * 4),
    }
    if with_downsample:
        p["wd"] = 0.1 * jax.random.normal(ks[6], (inplanes, planes * 4), jnp.float32)
        p["bnd"] = _init_bn(ks[7], planes * 4)
    return p


def init_params(key, input_channels, intermediate_channels):
    k1, k2, k3 = jax.random.split(key, 3)
    planes = intermediate_channels // 4
    return {
        "b1": _init_bottleneck(k1, input_channels, planes,
                               with_downsample=(input_channels !=
                                                intermediate_channels)),
        "b2": _init_bottleneck(k2, intermediate_channels, planes,
                               with_downsample=False),
        "w_out": 0.1 * jax.random.normal(
            k3, (intermediate_channels, 1), jnp.float32),
        "b_out": jnp.asarray([0.05], jnp.float32),
    }


# ----------------------------------------------------------------------------
# Pure-JAX reference (f32, for correctness check)
# ----------------------------------------------------------------------------
def _ref_conv(x, w_hwio, padding):
    return jax.lax.conv_general_dilated(
        x, w_hwio, window_strides=(1, 1), padding=padding,
        dimension_numbers=("NHWC", "HWIO", "NHWC"),
        precision=jax.lax.Precision.HIGHEST)


def _ref_bottleneck(x, p):
    cin = x.shape[-1]
    planes = p["w1"].shape[1]
    h = _ref_conv(x, p["w1"].reshape(1, 1, cin, planes), "VALID")
    h = jnp.maximum(h * p["bn1"][0] + p["bn1"][1], 0.0)
    h = _ref_conv(h, p["w2"], [(1, 1), (1, 1)])
    h = jnp.maximum(h * p["bn2"][0] + p["bn2"][1], 0.0)
    h = _ref_conv(h, p["w3"].reshape(1, 1, planes, p["w3"].shape[1]), "VALID")
    h = h * p["bn3"][0] + p["bn3"][1]
    if "wd" in p:
        r = _ref_conv(x, p["wd"].reshape(1, 1, cin, p["wd"].shape[1]), "VALID")
        r = r * p["bnd"][0] + p["bnd"][1]
    else:
        r = x
    return jnp.maximum(h + r, 0.0)


def _ref_forward(x, params):
    out = _ref_bottleneck(x, params["b1"])
    out = _ref_bottleneck(out, params["b2"])
    c = out.shape[-1]
    out = _ref_conv(out, params["w_out"].reshape(1, 1, c, 1), "VALID")
    return out + params["b_out"]


# ----------------------------------------------------------------------------
if __name__ == "__main__":
    key = jax.random.PRNGKey(0)
    kx, kp = jax.random.split(key)

    # Small shapes consistent with the module:
    #   input_channels=16, intermediate_channels=32 (planes=8, expansion 4)
    N, H, W = 2, 16, 16
    input_channels, intermediate_channels = 16, 32

    x_nhwc = jax.random.normal(kx, (N, H, W, input_channels), jnp.float32)
    params = init_params(kp, input_channels, intermediate_channels)

    ref = jax.block_until_ready(_ref_forward(x_nhwc, params))

    fwd = jax.jit(initial_task_prediction_forward,
                  static_argnames=("images_per_step",))

    # grid=(N,) with "parallel" semantics: one image per step (v7x megacore).
    out1 = jax.block_until_ready(fwd(x_nhwc, params, images_per_step=1))
    assert out1.shape == (N, H, W, 1)
    # bf16 matmul operands (f32 accumulation) -> loosened tolerance vs f32 ref.
    assert jnp.allclose(out1, ref, rtol=4e-2, atol=4e-2), \
        float(jnp.max(jnp.abs(out1 - ref)))

    # Batch folded into a single grid step (single-TensorCore v5e/v6e knob).
    out2 = jax.block_until_ready(fwd(x_nhwc, params, images_per_step=N))
    assert jnp.allclose(out2, ref, rtol=4e-2, atol=4e-2), \
        float(jnp.max(jnp.abs(out2 - ref)))

    print("KERNEL_OK")
</pallas_src>

<mosaic_0001>
module attributes {stable_mosaic.version = 11 : i64} {
  func.func @kernel(%arg0: i32, %arg1: memref<256x16xbf16, #tpu.memory_space<vmem>>, %arg2: memref<256x1xf32, #tpu.memory_space<vmem>>, %arg3: memref<256x1xf32, #tpu.memory_space<vmem>>, %arg4: memref<256x1xf32, #tpu.memory_space<vmem>>, %arg5: memref<256x1xf32, #tpu.memory_space<vmem>>, %arg6: memref<16x40xbf16, #tpu.memory_space<vmem>>, %arg7: memref<24x24xbf16, #tpu.memory_space<vmem>>, %arg8: memref<8x32xbf16, #tpu.memory_space<vmem>>, %arg9: memref<32x8xbf16, #tpu.memory_space<vmem>>, %arg10: memref<24x24xbf16, #tpu.memory_space<vmem>>, %arg11: memref<8x32xbf16, #tpu.memory_space<vmem>>, %arg12: memref<32x1xbf16, #tpu.memory_space<vmem>>, %arg13: memref<1x40xf32, #tpu.memory_space<vmem>>, %arg14: memref<1x8xf32, #tpu.memory_space<vmem>>, %arg15: memref<1x32xf32, #tpu.memory_space<vmem>>, %arg16: memref<1x8xf32, #tpu.memory_space<vmem>>, %arg17: memref<1x8xf32, #tpu.memory_space<vmem>>, %arg18: memref<1x32xf32, #tpu.memory_space<vmem>>, %arg19: memref<1x1xf32, #tpu.memory_space<vmem>>, %arg20: memref<256x1xf32, #tpu.memory_space<vmem>>) attributes {dimension_semantics = [#tpu.dimension_semantics<parallel>], iteration_bounds = array<i64: 2>, scalar_prefetch = 0 : i64, scratch_operands = 0 : i64, tpu.core_type = #tpu.core_type<tc>, window_params = [{transform_indices = @transform_0, window_bounds = array<i64: 256, 16>}, {pipeline_mode = #tpu.pipeline_mode<synchronous>, transform_indices = @transform_1, window_bounds = array<i64: 256, 1>}, {pipeline_mode = #tpu.pipeline_mode<synchronous>, transform_indices = @transform_2, window_bounds = array<i64: 256, 1>}, {pipeline_mode = #tpu.pipeline_mode<synchronous>, transform_indices = @transform_3, window_bounds = array<i64: 256, 1>}, {pipeline_mode = #tpu.pipeline_mode<synchronous>, transform_indices = @transform_4, window_bounds = array<i64: 256, 1>}, {pipeline_mode = #tpu.pipeline_mode<synchronous>, transform_indices = @transform_5, window_bounds = array<i64: 16, 40>}, {pipeline_mode = #tpu.pipeline_mode<synchronous>, transform_indices = @transform_6, window_bounds = array<i64: 24, 24>}, {pipeline_mode = #tpu.pipeline_mode<synchronous>, transform_indices = @transform_7, window_bounds = array<i64: 8, 32>}, {pipeline_mode = #tpu.pipeline_mode<synchronous>, transform_indices = @transform_8, window_bounds = array<i64: 32, 8>}, {pipeline_mode = #tpu.pipeline_mode<synchronous>, transform_indices = @transform_9, window_bounds = array<i64: 24, 24>}, {pipeline_mode = #tpu.pipeline_mode<synchronous>, transform_indices = @transform_10, window_bounds = array<i64: 8, 32>}, {pipeline_mode = #tpu.pipeline_mode<synchronous>, transform_indices = @transform_11, window_bounds = array<i64: 32, 1>}, {pipeline_mode = #tpu.pipeline_mode<synchronous>, transform_indices = @transform_12, window_bounds = array<i64: 1, 40>}, {pipeline_mode = #tpu.pipeline_mode<synchronous>, transform_indices = @transform_13, window_bounds = array<i64: 1, 8>}, {pipeline_mode = #tpu.pipeline_mode<synchronous>, transform_indices = @transform_14, window_bounds = array<i64: 1, 32>}, {pipeline_mode = #tpu.pipeline_mode<synchronous>, transform_indices = @transform_15, window_bounds = array<i64: 1, 8>}, {pipeline_mode = #tpu.pipeline_mode<synchronous>, transform_indices = @transform_16, window_bounds = array<i64: 1, 8>}, {pipeline_mode = #tpu.pipeline_mode<synchronous>, transform_indices = @transform_17, window_bounds = array<i64: 1, 32>}, {pipeline_mode = #tpu.pipeline_mode<synchronous>, transform_indices = @transform_18, window_bounds = array<i64: 1, 1>}, {transform_indices = @transform_19, window_bounds = array<i64: 256, 1>}]} {
    %c0 = arith.constant 0 : index
    %c0_0 = arith.constant 0 : index
    %0 = vector.load %arg2[%c0, %c0_0] : memref<256x1xf32, #tpu.memory_space<vmem>>, vector<256x1xf32>
    %c0_1 = arith.constant 0 : index
    %c0_2 = arith.constant 0 : index
    %1 = vector.load %arg3[%c0_1, %c0_2] : memref<256x1xf32, #tpu.memory_space<vmem>>, vector<256x1xf32>
    %c0_3 = arith.constant 0 : index
    %c0_4 = arith.constant 0 : index
    %2 = vector.load %arg4[%c0_3, %c0_4] : memref<256x1xf32, #tpu.memory_space<vmem>>, vector<256x1xf32>
    %c0_5 = arith.constant 0 : index
    %c0_6 = arith.constant 0 : index
    %3 = vector.load %arg5[%c0_5, %c0_6] : memref<256x1xf32, #tpu.memory_space<vmem>>, vector<256x1xf32>
    %c0_7 = arith.constant 0 : index
    %c0_8 = arith.constant 0 : index
    %4 = vector.load %arg1[%c0_7, %c0_8] : memref<256x16xbf16, #tpu.memory_space<vmem>>, vector<256x16xbf16>
    %c0_9 = arith.constant 0 : index
    %c0_10 = arith.constant 0 : index
    %5 = vector.load %arg6[%c0_9, %c0_10] : memref<16x40xbf16, #tpu.memory_space<vmem>>, vector<16x40xbf16>
    %cst = arith.constant dense<0.000000e+00> : vector<256x40xf32>
    %6 = tpu.matmul %4, %5, %cst {dimension_numbers = #tpu.dot_dimension_numbers<[1], [0], [0], [1], [0, 0, 1, 1], [], []>} : vector<256x16xbf16>, vector<16x40xbf16>, vector<256x40xf32> -> vector<256x40xf32>
    %c0_11 = arith.constant 0 : index
    %c0_12 = arith.constant 0 : index
    %7 = vector.load %arg13[%c0_11, %c0_12] : memref<1x40xf32, #tpu.memory_space<vmem>>, vector<1x40xf32>
    %8 = vector.broadcast %7 : vector<1x40xf32> to vector<256x40xf32>
    %9 = arith.addf %6, %8 : vector<256x40xf32>
    %10 = vector.extract_strided_slice %9 {offsets = [0, 0], sizes = [256, 8], strides = [1, 1]} : vector<256x40xf32> to vector<256x8xf32>
    %cst_13 = arith.constant 0.000000e+00 : f32
    %11 = vector.broadcast %cst_13 : f32 to vector<256x8xf32>
    %12 = arith.maximumf %10, %11 : vector<256x8xf32>
    %13 = vector.extract_strided_slice %9 {offsets = [0, 8], sizes = [256, 32], strides = [1, 1]} : vector<256x40xf32> to vector<256x32xf32>
    %c1_i32 = arith.constant 1 : i32
    %14 = tpu.dynamic_rotate %12 by %c1_i32 dim 0 : vector<256x8xf32>, i32 -> vector<256x8xf32>
    %15 = vector.broadcast %0 : vector<256x1xf32> to vector<256x8xf32>
    %16 = arith.mulf %15, %14 : vector<256x8xf32>
    %c255_i32 = arith.constant 255 : i32
    %17 = tpu.dynamic_rotate %12 by %c255_i32 dim 0 : vector<256x8xf32>, i32 -> vector<256x8xf32>
    %18 = vector.broadcast %1 : vector<256x1xf32> to vector<256x8xf32>
    %19 = arith.mulf %18, %17 : vector<256x8xf32>
    %20 = tpu.concatenate %16, %12, %19 in 1 : vector<256x8xf32>, vector<256x8xf32>, vector<256x8xf32> -> vector<256x24xf32>
    %21 = arith.truncf %20 : vector<256x24xf32> to vector<256x24xbf16>
    %c0_14 = arith.constant 0 : index
    %c0_15 = arith.constant 0 : index
    %22 = vector.load %arg7[%c0_14, %c0_15] : memref<24x24xbf16, #tpu.memory_space<vmem>>, vector<24x24xbf16>
    %cst_16 = arith.constant dense<0.000000e+00> : vector<256x24xf32>
    %23 = tpu.matmul %21, %22, %cst_16 {dimension_numbers = #tpu.dot_dimension_numbers<[1], [0], [0], [1], [0, 0, 1, 1], [], []>} : vector<256x24xbf16>, vector<24x24xbf16>, vector<256x24xf32> -> vector<256x24xf32>
    %24 = vector.extract_strided_slice %23 {offsets = [0, 0], sizes = [256, 8], strides = [1, 1]} : vector<256x24xf32> to vector<256x8xf32>
    %25 = vector.extract_strided_slice %23 {offsets = [0, 8], sizes = [256, 8], strides = [1, 1]} : vector<256x24xf32> to vector<256x8xf32>
    %26 = vector.extract_strided_slice %23 {offsets = [0, 16], sizes = [256, 8], strides = [1, 1]} : vector<256x24xf32> to vector<256x8xf32>
    %c16_i32 = arith.constant 16 : i32
    %27 = tpu.dynamic_rotate %24 by %c16_i32 dim 0 : vector<256x8xf32>, i32 -> vector<256x8xf32>
    %28 = vector.broadcast %2 : vector<256x1xf32> to vector<256x8xf32>
    %29 = arith.mulf %28, %27 : vector<256x8xf32>
    %30 = arith.addf %25, %29 : vector<256x8xf32>
    %c240_i32 = arith.constant 240 : i32
    %31 = tpu.dynamic_rotate %26 by %c240_i32 dim 0 : vector<256x8xf32>, i32 -> vector<256x8xf32>
    %32 = vector.broadcast %3 : vector<256x1xf32> to vector<256x8xf32>
    %33 = arith.mulf %32, %31 : vector<256x8xf32>
    %34 = arith.addf %30, %33 : vector<256x8xf32>
    %c0_17 = arith.constant 0 : index
    %c0_18 = arith.constant 0 : index
    %35 = vector.load %arg14[%c0_17, %c0_18] : memref<1x8xf32, #tpu.memory_space<vmem>>, vector<1x8xf32>
    %36 = vector.broadcast %35 : vector<1x8xf32> to vector<256x8xf32>
    %37 = arith.addf %34, %36 : vector<256x8xf32>
    %cst_19 = arith.constant 0.000000e+00 : f32
    %38 = vector.broadcast %cst_19 : f32 to vector<256x8xf32>
    %39 = arith.maximumf %37, %38 : vector<256x8xf32>
    %40 = arith.truncf %39 : vector<256x8xf32> to vector<256x8xbf16>
    %c0_20 = arith.constant 0 : index
    %c0_21 = arith.constant 0 : index
    %41 = vector.load %arg8[%c0_20, %c0_21] : memref<8x32xbf16, #tpu.memory_space<vmem>>, vector<8x32xbf16>
    %cst_22 = arith.constant dense<0.000000e+00> : vector<256x32xf32>
    %42 = tpu.matmul %40, %41, %cst_22 {dimension_numbers = #tpu.dot_dimension_numbers<[1], [0], [0], [1], [0, 0, 1, 1], [], []>} : vector<256x8xbf16>, vector<8x32xbf16>, vector<256x32xf32> -> vector<256x32xf32>
    %c0_23 = arith.constant 0 : index
    %c0_24 = arith.constant 0 : index
    %43 = vector.load %arg15[%c0_23, %c0_24] : memref<1x32xf32, #tpu.memory_space<vmem>>, vector<1x32xf32>
    %44 = vector.broadcast %43 : vector<1x32xf32> to vector<256x32xf32>
    %45 = arith.addf %42, %44 : vector<256x32xf32>
    %46 = arith.addf %45, %13 : vector<256x32xf32>
    %cst_25 = arith.constant 0.000000e+00 : f32
    %47 = vector.broadcast %cst_25 : f32 to vector<256x32xf32>
    %48 = arith.maximumf %46, %47 : vector<256x32xf32>
    %49 = arith.truncf %48 : vector<256x32xf32> to vector<256x32xbf16>
    %c0_26 = arith.constant 0 : index
    %c0_27 = arith.constant 0 : index
    %50 = vector.load %arg9[%c0_26, %c0_27] : memref<32x8xbf16, #tpu.memory_space<vmem>>, vector<32x8xbf16>
    %cst_28 = arith.constant dense<0.000000e+00> : vector<256x8xf32>
    %51 = tpu.matmul %49, %50, %cst_28 {dimension_numbers = #tpu.dot_dimension_numbers<[1], [0], [0], [1], [0, 0, 1, 1], [], []>} : vector<256x32xbf16>, vector<32x8xbf16>, vector<256x8xf32> -> vector<256x8xf32>
    %c0_29 = arith.constant 0 : index
    %c0_30 = arith.constant 0 : index
    %52 = vector.load %arg16[%c0_29, %c0_30] : memref<1x8xf32, #tpu.memory_space<vmem>>, vector<1x8xf32>
    %53 = vector.broadcast %52 : vector<1x8xf32> to vector<256x8xf32>
    %54 = arith.addf %51, %53 : vector<256x8xf32>
    %cst_31 = arith.constant 0.000000e+00 : f32
    %55 = vector.broadcast %cst_31 : f32 to vector<256x8xf32>
    %56 = arith.maximumf %54, %55 : vector<256x8xf32>
    %c1_i32_32 = arith.constant 1 : i32
    %57 = tpu.dynamic_rotate %56 by %c1_i32_32 dim 0 : vector<256x8xf32>, i32 -> vector<256x8xf32>
    %58 = vector.broadcast %0 : vector<256x1xf32> to vector<256x8xf32>
    %59 = arith.mulf %58, %57 : vector<256x8xf32>
    %c255_i32_33 = arith.constant 255 : i32
    %60 = tpu.dynamic_rotate %56 by %c255_i32_33 dim 0 : vector<256x8xf32>, i32 -> vector<256x8xf32>
    %61 = vector.broadcast %1 : vector<256x1xf32> to vector<256x8xf32>
    %62 = arith.mulf %61, %60 : vector<256x8xf32>
    %63 = tpu.concatenate %59, %56, %62 in 1 : vector<256x8xf32>, vector<256x8xf32>, vector<256x8xf32> -> vector<256x24xf32>
    %64 = arith.truncf %63 : vector<256x24xf32> to vector<256x24xbf16>
    %c0_34 = arith.constant 0 : index
    %c0_35 = arith.constant 0 : index
    %65 = vector.load %arg10[%c0_34, %c0_35] : memref<24x24xbf16, #tpu.memory_space<vmem>>, vector<24x24xbf16>
    %cst_36 = arith.constant dense<0.000000e+00> : vector<256x24xf32>
    %66 = tpu.matmul %64, %65, %cst_36 {dimension_numbers = #tpu.dot_dimension_numbers<[1], [0], [0], [1], [0, 0, 1, 1], [], []>} : vector<256x24xbf16>, vector<24x24xbf16>, vector<256x24xf32> -> vector<256x24xf32>
    %67 = vector.extract_strided_slice %66 {offsets = [0, 0], sizes = [256, 8], strides = [1, 1]} : vector<256x24xf32> to vector<256x8xf32>
    %68 = vector.extract_strided_slice %66 {offsets = [0, 8], sizes = [256, 8], strides = [1, 1]} : vector<256x24xf32> to vector<256x8xf32>
    %69 = vector.extract_strided_slice %66 {offsets = [0, 16], sizes = [256, 8], strides = [1, 1]} : vector<256x24xf32> to vector<256x8xf32>
    %c16_i32_37 = arith.constant 16 : i32
    %70 = tpu.dynamic_rotate %67 by %c16_i32_37 dim 0 : vector<256x8xf32>, i32 -> vector<256x8xf32>
    %71 = vector.broadcast %2 : vector<256x1xf32> to vector<256x8xf32>
    %72 = arith.mulf %71, %70 : vector<256x8xf32>
    %73 = arith.addf %68, %72 : vector<256x8xf32>
    %c240_i32_38 = arith.constant 240 : i32
    %74 = tpu.dynamic_rotate %69 by %c240_i32_38 dim 0 : vector<256x8xf32>, i32 -> vector<256x8xf32>
    %75 = vector.broadcast %3 : vector<256x1xf32> to vector<256x8xf32>
    %76 = arith.mulf %75, %74 : vector<256x8xf32>
    %77 = arith.addf %73, %76 : vector<256x8xf32>
    %c0_39 = arith.constant 0 : index
    %c0_40 = arith.constant 0 : index
    %78 = vector.load %arg17[%c0_39, %c0_40] : memref<1x8xf32, #tpu.memory_space<vmem>>, vector<1x8xf32>
    %79 = vector.broadcast %78 : vector<1x8xf32> to vector<256x8xf32>
    %80 = arith.addf %77, %79 : vector<256x8xf32>
    %cst_41 = arith.constant 0.000000e+00 : f32
    %81 = vector.broadcast %cst_41 : f32 to vector<256x8xf32>
    %82 = arith.maximumf %80, %81 : vector<256x8xf32>
    %83 = arith.truncf %82 : vector<256x8xf32> to vector<256x8xbf16>
    %c0_42 = arith.constant 0 : index
    %c0_43 = arith.constant 0 : index
    %84 = vector.load %arg11[%c0_42, %c0_43] : memref<8x32xbf16, #tpu.memory_space<vmem>>, vector<8x32xbf16>
    %cst_44 = arith.constant dense<0.000000e+00> : vector<256x32xf32>
    %85 = tpu.matmul %83, %84, %cst_44 {dimension_numbers = #tpu.dot_dimension_numbers<[1], [0], [0], [1], [0, 0, 1, 1], [], []>} : vector<256x8xbf16>, vector<8x32xbf16>, vector<256x32xf32> -> vector<256x32xf32>
    %c0_45 = arith.constant 0 : index
    %c0_46 = arith.constant 0 : index
    %86 = vector.load %arg18[%c0_45, %c0_46] : memref<1x32xf32, #tpu.memory_space<vmem>>, vector<1x32xf32>
    %87 = vector.broadcast %86 : vector<1x32xf32> to vector<256x32xf32>
    %88 = arith.addf %85, %87 : vector<256x32xf32>
    %89 = arith.addf %88, %48 : vector<256x32xf32>
    %cst_47 = arith.constant 0.000000e+00 : f32
    %90 = vector.broadcast %cst_47 : f32 to vector<256x32xf32>
    %91 = arith.maximumf %89, %90 : vector<256x32xf32>
    %92 = arith.truncf %91 : vector<256x32xf32> to vector<256x32xbf16>
    %c0_48 = arith.constant 0 : index
    %c0_49 = arith.constant 0 : index
    %93 = vector.load %arg12[%c0_48, %c0_49] : memref<32x1xbf16, #tpu.memory_space<vmem>>, vector<32x1xbf16>
    %cst_50 = arith.constant dense<0.000000e+00> : vector<256x1xf32>
    %94 = tpu.matmul %92, %93, %cst_50 {dimension_numbers = #tpu.dot_dimension_numbers<[1], [0], [0], [1], [0, 0, 1, 1], [], []>} : vector<256x32xbf16>, vector<32x1xbf16>, vector<256x1xf32> -> vector<256x1xf32>
    %c0_51 = arith.constant 0 : index
    %c0_52 = arith.constant 0 : index
    %95 = vector.load %arg19[%c0_51, %c0_52] : memref<1x1xf32, #tpu.memory_space<vmem>>, vector<1x1xf32>
    %96 = vector.broadcast %95 : vector<1x1xf32> to vector<256x1xf32>
    %97 = arith.addf %94, %96 : vector<256x1xf32>
    %c0_53 = arith.constant 0 : index
    %c0_54 = arith.constant 0 : index
    %98 = vector.load %arg20[%c0_53, %c0_54] : memref<256x1xf32, #tpu.memory_space<vmem>>, vector<256x1xf32>
    tpu.vector_store %arg20[%c0_53, %c0_54], %97 {strides = array<i32>} : memref<256x1xf32, #tpu.memory_space<vmem>>, vector<256x1xf32>,
    return
  }
  func.func @transform_0(%arg0: i32) -> (i32, i32) {
    %c0_i32 = arith.constant 0 : i32
    %c0_i32_0 = arith.constant 0 : i32
    return %arg0, %c0_i32 : i32, i32
  }
  func.func @transform_1(%arg0: i32) -> (i32, i32) {
    %c0_i32 = arith.constant 0 : i32
    %c0_i32_0 = arith.constant 0 : i32
    %c0_i32_1 = arith.constant 0 : i32
    return %c0_i32, %c0_i32_0 : i32, i32
  }
  func.func @transform_2(%arg0: i32) -> (i32, i32) {
    %c0_i32 = arith.constant 0 : i32
    %c0_i32_0 = arith.constant 0 : i32
    %c0_i32_1 = arith.constant 0 : i32
    return %c0_i32, %c0_i32_0 : i32, i32
  }
  func.func @transform_3(%arg0: i32) -> (i32, i32) {
    %c0_i32 = arith.constant 0 : i32
    %c0_i32_0 = arith.constant 0 : i32
    %c0_i32_1 = arith.constant 0 : i32
    return %c0_i32, %c0_i32_0 : i32, i32
  }
  func.func @transform_4(%arg0: i32) -> (i32, i32) {
    %c0_i32 = arith.constant 0 : i32
    %c0_i32_0 = arith.constant 0 : i32
    %c0_i32_1 = arith.constant 0 : i32
    return %c0_i32, %c0_i32_0 : i32, i32
  }
  func.func @transform_5(%arg0: i32) -> (i32, i32) {
    %c0_i32 = arith.constant 0 : i32
    %c0_i32_0 = arith.constant 0 : i32
    %c0_i32_1 = arith.constant 0 : i32
    return %c0_i32, %c0_i32_0 : i32, i32
  }
  func.func @transform_6(%arg0: i32) -> (i32, i32) {
    %c0_i32 = arith.constant 0 : i32
    %c0_i32_0 = arith.constant 0 : i32
    %c0_i32_1 = arith.constant 0 : i32
    return %c0_i32, %c0_i32_0 : i32, i32
  }
  func.func @transform_7(%arg0: i32) -> (i32, i32) {
    %c0_i32 = arith.constant 0 : i32
    %c0_i32_0 = arith.constant 0 : i32
    %c0_i32_1 = arith.constant 0 : i32
    return %c0_i32, %c0_i32_0 : i32, i32
  }
  func.func @transform_8(%arg0: i32) -> (i32, i32) {
    %c0_i32 = arith.constant 0 : i32
    %c0_i32_0 = arith.constant 0 : i32
    %c0_i32_1 = arith.constant 0 : i32
    return %c0_i32, %c0_i32_0 : i32, i32
  }
  func.func @transform_9(%arg0: i32) -> (i32, i32) {
    %c0_i32 = arith.constant 0 : i32
    %c0_i32_0 = arith.constant 0 : i32
    %c0_i32_1 = arith.constant 0 : i32
    return %c0_i32, %c0_i32_0 : i32, i32
  }
  func.func @transform_10(%arg0: i32) -> (i32, i32) {
    %c0_i32 = arith.constant 0 : i32
    %c0_i32_0 = arith.constant 0 : i32
    %c0_i32_1 = arith.constant 0 : i32
    return %c0_i32, %c0_i32_0 : i32, i32
  }
  func.func @transform_11(%arg0: i32) -> (i32, i32) {
    %c0_i32 = arith.constant 0 : i32
    %c0_i32_0 = arith.constant 0 : i32
    %c0_i32_1 = arith.constant 0 : i32
    return %c0_i32, %c0_i32_0 : i32, i32
  }
  func.func @transform_12(%arg0: i32) -> (i32, i32) {
    %c0_i32 = arith.constant 0 : i32
    %c0_i32_0 = arith.constant 0 : i32
    %c0_i32_1 = arith.constant 0 : i32
    return %c0_i32, %c0_i32_0 : i32, i32
  }
  func.func @transform_13(%arg0: i32) -> (i32, i32) {
    %c0_i32 = arith.constant 0 : i32
    %c0_i32_0 = arith.constant 0 : i32
    %c0_i32_1 = arith.constant 0 : i32
    return %c0_i32, %c0_i32_0 : i32, i32
  }
  func.func @transform_14(%arg0: i32) -> (i32, i32) {
    %c0_i32 = arith.constant 0 : i32
    %c0_i32_0 = arith.constant 0 : i32
    %c0_i32_1 = arith.constant 0 : i32
    return %c0_i32, %c0_i32_0 : i32, i32
  }
  func.func @transform_15(%arg0: i32) -> (i32, i32) {
    %c0_i32 = arith.constant 0 : i32
    %c0_i32_0 = arith.constant 0 : i32
    %c0_i32_1 = arith.constant 0 : i32
    return %c0_i32, %c0_i32_0 : i32, i32
  }
  func.func @transform_16(%arg0: i32) -> (i32, i32) {
    %c0_i32 = arith.constant 0 : i32
    %c0_i32_0 = arith.constant 0 : i32
    %c0_i32_1 = arith.constant 0 : i32
    return %c0_i32, %c0_i32_0 : i32, i32
  }
  func.func @transform_17(%arg0: i32) -> (i32, i32) {
    %c0_i32 = arith.constant 0 : i32
    %c0_i32_0 = arith.constant 0 : i32
    %c0_i32_1 = arith.constant 0 : i32
    return %c0_i32, %c0_i32_0 : i32, i32
  }
  func.func @transform_18(%arg0: i32) -> (i32, i32) {
    %c0_i32 = arith.constant 0 : i32
    %c0_i32_0 = arith.constant 0 : i32
    %c0_i32_1 = arith.constant 0 : i32
    return %c0_i32, %c0_i32_0 : i32, i32
  }
  func.func @transform_19(%arg0: i32) -> (i32, i32) {
    %c0_i32 = arith.constant 0 : i32
    %c0_i32_0 = arith.constant 0 : i32
    return %arg0, %c0_i32 : i32, i32
  }
}

</mosaic_0001>

<llo_original>
// kernel: initial_task_prediction_forward.1
$region0: #{initial_task_prediction_forward.1}
  #allocation0 [shape = 'u32[]', space=smem, size = 0x4, offset = 0x4, fixed_abs, tag = 'smem constant byte address 0x4 - core index']
  #allocation1 [shape = 'u32[144,128]{1,0:T(1,128)}', space=vmem, size = 0x12000, scoped, tag = 'internal scratch']
  #allocation2 [shape = 'f32[1,1]{1,0:T(1,128)S(1)}', space=vmem, size = 0x200, scoped, tag = 'scoped memory for initial_task_prediction_forward.1']
  %s0 = inlined_call_operand.vmem [shape: bf16[512,16], index: 0, kind: input, shape index: {}]
  %s1 = inlined_call_operand.vmem [shape: f32[256,1], index: 1, kind: input, shape index: {}]
  %s2 = inlined_call_operand.vmem [shape: f32[256,1], index: 2, kind: input, shape index: {}]
  %s3 = inlined_call_operand.vmem [shape: f32[256,1], index: 3, kind: input, shape index: {}]
  %s4 = inlined_call_operand.vmem [shape: f32[256,1], index: 4, kind: input, shape index: {}]
  %s5 = inlined_call_operand.vmem [shape: bf16[16,40], index: 5, kind: input, shape index: {}]
  %s6 = inlined_call_operand.vmem [shape: bf16[24,24], index: 6, kind: input, shape index: {}]
  %s7 = inlined_call_operand.vmem [shape: bf16[8,32], index: 7, kind: input, shape index: {}]
  %s8 = inlined_call_operand.vmem [shape: bf16[32,8], index: 8, kind: input, shape index: {}]
  %s9 = inlined_call_operand.vmem [shape: bf16[24,24], index: 9, kind: input, shape index: {}]
  %s10 = inlined_call_operand.vmem [shape: bf16[8,32], index: 10, kind: input, shape index: {}]
  %s11 = inlined_call_operand.vmem [shape: bf16[32,1], index: 11, kind: input, shape index: {}]
  %s12 = inlined_call_operand.vmem [shape: f32[1,40], index: 12, kind: input, shape index: {}]
  %s13 = inlined_call_operand.vmem [shape: f32[1,8], index: 13, kind: input, shape index: {}]
  %s14 = inlined_call_operand.vmem [shape: f32[1,32], index: 14, kind: input, shape index: {}]
  %s15 = inlined_call_operand.vmem [shape: f32[1,8], index: 15, kind: input, shape index: {}]
  %s16 = inlined_call_operand.vmem [shape: f32[1,8], index: 16, kind: input, shape index: {}]
  %s17 = inlined_call_operand.vmem [shape: f32[1,32], index: 17, kind: input, shape index: {}]
  %s18 = inlined_call_operand.<no memory space> [shape: f32[1,1], index: 18, kind: input, shape index: {}]
  %s19 = inlined_call_operand.vmem [shape: f32[512,1], index: 19, kind: output, shape index: {}]
  %s20 = sld [smem:[#allocation0]]
  $region109: #{initial_task_prediction_forward.1} parent=0
    _
  %s22 = ssub.s32 1, %s20
  %s23 = scalar_select 0, %s22, %s20
  %v24 = vstv %s18
  %25 = vst [vmem:[#allocation2] sm:$0x1] %v24
  loop: start=0, step=1, limit=4
  $region2: #{initial_task_prediction_forward.1} parent=0 // loop_pre_header
    _
  $region3: #{initial_task_prediction_forward.1} parent=0 // loop_header
    %s27 = sphi 0, %s31
    %p28 = scmp.ge.s32.totalorder %s27, 4
    %s37 = sphi 0, %s39
    %s40 = sphi 0, %s37
    %s41 = sphi 0, %s40
    %s57 = sphi 0, %s41
    %s61 = sphi 0, %s61
    %s63 = sphi 0, %s61
    %s64 = sphi 0, %s63
    %s78 = sphi 0, %s64
    %s82 = sphi 0, %s82
    %s84 = sphi 0, %s82
    %s85 = sphi 0, %s84
    %s99 = sphi 0, %s85
    %s103 = sphi 0, %s103
    %s105 = sphi 0, %s103
    %s106 = sphi 0, %s105
    %s120 = sphi 0, %s106
    %s124 = sphi 0, %s124
    %s126 = sphi 0, %s124
    %s127 = sphi 0, %s126
    %s141 = sphi 0, %s127
    %s145 = sphi 0, %s145
    %s147 = sphi 0, %s145
    %s148 = sphi 0, %s147
    %s162 = sphi 0, %s148
    %s166 = sphi 0, %s166
    %s168 = sphi 0, %s166
    %s169 = sphi 0, %s168
    %s183 = sphi 0, %s169
    %s187 = sphi 0, %s187
    %s189 = sphi 0, %s187
    %s190 = sphi 0, %s189
    %s204 = sphi 0, %s190
    %s208 = sphi 0, %s208
    %s210 = sphi 0, %s208
    %s211 = sphi 0, %s210
    %s225 = sphi 0, %s211
    %s229 = sphi 0, %s229
    %s231 = sphi 0, %s229
    %s232 = sphi 0, %s231
    %s246 = sphi 0, %s232
    %s250 = sphi 0, %s250
    %s252 = sphi 0, %s250
    %s253 = sphi 0, %s252
    %s267 = sphi 0, %s253
    %s271 = sphi 0, %s271
    %s273 = sphi 0, %s271
    %s274 = sphi 0, %s273
    %s288 = sphi 0, %s274
    %s292 = sphi 0, %s292
    %s294 = sphi 0, %s292
    %s295 = sphi 0, %s294
    %s309 = sphi 0, %s295
    %s313 = sphi 0, %s313
    %s315 = sphi 0, %s313
    %s316 = sphi 0, %s315
    %s330 = sphi 0, %s316
    %s334 = sphi 0, %s334
    %s336 = sphi 0, %s334
    %s337 = sphi 0, %s336
    %s351 = sphi 0, %s337
    %s355 = sphi 0, %s355
    %s357 = sphi 0, %s355
    %s358 = sphi 0, %s357
    %s372 = sphi 0, %s358
    %s376 = sphi 0, %s376
    %s378 = sphi 0, %s376
    %s379 = sphi 0, %s378
    %s393 = sphi 0, %s379
    %s397 = sphi 0, %s397
    %s399 = sphi 0, %s397
    %s400 = sphi 0, %s399
    %s414 = sphi 0, %s400
    %s418 = sphi 0, %s418
    %s420 = sphi 0, %s418
    %s421 = sphi 0, %s420
    %s435 = sphi 0, %s421
    %s441 = sphi 0, %s443
    %s444 = sphi 0, %s441
    %s445 = sphi 0, %s444
    %s461 = sphi 0, %s445
  $region4: #{initial_task_prediction_forward.1} parent=0 // loop_header_branch
    %30 = sbr.rel (%p28) target = $region8
  $region5: #{initial_task_prediction_forward.1} parent=0 // loop_body
    %s32 = ssub.s32 %s27, 1
    %s33 = ssub.s32 %s27, 2
    %s34 = sadd.s32 %s27, 1
    %s35 = ssub.s32 %s27, %s34
    %p36 = scmp.eq.s32.totalorder %s35, 0
    %s38 = sadd.s32 %s37, 1
    %s39 = scalar_select %p36, %s37, %s38
    %p42 = pneg %p36
    %p43 = scmp.eq.s32.totalorder %s27, 1
    %p44 = por %p42, %p43
    %p45 = scmp.ne.s32.totalorder %s37, %s40
    %p46 = scmp.eq.s32.totalorder %s27, 0
    %p47 = por %p45, %p46
    %p48 = scmp.ne.s32.totalorder %s37, %s40
    %p49 = scmp.eq.s32.totalorder %s32, 1
    %p50 = por %p48, %p49
    %p51 = scmp.ne.s32.totalorder %s40, %s41
    %p52 = scmp.eq.s32.totalorder %s32, 0
    %p53 = por %p51, %p52
    %p54 = scmp.ne.s32.totalorder %s40, %s41
    %p55 = scmp.eq.s32.totalorder %s33, 1
    %p56 = por %p54, %p55
    %p58 = scmp.ne.s32.totalorder %s41, %s57
    %p59 = scmp.eq.s32.totalorder %s33, 0
    %p60 = por %p58, %p59
    %s62 = sadd.s32 %s61, 1
    %p65 = scmp.eq.s32.totalorder %s27, 1
    %p66 = scmp.ne.s32.totalorder %s61, %s63
    %p67 = scmp.eq.s32.totalorder %s27, 0
    %p68 = por %p66, %p67
    %p69 = scmp.ne.s32.totalorder %s61, %s63
    %p70 = scmp.eq.s32.totalorder %s32, 1
    %p71 = por %p69, %p70
    %p72 = scmp.ne.s32.totalorder %s63, %s64
    %p73 = scmp.eq.s32.totalorder %s32, 0
    %p74 = por %p72, %p73
    %p75 = scmp.ne.s32.totalorder %s63, %s64
    %p76 = scmp.eq.s32.totalorder %s33, 1
    %p77 = por %p75, %p76
    %p79 = scmp.ne.s32.totalorder %s64, %s78
    %p80 = scmp.eq.s32.totalorder %s33, 0
    %p81 = por %p79, %p80
    %s83 = sadd.s32 %s82, 1
    %p86 = scmp.eq.s32.totalorder %s27, 1
    %p87 = scmp.ne.s32.totalorder %s82, %s84
    %p88 = scmp.eq.s32.totalorder %s27, 0
    %p89 = por %p87, %p88
    %p90 = scmp.ne.s32.totalorder %s82, %s84
    %p91 = scmp.eq.s32.totalorder %s32, 1
    %p92 = por %p90, %p91
    %p93 = scmp.ne.s32.totalorder %s84, %s85
    %p94 = scmp.eq.s32.totalorder %s32, 0
    %p95 = por %p93, %p94
    %p96 = scmp.ne.s32.totalorder %s84, %s85
    %p97 = scmp.eq.s32.totalorder %s33, 1
    %p98 = por %p96, %p97
    %p100 = scmp.ne.s32.totalorder %s85, %s99
    %p101 = scmp.eq.s32.totalorder %s33, 0
    %p102 = por %p100, %p101
    %s104 = sadd.s32 %s103, 1
    %p107 = scmp.eq.s32.totalorder %s27, 1
    %p108 = scmp.ne.s32.totalorder %s103, %s105
    %p109 = scmp.eq.s32.totalorder %s27, 0
    %p110 = por %p108, %p109
    %p111 = scmp.ne.s32.totalorder %s103, %s105
    %p112 = scmp.eq.s32.totalorder %s32, 1
    %p113 = por %p111, %p112
    %p114 = scmp.ne.s32.totalorder %s105, %s106
    %p115 = scmp.eq.s32.totalorder %s32, 0
    %p116 = por %p114, %p115
    %p117 = scmp.ne.s32.totalorder %s105, %s106
    %p118 = scmp.eq.s32.totalorder %s33, 1
    %p119 = por %p117, %p118
    %p121 = scmp.ne.s32.totalorder %s106, %s120
    %p122 = scmp.eq.s32.totalorder %s33, 0
    %p123 = por %p121, %p122
    %s125 = sadd.s32 %s124, 1
    %p128 = scmp.eq.s32.totalorder %s27, 1
    %p129 = scmp.ne.s32.totalorder %s124, %s126
    %p130 = scmp.eq.s32.totalorder %s27, 0
    %p131 = por %p129, %p130
    %p132 = scmp.ne.s32.totalorder %s124, %s126
    %p133 = scmp.eq.s32.totalorder %s32, 1
    %p134 = por %p132, %p133
    %p135 = scmp.ne.s32.totalorder %s126, %s127
    %p136 = scmp.eq.s32.totalorder %s32, 0
    %p137 = por %p135, %p136
    %p138 = scmp.ne.s32.totalorder %s126, %s127
    %p139 = scmp.eq.s32.totalorder %s33, 1
    %p140 = por %p138, %p139
    %p142 = scmp.ne.s32.totalorder %s127, %s141
    %p143 = scmp.eq.s32.totalorder %s33, 0
    %p144 = por %p142, %p143
    %s146 = sadd.s32 %s145, 1
    %p149 = scmp.eq.s32.totalorder %s27, 1
    %p150 = scmp.ne.s32.totalorder %s145, %s147
    %p151 = scmp.eq.s32.totalorder %s27, 0
    %p152 = por %p150, %p151
    %p153 = scmp.ne.s32.totalorder %s145, %s147
    %p154 = scmp.eq.s32.totalorder %s32, 1
    %p155 = por %p153, %p154
    %p156 = scmp.ne.s32.totalorder %s147, %s148
    %p157 = scmp.eq.s32.totalorder %s32, 0
    %p158 = por %p156, %p157
    %p159 = scmp.ne.s32.totalorder %s147, %s148
    %p160 = scmp.eq.s32.totalorder %s33, 1
    %p161 = por %p159, %p160
    %p163 = scmp.ne.s32.totalorder %s148, %s162
    %p164 = scmp.eq.s32.totalorder %s33, 0
    %p165 = por %p163, %p164
    %s167 = sadd.s32 %s166, 1
    %p170 = scmp.eq.s32.totalorder %s27, 1
    %p171 = scmp.ne.s32.totalorder %s166, %s168
    %p172 = scmp.eq.s32.totalorder %s27, 0
    %p173 = por %p171, %p172
    %p174 = scmp.ne.s32.totalorder %s166, %s168
    %p175 = scmp.eq.s32.totalorder %s32, 1
    %p176 = por %p174, %p175
    %p177 = scmp.ne.s32.totalorder %s168, %s169
    %p178 = scmp.eq.s32.totalorder %s32, 0
    %p179 = por %p177, %p178
    %p180 = scmp.ne.s32.totalorder %s168, %s169
    %p181 = scmp.eq.s32.totalorder %s33, 1
    %p182 = por %p180, %p181
    %p184 = scmp.ne.s32.totalorder %s169, %s183
    %p185 = scmp.eq.s32.totalorder %s33, 0
    %p186 = por %p184, %p185
    %s188 = sadd.s32 %s187, 1
    %p191 = scmp.eq.s32.totalorder %s27, 1
    %p192 = scmp.ne.s32.totalorder %s187, %s189
    %p193 = scmp.eq.s32.totalorder %s27, 0
    %p194 = por %p192, %p193
    %p195 = scmp.ne.s32.totalorder %s187, %s189
    %p196 = scmp.eq.s32.totalorder %s32, 1
    %p197 = por %p195, %p196
    %p198 = scmp.ne.s32.totalorder %s189, %s190
    %p199 = scmp.eq.s32.totalorder %s32, 0
    %p200 = por %p198, %p199
    %p201 = scmp.ne.s32.totalorder %s189, %s190
    %p202 = scmp.eq.s32.totalorder %s33, 1
    %p203 = por %p201, %p202
    %p205 = scmp.ne.s32.totalorder %s190, %s204
    %p206 = scmp.eq.s32.totalorder %s33, 0
    %p207 = por %p205, %p206
    %s209 = sadd.s32 %s208, 1
    %p212 = scmp.eq.s32.totalorder %s27, 1
    %p213 = scmp.ne.s32.totalorder %s208, %s210
    %p214 = scmp.eq.s32.totalorder %s27, 0
    %p215 = por %p213, %p214
    %p216 = scmp.ne.s32.totalorder %s208, %s210
    %p217 = scmp.eq.s32.totalorder %s32, 1
    %p218 = por %p216, %p217
    %p219 = scmp.ne.s32.totalorder %s210, %s211
    %p220 = scmp.eq.s32.totalorder %s32, 0
    %p221 = por %p219, %p220
    %p222 = scmp.ne.s32.totalorder %s210, %s211
    %p223 = scmp.eq.s32.totalorder %s33, 1
    %p224 = por %p222, %p223
    %p226 = scmp.ne.s32.totalorder %s211, %s225
    %p227 = scmp.eq.s32.totalorder %s33, 0
    %p228 = por %p226, %p227
    %s230 = sadd.s32 %s229, 1
    %p233 = scmp.eq.s32.totalorder %s27, 1
    %p234 = scmp.ne.s32.totalorder %s229, %s231
    %p235 = scmp.eq.s32.totalorder %s27, 0
    %p236 = por %p234, %p235
    %p237 = scmp.ne.s32.totalorder %s229, %s231
    %p238 = scmp.eq.s32.totalorder %s32, 1
    %p239 = por %p237, %p238
    %p240 = scmp.ne.s32.totalorder %s231, %s232
    %p241 = scmp.eq.s32.totalorder %s32, 0
    %p242 = por %p240, %p241
    %p243 = scmp.ne.s32.totalorder %s231, %s232
    %p244 = scmp.eq.s32.totalorder %s33, 1
    %p245 = por %p243, %p244
    %p247 = scmp.ne.s32.totalorder %s232, %s246
    %p248 = scmp.eq.s32.totalorder %s33, 0
    %p249 = por %p247, %p248
    %s251 = sadd.s32 %s250, 1
    %p254 = scmp.eq.s32.totalorder %s27, 1
    %p255 = scmp.ne.s32.totalorder %s250, %s252
    %p256 = scmp.eq.s32.totalorder %s27, 0
    %p257 = por %p255, %p256
    %p258 = scmp.ne.s32.totalorder %s250, %s252
    %p259 = scmp.eq.s32.totalorder %s32, 1
    %p260 = por %p258, %p259
    %p261 = scmp.ne.s32.totalorder %s252, %s253
    %p262 = scmp.eq.s32.totalorder %s32, 0
    %p263 = por %p261, %p262
    %p264 = scmp.ne.s32.totalorder %s252, %s253
    %p265 = scmp.eq.s32.totalorder %s33, 1
    %p266 = por %p264, %p265
    %p268 = scmp.ne.s32.totalorder %s253, %s267
    %p269 = scmp.eq.s32.totalorder %s33, 0
    %p270 = por %p268, %p269
    %s272 = sadd.s32 %s271, 1
    %p275 = scmp.eq.s32.totalorder %s27, 1
    %p276 = scmp.ne.s32.totalorder %s271, %s273
    %p277 = scmp.eq.s32.totalorder %s27, 0
    %p278 = por %p276, %p277
    %p279 = scmp.ne.s32.totalorder %s271, %s273
    %p280 = scmp.eq.s32.totalorder %s32, 1
    %p281 = por %p279, %p280
    %p282 = scmp.ne.s32.totalorder %s273, %s274
    %p283 = scmp.eq.s32.totalorder %s32, 0
    %p284 = por %p282, %p283
    %p285 = scmp.ne.s32.totalorder %s273, %s274
    %p286 = scmp.eq.s32.totalorder %s33, 1
    %p287 = por %p285, %p286
    %p289 = scmp.ne.s32.totalorder %s274, %s288
    %p290 = scmp.eq.s32.totalorder %s33, 0
    %p291 = por %p289, %p290
    %s293 = sadd.s32 %s292, 1
    %p296 = scmp.eq.s32.totalorder %s27, 1
    %p297 = scmp.ne.s32.totalorder %s292, %s294
    %p298 = scmp.eq.s32.totalorder %s27, 0
    %p299 = por %p297, %p298
    %p300 = scmp.ne.s32.totalorder %s292, %s294
    %p301 = scmp.eq.s32.totalorder %s32, 1
    %p302 = por %p300, %p301
    %p303 = scmp.ne.s32.totalorder %s294, %s295
    %p304 = scmp.eq.s32.totalorder %s32, 0
    %p305 = por %p303, %p304
    %p306 = scmp.ne.s32.totalorder %s294, %s295
    %p307 = scmp.eq.s32.totalorder %s33, 1
    %p308 = por %p306, %p307
    %p310 = scmp.ne.s32.totalorder %s295, %s309
    %p311 = scmp.eq.s32.totalorder %s33, 0
    %p312 = por %p310, %p311
    %s314 = sadd.s32 %s313, 1
    %p317 = scmp.eq.s32.totalorder %s27, 1
    %p318 = scmp.ne.s32.totalorder %s313, %s315
    %p319 = scmp.eq.s32.totalorder %s27, 0
    %p320 = por %p318, %p319
    %p321 = scmp.ne.s32.totalorder %s313, %s315
    %p322 = scmp.eq.s32.totalorder %s32, 1
    %p323 = por %p321, %p322
    %p324 = scmp.ne.s32.totalorder %s315, %s316
    %p325 = scmp.eq.s32.totalorder %s32, 0
    %p326 = por %p324, %p325
    %p327 = scmp.ne.s32.totalorder %s315, %s316
    %p328 = scmp.eq.s32.totalorder %s33, 1
    %p329 = por %p327, %p328
    %p331 = scmp.ne.s32.totalorder %s316, %s330
    %p332 = scmp.eq.s32.totalorder %s33, 0
    %p333 = por %p331, %p332
    %s335 = sadd.s32 %s334, 1
    %p338 = scmp.eq.s32.totalorder %s27, 1
    %p339 = scmp.ne.s32.totalorder %s334, %s336
    %p340 = scmp.eq.s32.totalorder %s27, 0
    %p341 = por %p339, %p340
    %p342 = scmp.ne.s32.totalorder %s334, %s336
    %p343 = scmp.eq.s32.totalorder %s32, 1
    %p344 = por %p342, %p343
    %p345 = scmp.ne.s32.totalorder %s336, %s337
    %p346 = scmp.eq.s32.totalorder %s32, 0
    %p347 = por %p345, %p346
    %p348 = scmp.ne.s32.totalorder %s336, %s337
    %p349 = scmp.eq.s32.totalorder %s33, 1
    %p350 = por %p348, %p349
    %p352 = scmp.ne.s32.totalorder %s337, %s351
    %p353 = scmp.eq.s32.totalorder %s33, 0
    %p354 = por %p352, %p353
    %s356 = sadd.s32 %s355, 1
    %p359 = scmp.eq.s32.totalorder %s27, 1
    %p360 = scmp.ne.s32.totalorder %s355, %s357
    %p361 = scmp.eq.s32.totalorder %s27, 0
    %p362 = por %p360, %p361
    %p363 = scmp.ne.s32.totalorder %s355, %s357
    %p364 = scmp.eq.s32.totalorder %s32, 1
    %p365 = por %p363, %p364
    %p366 = scmp.ne.s32.totalorder %s357, %s358
    %p367 = scmp.eq.s32.totalorder %s32, 0
    %p368 = por %p366, %p367
    %p369 = scmp.ne.s32.totalorder %s357, %s358
    %p370 = scmp.eq.s32.totalorder %s33, 1
    %p371 = por %p369, %p370
    %p373 = scmp.ne.s32.totalorder %s358, %s372
    %p374 = scmp.eq.s32.totalorder %s33, 0
    %p375 = por %p373, %p374
    %s377 = sadd.s32 %s376, 1
    %p380 = scmp.eq.s32.totalorder %s27, 1
    %p381 = scmp.ne.s32.totalorder %s376, %s378
    %p382 = scmp.eq.s32.totalorder %s27, 0
    %p383 = por %p381, %p382
    %p384 = scmp.ne.s32.totalorder %s376, %s378
    %p385 = scmp.eq.s32.totalorder %s32, 1
    %p386 = por %p384, %p385
    %p387 = scmp.ne.s32.totalorder %s378, %s379
    %p388 = scmp.eq.s32.totalorder %s32, 0
    %p389 = por %p387, %p388
    %p390 = scmp.ne.s32.totalorder %s378, %s379
    %p391 = scmp.eq.s32.totalorder %s33, 1
    %p392 = por %p390, %p391
    %p394 = scmp.ne.s32.totalorder %s379, %s393
    %p395 = scmp.eq.s32.totalorder %s33, 0
    %p396 = por %p394, %p395
    %s398 = sadd.s32 %s397, 1
    %p401 = scmp.eq.s32.totalorder %s27, 1
    %p402 = scmp.ne.s32.totalorder %s397, %s399
    %p403 = scmp.eq.s32.totalorder %s27, 0
    %p404 = por %p402, %p403
    %p405 = scmp.ne.s32.totalorder %s397, %s399
    %p406 = scmp.eq.s32.totalorder %s32, 1
    %p407 = por %p405, %p406
    %p408 = scmp.ne.s32.totalorder %s399, %s400
    %p409 = scmp.eq.s32.totalorder %s32, 0
    %p410 = por %p408, %p409
    %p411 = scmp.ne.s32.totalorder %s399, %s400
    %p412 = scmp.eq.s32.totalorder %s33, 1
    %p413 = por %p411, %p412
    %p415 = scmp.ne.s32.totalorder %s400, %s414
    %p416 = scmp.eq.s32.totalorder %s33, 0
    %p417 = por %p415, %p416
    %s419 = sadd.s32 %s418, 1
    %p422 = scmp.eq.s32.totalorder %s27, 1
    %p423 = scmp.ne.s32.totalorder %s418, %s420
    %p424 = scmp.eq.s32.totalorder %s27, 0
    %p425 = por %p423, %p424
    %p426 = scmp.ne.s32.totalorder %s418, %s420
    %p427 = scmp.eq.s32.totalorder %s32, 1
    %p428 = por %p426, %p427
    %p429 = scmp.ne.s32.totalorder %s420, %s421
    %p430 = scmp.eq.s32.totalorder %s32, 0
    %p431 = por %p429, %p430
    %p432 = scmp.ne.s32.totalorder %s420, %s421
    %p433 = scmp.eq.s32.totalorder %s33, 1
    %p434 = por %p432, %p433
    %p436 = scmp.ne.s32.totalorder %s421, %s435
    %p437 = scmp.eq.s32.totalorder %s33, 0
    %p438 = por %p436, %p437
    %s439 = ssub.s32 %s27, %s34
    %p440 = scmp.eq.s32.totalorder %s439, 0
    %s442 = sadd.s32 %s441, 1
    %s443 = scalar_select %p440, %s441, %s442
    %p446 = pneg %p440
    %p447 = scmp.eq.s32.totalorder %s27, 1
    %p448 = por %p446, %p447
    %p449 = scmp.ne.s32.totalorder %s441, %s444
    %p450 = scmp.eq.s32.totalorder %s27, 0
    %p451 = por %p449, %p450
    %p452 = scmp.ne.s32.totalorder %s441, %s444
    %p453 = scmp.eq.s32.totalorder %s32, 1
    %p454 = por %p452, %p453
    %p455 = scmp.ne.s32.totalorder %s444, %s445
    %p456 = scmp.eq.s32.totalorder %s32, 0
    %p457 = por %p455, %p456
    %p458 = scmp.ne.s32.totalorder %s444, %s445
    %p459 = scmp.eq.s32.totalorder %s33, 1
    %p460 = por %p458, %p459
    %p462 = scmp.ne.s32.totalorder %s445, %s461
    %p463 = scmp.eq.s32.totalorder %s33, 0
    %p464 = por %p462, %p463
    %p465 = scmp.le.s32.totalorder 1, %s27
    %p466 = scmp.lt.s32.totalorder %s27, 3
    %p467 = pnand %p465, %p466
    %p468 = pneg %p467
    // Predicated region
    $region9: #{initial_task_prediction_forward.1} parent=5 // pred_check
      _
    $region10: #{initial_task_prediction_forward.1} parent=5 // pred_check_branch
      %470 = sbr.rel (%p467) target = $region12
    $region11: #{initial_task_prediction_forward.1} parent=5 // pred_region
      %s471 = ssub.s32 %s27, 1
      // Predicated region
      $region13: #{initial_task_prediction_forward.1} parent=11 // pred_check
        %p472 = pneg %p74
      $region14: #{initial_task_prediction_forward.1} parent=11 // pred_check_branch
        %474 = sbr.rel (%p472) target = $region16
      $region15: #{initial_task_prediction_forward.1} parent=11 // pred_region
        _
      $region16: #{initial_task_prediction_forward.1} parent=11 // pred_fallthru
        _
      // Predicated region
      $region17: #{initial_task_prediction_forward.1} parent=11 // pred_check
        %p475 = pneg %p95
      $region18: #{initial_task_prediction_forward.1} parent=11 // pred_check_branch
        %477 = sbr.rel (%p475) target = $region20
      $region19: #{initial_task_prediction_forward.1} parent=11 // pred_region
        _
      $region20: #{initial_task_prediction_forward.1} parent=11 // pred_fallthru
        _
      // Predicated region
      $region21: #{initial_task_prediction_forward.1} parent=11 // pred_check
        %p478 = pneg %p116
      $region22: #{initial_task_prediction_forward.1} parent=11 // pred_check_branch
        %480 = sbr.rel (%p478) target = $region24
      $region23: #{initial_task_prediction_forward.1} parent=11 // pred_region
        _
      $region24: #{initial_task_prediction_forward.1} parent=11 // pred_fallthru
        _
      // Predicated region
      $region25: #{initial_task_prediction_forward.1} parent=11 // pred_check
        %p481 = pneg %p137
      $region26: #{initial_task_prediction_forward.1} parent=11 // pred_check_branch
        %483 = sbr.rel (%p481) target = $region28
      $region27: #{initial_task_prediction_forward.1} parent=11 // pred_region
        _
      $region28: #{initial_task_prediction_forward.1} parent=11 // pred_fallthru
        _
      // Predicated region
      $region29: #{initial_task_prediction_forward.1} parent=11 // pred_check
        %p484 = pneg %p158
      $region30: #{initial_task_prediction_forward.1} parent=11 // pred_check_branch
        %486 = sbr.rel (%p484) target = $region32
      $region31: #{initial_task_prediction_forward.1} parent=11 // pred_region
        _
      $region32: #{initial_task_prediction_forward.1} parent=11 // pred_fallthru
        _
      // Predicated region
      $region33: #{initial_task_prediction_forward.1} parent=11 // pred_check
        %p487 = pneg %p179
      $region34: #{initial_task_prediction_forward.1} parent=11 // pred_check_branch
        %489 = sbr.rel (%p487) target = $region36
      $region35: #{initial_task_prediction_forward.1} parent=11 // pred_region
        _
      $region36: #{initial_task_prediction_forward.1} parent=11 // pred_fallthru
        _
      // Predicated region
      $region37: #{initial_task_prediction_forward.1} parent=11 // pred_check
        %p490 = pneg %p200
      $region38: #{initial_task_prediction_forward.1} parent=11 // pred_check_branch
        %492 = sbr.rel (%p490) target = $region40
      $region39: #{initial_task_prediction_forward.1} parent=11 // pred_region
        _
      $region40: #{initial_task_prediction_forward.1} parent=11 // pred_fallthru
        _
      // Predicated region
      $region41: #{initial_task_prediction_forward.1} parent=11 // pred_check
        %p493 = pneg %p221
      $region42: #{initial_task_prediction_forward.1} parent=11 // pred_check_branch
        %495 = sbr.rel (%p493) target = $region44
      $region43: #{initial_task_prediction_forward.1} parent=11 // pred_region
        _
      $region44: #{initial_task_prediction_forward.1} parent=11 // pred_fallthru
        _
      // Predicated region
      $region45: #{initial_task_prediction_forward.1} parent=11 // pred_check
        %p496 = pneg %p242
      $region46: #{initial_task_prediction_forward.1} parent=11 // pred_check_branch
        %498 = sbr.rel (%p496) target = $region48
      $region47: #{initial_task_prediction_forward.1} parent=11 // pred_region
        _
      $region48: #{initial_task_prediction_forward.1} parent=11 // pred_fallthru
        _
      // Predicated region
      $region49: #{initial_task_prediction_forward.1} parent=11 // pred_check
        %p499 = pneg %p263
      $region50: #{initial_task_prediction_forward.1} parent=11 // pred_check_branch
        %501 = sbr.rel (%p499) target = $region52
      $region51: #{initial_task_prediction_forward.1} parent=11 // pred_region
        _
      $region52: #{initial_task_prediction_forward.1} parent=11 // pred_fallthru
        _
      // Predicated region
      $region53: #{initial_task_prediction_forward.1} parent=11 // pred_check
        %p502 = pneg %p284
      $region54: #{initial_task_prediction_forward.1} parent=11 // pred_check_branch
        %504 = sbr.rel (%p502) target = $region56
      $region55: #{initial_task_prediction_forward.1} parent=11 // pred_region
        _
      $region56: #{initial_task_prediction_forward.1} parent=11 // pred_fallthru
        _
      // Predicated region
      $region57: #{initial_task_prediction_forward.1} parent=11 // pred_check
        %p505 = pneg %p305
      $region58: #{initial_task_prediction_forward.1} parent=11 // pred_check_branch
        %507 = sbr.rel (%p505) target = $region60
      $region59: #{initial_task_prediction_forward.1} parent=11 // pred_region
        _
      $region60: #{initial_task_prediction_forward.1} parent=11 // pred_fallthru
        _
      // Predicated region
      $region61: #{initial_task_prediction_forward.1} parent=11 // pred_check
        %p508 = pneg %p326
      $region62: #{initial_task_prediction_forward.1} parent=11 // pred_check_branch
        %510 = sbr.rel (%p508) target = $region64
      $region63: #{initial_task_prediction_forward.1} parent=11 // pred_region
        _
      $region64: #{initial_task_prediction_forward.1} parent=11 // pred_fallthru
        _
      // Predicated region
      $region65: #{initial_task_prediction_forward.1} parent=11 // pred_check
        %p511 = pneg %p347
      $region66: #{initial_task_prediction_forward.1} parent=11 // pred_check_branch
        %513 = sbr.rel (%p511) target = $region68
      $region67: #{initial_task_prediction_forward.1} parent=11 // pred_region
        _
      $region68: #{initial_task_prediction_forward.1} parent=11 // pred_fallthru
        _
      // Predicated region
      $region69: #{initial_task_prediction_forward.1} parent=11 // pred_check
        %p514 = pneg %p368
      $region70: #{initial_task_prediction_forward.1} parent=11 // pred_check_branch
        %516 = sbr.rel (%p514) target = $region72
      $region71: #{initial_task_prediction_forward.1} parent=11 // pred_region
        _
      $region72: #{initial_task_prediction_forward.1} parent=11 // pred_fallthru
        _
      // Predicated region
      $region73: #{initial_task_prediction_forward.1} parent=11 // pred_check
        %p517 = pneg %p389
      $region74: #{initial_task_prediction_forward.1} parent=11 // pred_check_branch
        %519 = sbr.rel (%p517) target = $region76
      $region75: #{initial_task_prediction_forward.1} parent=11 // pred_region
        _
      $region76: #{initial_task_prediction_forward.1} parent=11 // pred_fallthru
        _
      // Predicated region
      $region77: #{initial_task_prediction_forward.1} parent=11 // pred_check
        %p520 = pneg %p410
      $region78: #{initial_task_prediction_forward.1} parent=11 // pred_check_branch
        %522 = sbr.rel (%p520) target = $region80
      $region79: #{initial_task_prediction_forward.1} parent=11 // pred_region
        _
      $region80: #{initial_task_prediction_forward.1} parent=11 // pred_fallthru
        _
      // Predicated region
      $region81: #{initial_task_prediction_forward.1} parent=11 // pred_check
        %p523 = pneg %p431
      $region82: #{initial_task_prediction_forward.1} parent=11 // pred_check_branch
        %525 = sbr.rel (%p523) target = $region84
      $region83: #{initial_task_prediction_forward.1} parent=11 // pred_region
        _
      $region84: #{initial_task_prediction_forward.1} parent=11 // pred_fallthru
        _
    $region12: #{initial_task_prediction_forward.1} parent=5 // pred_fallthru
      _
    %p526 = scmp.lt.s32.totalorder %s27, 2
    // Predicated region
    $region85: #{initial_task_prediction_forward.1} parent=5 // pred_check
      %p527 = pneg %p526
    $region86: #{initial_task_prediction_forward.1} parent=5 // pred_check_branch
      %529 = sbr.rel (%p527) target = $region88
    $region87: #{initial_task_prediction_forward.1} parent=5 // pred_region
      // Predicated region
      $region89: #{initial_task_prediction_forward.1} parent=87 // pred_check
        %p530 = pneg %p47
      $region90: #{initial_task_prediction_forward.1} parent=87 // pred_check_branch
        %532 = sbr.rel (%p530) target = $region92
      $region91: #{initial_task_prediction_forward.1} parent=87 // pred_region
        %s533 = smul.u32 32, %s27
        %p534 = scmp.lt.s32.totalorder %s533, 63
        %s535 = scalar_select %p534, %s533, 63
        %s536 = smul.addr %s535, 4
        %s537 = scalar_lea.vmem %s0, %s536
        %s538 = smul.u32 32, %s27
      $region92: #{initial_task_prediction_forward.1} parent=87 // pred_fallthru
        _
    $region88: #{initial_task_prediction_forward.1} parent=5 // pred_fallthru
      _
    %p539 = scmp.le.s32.totalorder 1, %s27
    %p540 = scmp.lt.s32.totalorder %s27, 3
    %p541 = pnand %p539, %p540
    %p542 = pneg %p541
    // Predicated region
    $region93: #{initial_task_prediction_forward.1} parent=5 // pred_check
      _
    $region94: #{initial_task_prediction_forward.1} parent=5 // pred_check_branch
      %544 = sbr.rel (%p541) target = $region96
    $region95: #{initial_task_prediction_forward.1} parent=5 // pred_region
      %s545 = ssub.s32 %s27, 1
      %s546 = smul.u32 32, %s32
      %p547 = scmp.lt.s32.totalorder %s546, 63
      %s548 = scalar_select %p547, %s546, 63
      %s549 = smul.addr %s548, 4
      %s550 = scalar_lea.vmem %s0, %s549
      %p551 = pneg %p53
      %p552 = pneg %p50
      %p553 = pneg %p74
      %p554 = pneg %p71
      %p555 = pneg %p95
      %p556 = pneg %p92
      %p557 = pneg %p116
      %p558 = pneg %p113
      %p559 = pneg %p137
      %p560 = pneg %p134
      %p561 = pneg %p158
      %p562 = pneg %p155
      %p563 = pneg %p179
      %p564 = pneg %p176
      %p565 = pneg %p200
      %p566 = pneg %p197
      %p567 = pneg %p221
      %p568 = pneg %p218
      %p569 = pneg %p242
      %p570 = pneg %p239
      %p571 = pneg %p263
      %p572 = pneg %p260
      %p573 = pneg %p284
      %p574 = pneg %p281
      %p575 = pneg %p305
      %p576 = pneg %p302
      %p577 = pneg %p326
      %p578 = pneg %p323
      %p579 = pneg %p347
      %p580 = pneg %p344
      %p581 = pneg %p368
      %p582 = pneg %p365
      %p583 = pneg %p389
      %p584 = pneg %p386
      %p585 = pneg %p410
      %p586 = pneg %p407
      %p587 = pneg %p431
      %p588 = pneg %p428
      %p589 = pneg %p457
      %p590 = pneg %p454
      %s591 = smul.u32 32, %s32
      %p592 = scmp.lt.s32.totalorder %s591, 63
      %s593 = scalar_select %p592, %s591, 63
      %s594 = smul.addr %s593, 8
      %s595 = scalar_lea.vmem %s19, %s594
      %s596 = smul.u32 32, %s32
      %p597 = scmp.lt.s32.totalorder %s596, 63
      %s598 = scalar_select %p597, %s596, 63
      %s599 = smul.addr %s598, 4
      %s600 = scalar_lea.vmem %s0, %s599
      %s601 = smul.u32 32, %s32
      %s602 = smul.u32 32, %s32
      %p603 = scmp.lt.s32.totalorder %s602, 63
      %s604 = scalar_select %p603, %s602, 63
      %s605 = smul.addr %s604, 8
      %s606 = scalar_lea.vmem %s19, %s605
      %s607 = smul.u32 32, %s32
      %v609 = vld [vmem:[%s1] sm:$0xff]
      %v610 = vld [vmem:[%s1 + $0x8] sm:$0xff]
      %v611 = vld [vmem:[%s1 + $0x10] sm:$0xff]
      %v612 = vld [vmem:[%s1 + $0x18] sm:$0xff]
      %v613 = vld [vmem:[%s1 + $0x20] sm:$0xff]
      %v614 = vld [vmem:[%s1 + $0x28] sm:$0xff]
      %v615 = vld [vmem:[%s1 + $0x30] sm:$0xff]
      %v616 = vld [vmem:[%s1 + $0x38] sm:$0xff]
      %v617 = vld [vmem:[%s1 + $0x40] sm:$0xff]
      %v618 = vld [vmem:[%s1 + $0x48] sm:$0xff]
      %v619 = vld [vmem:[%s1 + $0x50] sm:$0xff]
      %v620 = vld [vmem:[%s1 + $0x58] sm:$0xff]
      %v621 = vld [vmem:[%s1 + $0x60] sm:$0xff]
      %v622 = vld [vmem:[%s1 + $0x68] sm:$0xff]
      %v623 = vld [vmem:[%s1 + $0x70] sm:$0xff]
      %v624 = vld [vmem:[%s1 + $0x78] sm:$0xff]
      %v625 = vld [vmem:[%s1 + $0x80] sm:$0xff]
      %v626 = vld [vmem:[%s1 + $0x88] sm:$0xff]
      %v627 = vld [vmem:[%s1 + $0x90] sm:$0xff]
      %v628 = vld [vmem:[%s1 + $0x98] sm:$0xff]
      %v629 = vld [vmem:[%s1 + $0xa0] sm:$0xff]
      %v630 = vld [vmem:[%s1 + $0xa8] sm:$0xff]
      %v631 = vld [vmem:[%s1 + $0xb0] sm:$0xff]
      %v632 = vld [vmem:[%s1 + $0xb8] sm:$0xff]
      %v633 = vld [vmem:[%s1 + $0xc0] sm:$0xff]
      %v634 = vld [vmem:[%s1 + $0xc8] sm:$0xff]
      %v635 = vld [vmem:[%s1 + $0xd0] sm:$0xff]
      %v636 = vld [vmem:[%s1 + $0xd8] sm:$0xff]
      %v637 = vld [vmem:[%s1 + $0xe0] sm:$0xff]
      %v638 = vld [vmem:[%s1 + $0xe8] sm:$0xff]
      %v639 = vld [vmem:[%s1 + $0xf0] sm:$0xff]
      %v640 = vld [vmem:[%s1 + $0xf8] sm:$0xff]
      %v641 = vld [vmem:[%s2] sm:$0xff]
      %v642 = vld [vmem:[%s2 + $0x8] sm:$0xff]
      %v643 = vld [vmem:[%s2 + $0x10] sm:$0xff]
      %v644 = vld [vmem:[%s2 + $0x18] sm:$0xff]
      %v645 = vld [vmem:[%s2 + $0x20] sm:$0xff]
      %v646 = vld [vmem:[%s2 + $0x28] sm:$0xff]
      %v647 = vld [vmem:[%s2 + $0x30] sm:$0xff]
      %v648 = vld [vmem:[%s2 + $0x38] sm:$0xff]
      %v649 = vld [vmem:[%s2 + $0x40] sm:$0xff]
      %v650 = vld [vmem:[%s2 + $0x48] sm:$0xff]
      %v651 = vld [vmem:[%s2 + $0x50] sm:$0xff]
      %v652 = vld [vmem:[%s2 + $0x58] sm:$0xff]
      %v653 = vld [vmem:[%s2 + $0x60] sm:$0xff]
      %v654 = vld [vmem:[%s2 + $0x68] sm:$0xff]
      %v655 = vld [vmem:[%s2 + $0x70] sm:$0xff]
      %v656 = vld [vmem:[%s2 + $0x78] sm:$0xff]
      %v657 = vld [vmem:[%s2 + $0x80] sm:$0xff]
      %v658 = vld [vmem:[%s2 + $0x88] sm:$0xff]
      %v659 = vld [vmem:[%s2 + $0x90] sm:$0xff]
      %v660 = vld [vmem:[%s2 + $0x98] sm:$0xff]
      %v661 = vld [vmem:[%s2 + $0xa0] sm:$0xff]
      %v662 = vld [vmem:[%s2 + $0xa8] sm:$0xff]
      %v663 = vld [vmem:[%s2 + $0xb0] sm:$0xff]
      %v664 = vld [vmem:[%s2 + $0xb8] sm:$0xff]
      %v665 = vld [vmem:[%s2 + $0xc0] sm:$0xff]
      %v666 = vld [vmem:[%s2 + $0xc8] sm:$0xff]
      %v667 = vld [vmem:[%s2 + $0xd0] sm:$0xff]
      %v668 = vld [vmem:[%s2 + $0xd8] sm:$0xff]
      %v669 = vld [vmem:[%s2 + $0xe0] sm:$0xff]
      %v670 = vld [vmem:[%s2 + $0xe8] sm:$0xff]
      %v671 = vld [vmem:[%s2 + $0xf0] sm:$0xff]
      %v672 = vld [vmem:[%s2 + $0xf8] sm:$0xff]
      %v673 = vld [vmem:[%s3] sm:$0xff]
      %v674 = vld [vmem:[%s3 + $0x8] sm:$0xff]
      %v675 = vld [vmem:[%s3 + $0x10] sm:$0xff]
      %v676 = vld [vmem:[%s3 + $0x18] sm:$0xff]
      %v677 = vld [vmem:[%s3 + $0x20] sm:$0xff]
      %v678 = vld [vmem:[%s3 + $0x28] sm:$0xff]
      %v679 = vld [vmem:[%s3 + $0x30] sm:$0xff]
      %v680 = vld [vmem:[%s3 + $0x38] sm:$0xff]
      %v681 = vld [vmem:[%s3 + $0x40] sm:$0xff]
      %v682 = vld [vmem:[%s3 + $0x48] sm:$0xff]
      %v683 = vld [vmem:[%s3 + $0x50] sm:$0xff]
      %v684 = vld [vmem:[%s3 + $0x58] sm:$0xff]
      %v685 = vld [vmem:[%s3 + $0x60] sm:$0xff]
      %v686 = vld [vmem:[%s3 + $0x68] sm:$0xff]
      %v687 = vld [vmem:[%s3 + $0x70] sm:$0xff]
      %v688 = vld [vmem:[%s3 + $0x78] sm:$0xff]
      %v689 = vld [vmem:[%s3 + $0x80] sm:$0xff]
      %v690 = vld [vmem:[%s3 + $0x88] sm:$0xff]
      %v691 = vld [vmem:[%s3 + $0x90] sm:$0xff]
      %v692 = vld [vmem:[%s3 + $0x98] sm:$0xff]
      %v693 = vld [vmem:[%s3 + $0xa0] sm:$0xff]
      %v694 = vld [vmem:[%s3 + $0xa8] sm:$0xff]
      %v695 = vld [vmem:[%s3 + $0xb0] sm:$0xff]
      %v696 = vld [vmem:[%s3 + $0xb8] sm:$0xff]
      %v697 = vld [vmem:[%s3 + $0xc0] sm:$0xff]
      %v698 = vld [vmem:[%s3 + $0xc8] sm:$0xff]
      %v699 = vld [vmem:[%s3 + $0xd0] sm:$0xff]
      %v700 = vld [vmem:[%s3 + $0xd8] sm:$0xff]
      %v701 = vld [vmem:[%s3 + $0xe0] sm:$0xff]
      %v702 = vld [vmem:[%s3 + $0xe8] sm:$0xff]
      %v703 = vld [vmem:[%s3 + $0xf0] sm:$0xff]
      %v704 = vld [vmem:[%s3 + $0xf8] sm:$0xff]
      %v705 = vld [vmem:[%s4] sm:$0xff]
      %v706 = vld [vmem:[%s4 + $0x8] sm:$0xff]
      %v707 = vld [vmem:[%s4 + $0x10] sm:$0xff]
      %v708 = vld [vmem:[%s4 + $0x18] sm:$0xff]
      %v709 = vld [vmem:[%s4 + $0x20] sm:$0xff]
      %v710 = vld [vmem:[%s4 + $0x28] sm:$0xff]
      %v711 = vld [vmem:[%s4 + $0x30] sm:$0xff]
      %v712 = vld [vmem:[%s4 + $0x38] sm:$0xff]
      %v713 = vld [vmem:[%s4 + $0x40] sm:$0xff]
      %v714 = vld [vmem:[%s4 + $0x48] sm:$0xff]
      %v715 = vld [vmem:[%s4 + $0x50] sm:$0xff]
      %v716 = vld [vmem:[%s4 + $0x58] sm:$0xff]
      %v717 = vld [vmem:[%s4 + $0x60] sm:$0xff]
      %v718 = vld [vmem:[%s4 + $0x68] sm:$0xff]
      %v719 = vld [vmem:[%s4 + $0x70] sm:$0xff]
      %v720 = vld [vmem:[%s4 + $0x78] sm:$0xff]
      %v721 = vld [vmem:[%s4 + $0x80] sm:$0xff]
      %v722 = vld [vmem:[%s4 + $0x88] sm:$0xff]
      %v723 = vld [vmem:[%s4 + $0x90] sm:$0xff]
      %v724 = vld [vmem:[%s4 + $0x98] sm:$0xff]
      %v725 = vld [vmem:[%s4 + $0xa0] sm:$0xff]
      %v726 = vld [vmem:[%s4 + $0xa8] sm:$0xff]
      %v727 = vld [vmem:[%s4 + $0xb0] sm:$0xff]
      %v728 = vld [vmem:[%s4 + $0xb8] sm:$0xff]
      %v729 = vld [vmem:[%s4 + $0xc0] sm:$0xff]
      %v730 = vld [vmem:[%s4 + $0xc8] sm:$0xff]
      %v731 = vld [vmem:[%s4 + $0xd0] sm:$0xff]
      %v732 = vld [vmem:[%s4 + $0xd8] sm:$0xff]
      %v733 = vld [vmem:[%s4 + $0xe0] sm:$0xff]
      %v734 = vld [vmem:[%s4 + $0xe8] sm:$0xff]
      %v735 = vld [vmem:[%s4 + $0xf0] sm:$0xff]
      %v736 = vld [vmem:[%s4 + $0xf8] sm:$0xff]
      %v737 = vld [vmem:[%s600] sm:$0xf]
      %v738 = vld [vmem:[%s600 + $0x4] sm:$0xf]
      %v739 = vld [vmem:[%s600 + $0x8] sm:$0xf]
      %v740 = vld [vmem:[%s600 + $0xc] sm:$0xf]
      %v741 = vld [vmem:[%s600 + $0x10] sm:$0xf]
      %v742 = vld [vmem:[%s600 + $0x14] sm:$0xf]
      %v743 = vld [vmem:[%s600 + $0x18] sm:$0xf]
      %v744 = vld [vmem:[%s600 + $0x1c] sm:$0xf]
      %v745 = vld [vmem:[%s600 + $0x20] sm:$0xf]
      %v746 = vld [vmem:[%s600 + $0x24] sm:$0xf]
      %v747 = vld [vmem:[%s600 + $0x28] sm:$0xf]
      %v748 = vld [vmem:[%s600 + $0x2c] sm:$0xf]
      %v749 = vld [vmem:[%s600 + $0x30] sm:$0xf]
      %v750 = vld [vmem:[%s600 + $0x34] sm:$0xf]
      %v751 = vld [vmem:[%s600 + $0x38] sm:$0xf]
      %v752 = vld [vmem:[%s600 + $0x3c] sm:$0xf]
      %v753 = vld [vmem:[%s600 + $0x40] sm:$0xf]
      %v754 = vld [vmem:[%s600 + $0x44] sm:$0xf]
      %v755 = vld [vmem:[%s600 + $0x48] sm:$0xf]
      %v756 = vld [vmem:[%s600 + $0x4c] sm:$0xf]
      %v757 = vld [vmem:[%s600 + $0x50] sm:$0xf]
      %v758 = vld [vmem:[%s600 + $0x54] sm:$0xf]
      %v759 = vld [vmem:[%s600 + $0x58] sm:$0xf]
      %v760 = vld [vmem:[%s600 + $0x5c] sm:$0xf]
      %v761 = vld [vmem:[%s600 + $0x60] sm:$0xf]
      %v762 = vld [vmem:[%s600 + $0x64] sm:$0xf]
      %v763 = vld [vmem:[%s600 + $0x68] sm:$0xf]
      %v764 = vld [vmem:[%s600 + $0x6c] sm:$0xf]
      %v765 = vld [vmem:[%s600 + $0x70] sm:$0xf]
      %v766 = vld [vmem:[%s600 + $0x74] sm:$0xf]
      %v767 = vld [vmem:[%s600 + $0x78] sm:$0xf]
      %v768 = vld [vmem:[%s600 + $0x7c] sm:$0xf]
      %v769 = vld [vmem:[%s5] sm:$0xf]
      %v770 = vld [vmem:[%s5 + $0x4] sm:$0xf]
      %v771 = vld [vmem:[%s12] sm:$0x1]
      %v773 = vlaneseq
      %v774 = vshrl.u32 %v773, 7
      %v775 = vsub.s32 0, %v774
      %v776 = vrot.slane %v771, %v775
      %v810 = vunpack.c.l.b16 %v737
      %v811 = vunpack.c.l.b16 %v738
      %v812 = vunpack.c.l.b16 %v739
      %v813 = vunpack.c.l.b16 %v740
      %v814 = vunpack.c.l.b16 %v741
      %v815 = vunpack.c.l.b16 %v742
      %v816 = vunpack.c.l.b16 %v743
      %v817 = vunpack.c.l.b16 %v744
      %v818 = vunpack.c.l.b16 %v745
      %v819 = vunpack.c.l.b16 %v746
      %v820 = vunpack.c.l.b16 %v747
      %v821 = vunpack.c.l.b16 %v748
      %v822 = vunpack.c.l.b16 %v749
      %v823 = vunpack.c.l.b16 %v750
      %v824 = vunpack.c.l.b16 %v751
      %v825 = vunpack.c.l.b16 %v752
      %v826 = vunpack.c.l.b16 %v753
      %v827 = vunpack.c.l.b16 %v754
      %v828 = vunpack.c.l.b16 %v755
      %v829 = vunpack.c.l.b16 %v756
      %v830 = vunpack.c.l.b16 %v757
      %v831 = vunpack.c.l.b16 %v758
      %v832 = vunpack.c.l.b16 %v759
      %v833 = vunpack.c.l.b16 %v760
      %v834 = vunpack.c.l.b16 %v761
      %v835 = vunpack.c.l.b16 %v762
      %v836 = vunpack.c.l.b16 %v763
      %v837 = vunpack.c.l.b16 %v764
      %v838 = vunpack.c.l.b16 %v765
      %v839 = vunpack.c.l.b16 %v766
      %v840 = vunpack.c.l.b16 %v767
      %v841 = vunpack.c.l.b16 %v768
      %v842 = vpack.c.b16 %v811, %v810
      %v843 = vpack.c.b16 %v813, %v812
      %v844 = vpack.c.b16 %v815, %v814
      %v845 = vpack.c.b16 %v817, %v816
      %v846 = vpack.c.b16 %v819, %v818
      %v847 = vpack.c.b16 %v821, %v820
      %v848 = vpack.c.b16 %v823, %v822
      %v849 = vpack.c.b16 %v825, %v824
      %v850 = vpack.c.b16 %v827, %v826
      %v851 = vpack.c.b16 %v829, %v828
      %v852 = vpack.c.b16 %v831, %v830
      %v853 = vpack.c.b16 %v833, %v832
      %v854 = vpack.c.b16 %v835, %v834
      %v855 = vpack.c.b16 %v837, %v836
      %v856 = vpack.c.b16 %v839, %v838
      %v857 = vpack.c.b16 %v841, %v840
      %v860 = vunpack.c.l.b16 %v769
      %v861 = vunpack.c.l.b16 %v770
      %v862 = vpack.c.b16 %v861, %v860
      %vm864 = vcmask 130048
      %v866 = vsel %vm864, %v842, 0
      %v869 = vsel %vm864, %v843, 0
      %v872 = vsel %vm864, %v844, 0
      %v875 = vsel %vm864, %v845, 0
      %v878 = vsel %vm864, %v846, 0
      %v881 = vsel %vm864, %v847, 0
      %v884 = vsel %vm864, %v848, 0
      %v887 = vsel %vm864, %v849, 0
      %v890 = vsel %vm864, %v850, 0
      %v893 = vsel %vm864, %v851, 0
      %v896 = vsel %vm864, %v852, 0
      %v899 = vsel %vm864, %v853, 0
      %v902 = vsel %vm864, %v854, 0
      %v905 = vsel %vm864, %v855, 0
      %v908 = vsel %vm864, %v856, 0
      %v911 = vsel %vm864, %v857, 0
      %913 = vmatprep.subr.bf16.mxu0 0
      %914 = vmatpush1.bf16.msra.mxu0 0
      %915 = vmatprep.subr.bf16.mxu0 0
      %916 = vmatpush1.bf16.msra.mxu0 0
      %917 = vmatprep.subr.bf16.mxu0 0
      %918 = vmatpush1.bf16.msra.mxu0 0
      %919 = vmatprep.subr.bf16.mxu0 0
      %920 = vmatpush1.bf16.msra.mxu0 0
      %921 = vmatprep.subr.bf16.mxu0 0
      %922 = vmatpush1.bf16.msra.mxu0 0
      %923 = vmatprep.subr.bf16.mxu0 0
      %924 = vmatpush1.bf16.msra.mxu0 0
      %925 = vmatprep.subr.bf16.mxu0 0
      %926 = vmatpush1.bf16.msra.mxu0 0
      %927 = vmatprep.subr.bf16.mxu0 0
      %928 = vmatpush1.bf16.msra.mxu0 %v862
      %929 = vmatprep.subr.bf16.mxu0 0
      %930 = vmatpush2.bf16.msra.mxu0 0
      %931 = vmatprep.subr.bf16.mxu0 0
      %932 = vmatpush2.bf16.msra.mxu0 0
      %933 = vmatprep.subr.bf16.mxu0 0
      %934 = vmatpush2.bf16.msra.mxu0 0
      %935 = vmatprep.subr.bf16.mxu0 0
      %936 = vmatpush2.bf16.msra.mxu0 0
      %937 = vmatprep.subr.bf16.mxu0 0
      %938 = vmatpush2.bf16.msra.mxu0 0
      %939 = vmatprep.subr.bf16.mxu0 0
      %940 = vmatpush2.bf16.msra.mxu0 0
      %941 = vmatprep.subr.bf16.mxu0 0
      %942 = vmatpush2.bf16.msra.mxu0 0
      %943 = vmatprep.subr.bf16.mxu0 0
      %944 = vmatpush2.bf16.msra.mxu0 0
      %945 = vmatprep.mubr.bf16.mxu0 0
      %946 = vmatmul.mubr.bf16.gmra.mxu0 %v866
      %v947 = vpop.f32.mrf.mxu0
      %v948 = vadd.f32 %v776, %v947
      %v949 = vpop.f32.mrf.mxu0
      %v950 = vpop.f32.mrf.mxu0
      %v951 = vadd.f32 %v776, %v950
      %v952 = vpop.f32.mrf.mxu0
      %953 = vmatprep.mubr.bf16.mxu0 0
      %954 = vmatmul.mubr.bf16.gmra.mxu0 %v869
      %v955 = vpop.f32.mrf.mxu0
      %v956 = vadd.f32 %v776, %v955
      %v957 = vpop.f32.mrf.mxu0
      %v958 = vpop.f32.mrf.mxu0
      %v959 = vadd.f32 %v776, %v958
      %v960 = vpop.f32.mrf.mxu0
      %961 = vmatprep.mubr.bf16.mxu0 0
      %962 = vmatmul.mubr.bf16.gmra.mxu0 %v872
      %v963 = vpop.f32.mrf.mxu0
      %v964 = vadd.f32 %v776, %v963
      %v965 = vpop.f32.mrf.mxu0
      %v966 = vpop.f32.mrf.mxu0
      %v967 = vadd.f32 %v776, %v966
      %v968 = vpop.f32.mrf.mxu0
      %969 = vmatprep.mubr.bf16.mxu0 0
      %970 = vmatmul.mubr.bf16.gmra.mxu0 %v875
      %v971 = vpop.f32.mrf.mxu0
      %v972 = vadd.f32 %v776, %v971
      %v973 = vpop.f32.mrf.mxu0
      %v974 = vpop.f32.mrf.mxu0
      %v975 = vadd.f32 %v776, %v974
      %v976 = vpop.f32.mrf.mxu0
      %977 = vmatprep.mubr.bf16.mxu0 0
      %978 = vmatmul.mubr.bf16.gmra.mxu0 %v878
      %v979 = vpop.f32.mrf.mxu0
      %v980 = vadd.f32 %v776, %v979
      %v981 = vpop.f32.mrf.mxu0
      %v982 = vpop.f32.mrf.mxu0
      %v983 = vadd.f32 %v776, %v982
      %v984 = vpop.f32.mrf.mxu0
      %985 = vmatprep.mubr.bf16.mxu0 0
      %986 = vmatmul.mubr.bf16.gmra.mxu0 %v881
      %v987 = vpop.f32.mrf.mxu0
      %v988 = vadd.f32 %v776, %v987
      %v989 = vpop.f32.mrf.mxu0
      %v990 = vpop.f32.mrf.mxu0
      %v991 = vadd.f32 %v776, %v990
      %v992 = vpop.f32.mrf.mxu0
      %993 = vmatprep.mubr.bf16.mxu0 0
      %994 = vmatmul.mubr.bf16.gmra.mxu0 %v884
      %v995 = vpop.f32.mrf.mxu0
      %v996 = vadd.f32 %v776, %v995
      %v997 = vpop.f32.mrf.mxu0
      %v998 = vpop.f32.mrf.mxu0
      %v999 = vadd.f32 %v776, %v998
      %v1000 = vpop.f32.mrf.mxu0
      %1001 = vmatprep.mubr.bf16.mxu0 0
      %1002 = vmatmul.mubr.bf16.gmra.mxu0 %v887
      %v1003 = vpop.f32.mrf.mxu0
      %v1004 = vadd.f32 %v776, %v1003
      %v1005 = vpop.f32.mrf.mxu0
      %v1006 = vpop.f32.mrf.mxu0
      %v1007 = vadd.f32 %v776, %v1006
      %v1008 = vpop.f32.mrf.mxu0
      %1009 = vmatprep.mubr.bf16.mxu0 0
      %1010 = vmatmul.mubr.bf16.gmra.mxu0 %v890
      %v1011 = vpop.f32.mrf.mxu0
      %v1012 = vadd.f32 %v776, %v1011
      %v1013 = vpop.f32.mrf.mxu0
      %v1014 = vpop.f32.mrf.mxu0
      %v1015 = vadd.f32 %v776, %v1014
      %v1016 = vpop.f32.mrf.mxu0
      %1017 = vmatprep.mubr.bf16.mxu0 0
      %1018 = vmatmul.mubr.bf16.gmra.mxu0 %v893
      %v1019 = vpop.f32.mrf.mxu0
      %v1020 = vadd.f32 %v776, %v1019
      %v1021 = vpop.f32.mrf.mxu0
      %v1022 = vpop.f32.mrf.mxu0
      %v1023 = vadd.f32 %v776, %v1022
      %v1024 = vpop.f32.mrf.mxu0
      %1025 = vmatprep.mubr.bf16.mxu0 0
      %1026 = vmatmul.mubr.bf16.gmra.mxu0 %v896
      %v1027 = vpop.f32.mrf.mxu0
      %v1028 = vadd.f32 %v776, %v1027
      %v1029 = vpop.f32.mrf.mxu0
      %v1030 = vpop.f32.mrf.mxu0
      %v1031 = vadd.f32 %v776, %v1030
      %v1032 = vpop.f32.mrf.mxu0
      %1033 = vmatprep.mubr.bf16.mxu0 0
      %1034 = vmatmul.mubr.bf16.gmra.mxu0 %v899
      %v1035 = vpop.f32.mrf.mxu0
      %v1036 = vadd.f32 %v776, %v1035
      %v1037 = vpop.f32.mrf.mxu0
      %v1038 = vpop.f32.mrf.mxu0
      %v1039 = vadd.f32 %v776, %v1038
      %v1040 = vpop.f32.mrf.mxu0
      %1041 = vmatprep.mubr.bf16.mxu0 0
      %1042 = vmatmul.mubr.bf16.gmra.mxu0 %v902
      %v1043 = vpop.f32.mrf.mxu0
      %v1044 = vadd.f32 %v776, %v1043
      %v1045 = vpop.f32.mrf.mxu0
      %v1046 = vpop.f32.mrf.mxu0
      %v1047 = vadd.f32 %v776, %v1046
      %v1048 = vpop.f32.mrf.mxu0
      %1049 = vmatprep.mubr.bf16.mxu0 0
      %1050 = vmatmul.mubr.bf16.gmra.mxu0 %v905
      %v1051 = vpop.f32.mrf.mxu0
      %v1052 = vadd.f32 %v776, %v1051
      %v1053 = vpop.f32.mrf.mxu0
      %v1054 = vpop.f32.mrf.mxu0
      %v1055 = vadd.f32 %v776, %v1054
      %v1056 = vpop.f32.mrf.mxu0
      %1057 = vmatprep.mubr.bf16.mxu0 0
      %1058 = vmatmul.mubr.bf16.gmra.mxu0 %v908
      %v1059 = vpop.f32.mrf.mxu0
      %v1060 = vadd.f32 %v776, %v1059
      %v1061 = vpop.f32.mrf.mxu0
      %v1062 = vpop.f32.mrf.mxu0
      %v1063 = vadd.f32 %v776, %v1062
      %v1064 = vpop.f32.mrf.mxu0
      %1065 = vmatprep.mubr.bf16.mxu0 0
      %1066 = vmatmul.mubr.bf16.gmra.mxu0 %v911
      %v1067 = vpop.f32.mrf.mxu0
      %v1068 = vadd.f32 %v776, %v1067
      %v1069 = vpop.f32.mrf.mxu0
      %v1070 = vpop.f32.mrf.mxu0
      %v1071 = vadd.f32 %v776, %v1070
      %v1072 = vpop.f32.mrf.mxu0
      %1073 = vdwg.mxu0
      %v1074 = vmax.f32 %v948, 0.0
      %v1075 = vmax.f32 %v951, 0.0
      %v1076 = vmax.f32 %v956, 0.0
      %v1077 = vmax.f32 %v959, 0.0
      %v1078 = vmax.f32 %v964, 0.0
      %v1079 = vmax.f32 %v967, 0.0
      %v1080 = vmax.f32 %v972, 0.0
      %v1081 = vmax.f32 %v975, 0.0
      %v1082 = vmax.f32 %v980, 0.0
      %v1083 = vmax.f32 %v983, 0.0
      %v1084 = vmax.f32 %v988, 0.0
      %v1085 = vmax.f32 %v991, 0.0
      %v1086 = vmax.f32 %v996, 0.0
      %v1087 = vmax.f32 %v999, 0.0
      %v1088 = vmax.f32 %v1004, 0.0
      %v1089 = vmax.f32 %v1007, 0.0
      %v1090 = vmax.f32 %v1012, 0.0
      %v1091 = vmax.f32 %v1015, 0.0
      %v1092 = vmax.f32 %v1020, 0.0
      %v1093 = vmax.f32 %v1023, 0.0
      %v1094 = vmax.f32 %v1028, 0.0
      %v1095 = vmax.f32 %v1031, 0.0
      %v1096 = vmax.f32 %v1036, 0.0
      %v1097 = vmax.f32 %v1039, 0.0
      %v1098 = vmax.f32 %v1044, 0.0
      %v1099 = vmax.f32 %v1047, 0.0
      %v1100 = vmax.f32 %v1052, 0.0
      %v1101 = vmax.f32 %v1055, 0.0
      %v1102 = vmax.f32 %v1060, 0.0
      %v1103 = vmax.f32 %v1063, 0.0
      %v1104 = vmax.f32 %v1068, 0.0
      %v1105 = vmax.f32 %v1071, 0.0
      %v1106 = vrot.slane %v1074, 7
      %v1107 = vrot.slane %v1075, 7
      %v1108 = vrot.slane %v1076, 7
      %v1109 = vrot.slane %v1077, 7
      %v1110 = vrot.slane %v1078, 7
      %v1111 = vrot.slane %v1079, 7
      %v1112 = vrot.slane %v1080, 7
      %v1113 = vrot.slane %v1081, 7
      %v1114 = vrot.slane %v1082, 7
      %v1115 = vrot.slane %v1083, 7
      %v1116 = vrot.slane %v1084, 7
      %v1117 = vrot.slane %v1085, 7
      %v1118 = vrot.slane %v1086, 7
      %v1119 = vrot.slane %v1087, 7
      %v1120 = vrot.slane %v1088, 7
      %v1121 = vrot.slane %v1089, 7
      %v1122 = vrot.slane %v1090, 7
      %v1123 = vrot.slane %v1091, 7
      %v1124 = vrot.slane %v1092, 7
      %v1125 = vrot.slane %v1093, 7
      %v1126 = vrot.slane %v1094, 7
      %v1127 = vrot.slane %v1095, 7
      %v1128 = vrot.slane %v1096, 7
      %v1129 = vrot.slane %v1097, 7
      %v1130 = vrot.slane %v1098, 7
      %v1131 = vrot.slane %v1099, 7
      %v1132 = vrot.slane %v1100, 7
      %v1133 = vrot.slane %v1101, 7
      %v1134 = vrot.slane %v1102, 7
      %v1135 = vrot.slane %v1103, 7
      %v1136 = vrot.slane %v1104, 7
      %v1137 = vrot.slane %v1105, 7
      %v1138 = vlaneseq
      %v1139 = vshrl.u32 %v1138, 7
      %vm1140 = vcmp.lt.s32.totalorder %v1139, 1
      %v1141 = vsel %vm1140, %v1136, %v1137
      %v1142 = vsel %vm1140, %v1135, %v1136
      %v1143 = vsel %vm1140, %v1134, %v1135
      %v1144 = vsel %vm1140, %v1133, %v1134
      %v1145 = vsel %vm1140, %v1132, %v1133
      %v1146 = vsel %vm1140, %v1131, %v1132
      %v1147 = vsel %vm1140, %v1130, %v1131
      %v1148 = vsel %vm1140, %v1129, %v1130
      %v1149 = vsel %vm1140, %v1128, %v1129
      %v1150 = vsel %vm1140, %v1127, %v1128
      %v1151 = vsel %vm1140, %v1126, %v1127
      %v1152 = vsel %vm1140, %v1125, %v1126
      %v1153 = vsel %vm1140, %v1124, %v1125
      %v1154 = vsel %vm1140, %v1123, %v1124
      %v1155 = vsel %vm1140, %v1122, %v1123
      %v1156 = vsel %vm1140, %v1121, %v1122
      %v1157 = vsel %vm1140, %v1120, %v1121
      %v1158 = vsel %vm1140, %v1119, %v1120
      %v1159 = vsel %vm1140, %v1118, %v1119
      %v1160 = vsel %vm1140, %v1117, %v1118
      %v1161 = vsel %vm1140, %v1116, %v1117
      %v1162 = vsel %vm1140, %v1115, %v1116
      %v1163 = vsel %vm1140, %v1114, %v1115
      %v1164 = vsel %vm1140, %v1113, %v1114
      %v1165 = vsel %vm1140, %v1112, %v1113
      %v1166 = vsel %vm1140, %v1111, %v1112
      %v1167 = vsel %vm1140, %v1110, %v1111
      %v1168 = vsel %vm1140, %v1109, %v1110
      %v1169 = vsel %vm1140, %v1108, %v1109
      %v1170 = vsel %vm1140, %v1107, %v1108
      %v1171 = vsel %vm1140, %v1106, %v1107
      %v1172 = vsel %vm1140, %v1137, %v1106
      %1174 = vset.pattern.permute.xlu0 0
      %1175 = vperm.xlu0 %1174, %v609
      %v1176 = vpop.permute.xlu0 %1175
      %1179 = vset.pattern.permute.xlu0 0
      %1180 = vperm.xlu0 %1179, %v610
      %v1181 = vpop.permute.xlu0 %1180
      %1184 = vset.pattern.permute.xlu0 0
      %1185 = vperm.xlu0 %1184, %v611
      %v1186 = vpop.permute.xlu0 %1185
      %1189 = vset.pattern.permute.xlu0 0
      %1190 = vperm.xlu0 %1189, %v612
      %v1191 = vpop.permute.xlu0 %1190
      %1194 = vset.pattern.permute.xlu0 0
      %1195 = vperm.xlu0 %1194, %v613
      %v1196 = vpop.permute.xlu0 %1195
      %1199 = vset.pattern.permute.xlu0 0
      %1200 = vperm.xlu0 %1199, %v614
      %v1201 = vpop.permute.xlu0 %1200
      %1204 = vset.pattern.permute.xlu0 0
      %1205 = vperm.xlu0 %1204, %v615
      %v1206 = vpop.permute.xlu0 %1205
      %1209 = vset.pattern.permute.xlu0 0
      %1210 = vperm.xlu0 %1209, %v616
      %v1211 = vpop.permute.xlu0 %1210
      %1214 = vset.pattern.permute.xlu0 0
      %1215 = vperm.xlu0 %1214, %v617
      %v1216 = vpop.permute.xlu0 %1215
      %1219 = vset.pattern.permute.xlu0 0
      %1220 = vperm.xlu0 %1219, %v618
      %v1221 = vpop.permute.xlu0 %1220
      %1224 = vset.pattern.permute.xlu0 0
      %1225 = vperm.xlu0 %1224, %v619
      %v1226 = vpop.permute.xlu0 %1225
      %1229 = vset.pattern.permute.xlu0 0
      %1230 = vperm.xlu0 %1229, %v620
      %v1231 = vpop.permute.xlu0 %1230
      %1234 = vset.pattern.permute.xlu0 0
      %1235 = vperm.xlu0 %1234, %v621
      %v1236 = vpop.permute.xlu0 %1235
      %1239 = vset.pattern.permute.xlu0 0
      %1240 = vperm.xlu0 %1239, %v622
      %v1241 = vpop.permute.xlu0 %1240
      %1244 = vset.pattern.permute.xlu0 0
      %1245 = vperm.xlu0 %1244, %v623
      %v1246 = vpop.permute.xlu0 %1245
      %1249 = vset.pattern.permute.xlu0 0
      %1250 = vperm.xlu0 %1249, %v624
      %v1251 = vpop.permute.xlu0 %1250
      %1254 = vset.pattern.permute.xlu0 0
      %1255 = vperm.xlu0 %1254, %v625
      %v1256 = vpop.permute.xlu0 %1255
      %1259 = vset.pattern.permute.xlu0 0
      %1260 = vperm.xlu0 %1259, %v626
      %v1261 = vpop.permute.xlu0 %1260
      %1264 = vset.pattern.permute.xlu0 0
      %1265 = vperm.xlu0 %1264, %v627
      %v1266 = vpop.permute.xlu0 %1265
      %1269 = vset.pattern.permute.xlu0 0
      %1270 = vperm.xlu0 %1269, %v628
      %v1271 = vpop.permute.xlu0 %1270
      %1274 = vset.pattern.permute.xlu0 0
      %1275 = vperm.xlu0 %1274, %v629
      %v1276 = vpop.permute.xlu0 %1275
      %1279 = vset.pattern.permute.xlu0 0
      %1280 = vperm.xlu0 %1279, %v630
      %v1281 = vpop.permute.xlu0 %1280
      %1284 = vset.pattern.permute.xlu0 0
      %1285 = vperm.xlu0 %1284, %v631
      %v1286 = vpop.permute.xlu0 %1285
      %1289 = vset.pattern.permute.xlu0 0
      %1290 = vperm.xlu0 %1289, %v632
      %v1291 = vpop.permute.xlu0 %1290
      %1294 = vset.pattern.permute.xlu0 0
      %1295 = vperm.xlu0 %1294, %v633
      %v1296 = vpop.permute.xlu0 %1295
      %1299 = vset.pattern.permute.xlu0 0
      %1300 = vperm.xlu0 %1299, %v634
      %v1301 = vpop.permute.xlu0 %1300
      %1304 = vset.pattern.permute.xlu0 0
      %1305 = vperm.xlu0 %1304, %v635
      %v1306 = vpop.permute.xlu0 %1305
      %1309 = vset.pattern.permute.xlu0 0
      %1310 = vperm.xlu0 %1309, %v636
      %v1311 = vpop.permute.xlu0 %1310
      %1314 = vset.pattern.permute.xlu0 0
      %1315 = vperm.xlu0 %1314, %v637
      %v1316 = vpop.permute.xlu0 %1315
      %1319 = vset.pattern.permute.xlu0 0
      %1320 = vperm.xlu0 %1319, %v638
      %v1321 = vpop.permute.xlu0 %1320
      %1324 = vset.pattern.permute.xlu0 0
      %1325 = vperm.xlu0 %1324, %v639
      %v1326 = vpop.permute.xlu0 %1325
      %1329 = vset.pattern.permute.xlu0 0
      %1330 = vperm.xlu0 %1329, %v640
      %v1331 = vpop.permute.xlu0 %1330
      %v1333 = vmul.f32 %v1176, %v1172
      %v1334 = vmul.f32 %v1181, %v1171
      %v1335 = vmul.f32 %v1186, %v1170
      %v1336 = vmul.f32 %v1191, %v1169
      %v1337 = vmul.f32 %v1196, %v1168
      %v1338 = vmul.f32 %v1201, %v1167
      %v1339 = vmul.f32 %v1206, %v1166
      %v1340 = vmul.f32 %v1211, %v1165
      %v1341 = vmul.f32 %v1216, %v1164
      %v1342 = vmul.f32 %v1221, %v1163
      %v1343 = vmul.f32 %v1226, %v1162
      %v1344 = vmul.f32 %v1231, %v1161
      %v1345 = vmul.f32 %v1236, %v1160
      %v1346 = vmul.f32 %v1241, %v1159
      %v1347 = vmul.f32 %v1246, %v1158
      %v1348 = vmul.f32 %v1251, %v1157
      %v1349 = vmul.f32 %v1256, %v1156
      %v1350 = vmul.f32 %v1261, %v1155
      %v1351 = vmul.f32 %v1266, %v1154
      %v1352 = vmul.f32 %v1271, %v1153
      %v1353 = vmul.f32 %v1276, %v1152
      %v1354 = vmul.f32 %v1281, %v1151
      %v1355 = vmul.f32 %v1286, %v1150
      %v1356 = vmul.f32 %v1291, %v1149
      %v1357 = vmul.f32 %v1296, %v1148
      %v1358 = vmul.f32 %v1301, %v1147
      %v1359 = vmul.f32 %v1306, %v1146
      %v1360 = vmul.f32 %v1311, %v1145
      %v1361 = vmul.f32 %v1316, %v1144
      %v1362 = vmul.f32 %v1321, %v1143
      %v1363 = vmul.f32 %v1326, %v1142
      %v1364 = vmul.f32 %v1331, %v1141
      %v1365 = vrot.slane %v1074, 1
      %v1366 = vrot.slane %v1075, 1
      %v1367 = vrot.slane %v1076, 1
      %v1368 = vrot.slane %v1077, 1
      %v1369 = vrot.slane %v1078, 1
      %v1370 = vrot.slane %v1079, 1
      %v1371 = vrot.slane %v1080, 1
      %v1372 = vrot.slane %v1081, 1
      %v1373 = vrot.slane %v1082, 1
      %v1374 = vrot.slane %v1083, 1
      %v1375 = vrot.slane %v1084, 1
      %v1376 = vrot.slane %v1085, 1
      %v1377 = vrot.slane %v1086, 1
      %v1378 = vrot.slane %v1087, 1
      %v1379 = vrot.slane %v1088, 1
      %v1380 = vrot.slane %v1089, 1
      %v1381 = vrot.slane %v1090, 1
      %v1382 = vrot.slane %v1091, 1
      %v1383 = vrot.slane %v1092, 1
      %v1384 = vrot.slane %v1093, 1
      %v1385 = vrot.slane %v1094, 1
      %v1386 = vrot.slane %v1095, 1
      %v1387 = vrot.slane %v1096, 1
      %v1388 = vrot.slane %v1097, 1
      %v1389 = vrot.slane %v1098, 1
      %v1390 = vrot.slane %v1099, 1
      %v1391 = vrot.slane %v1100, 1
      %v1392 = vrot.slane %v1101, 1
      %v1393 = vrot.slane %v1102, 1
      %v1394 = vrot.slane %v1103, 1
      %v1395 = vrot.slane %v1104, 1
      %v1396 = vrot.slane %v1105, 1
      %vm1397 = vcmp.lt.s32.totalorder %v1139, 7
      %v1398 = vsel %vm1397, %v1395, %v1396
      %v1399 = vsel %vm1397, %v1394, %v1395
      %v1400 = vsel %vm1397, %v1393, %v1394
      %v1401 = vsel %vm1397, %v1392, %v1393
      %v1402 = vsel %vm1397, %v1391, %v1392
      %v1403 = vsel %vm1397, %v1390, %v1391
      %v1404 = vsel %vm1397, %v1389, %v1390
      %v1405 = vsel %vm1397, %v1388, %v1389
      %v1406 = vsel %vm1397, %v1387, %v1388
      %v1407 = vsel %vm1397, %v1386, %v1387
      %v1408 = vsel %vm1397, %v1385, %v1386
      %v1409 = vsel %vm1397, %v1384, %v1385
      %v1410 = vsel %vm1397, %v1383, %v1384
      %v1411 = vsel %vm1397, %v1382, %v1383
      %v1412 = vsel %vm1397, %v1381, %v1382
      %v1413 = vsel %vm1397, %v1380, %v1381
      %v1414 = vsel %vm1397, %v1379, %v1380
      %v1415 = vsel %vm1397, %v1378, %v1379
      %v1416 = vsel %vm1397, %v1377, %v1378
      %v1417 = vsel %vm1397, %v1376, %v1377
      %v1418 = vsel %vm1397, %v1375, %v1376
      %v1419 = vsel %vm1397, %v1374, %v1375
      %v1420 = vsel %vm1397, %v1373, %v1374
      %v1421 = vsel %vm1397, %v1372, %v1373
      %v1422 = vsel %vm1397, %v1371, %v1372
      %v1423 = vsel %vm1397, %v1370, %v1371
      %v1424 = vsel %vm1397, %v1369, %v1370
      %v1425 = vsel %vm1397, %v1368, %v1369
      %v1426 = vsel %vm1397, %v1367, %v1368
      %v1427 = vsel %vm1397, %v1366, %v1367
      %v1428 = vsel %vm1397, %v1365, %v1366
      %v1429 = vsel %vm1397, %v1396, %v1365
      %1431 = vset.pattern.permute.xlu0 0
      %1432 = vperm.xlu0 %1431, %v641
      %v1433 = vpop.permute.xlu0 %1432
      %1436 = vset.pattern.permute.xlu0 0
      %1437 = vperm.xlu0 %1436, %v642
      %v1438 = vpop.permute.xlu0 %1437
      %1441 = vset.pattern.permute.xlu0 0
      %1442 = vperm.xlu0 %1441, %v643
      %v1443 = vpop.permute.xlu0 %1442
      %1446 = vset.pattern.permute.xlu0 0
      %1447 = vperm.xlu0 %1446, %v644
      %v1448 = vpop.permute.xlu0 %1447
      %1451 = vset.pattern.permute.xlu0 0
      %1452 = vperm.xlu0 %1451, %v645
      %v1453 = vpop.permute.xlu0 %1452
      %1456 = vset.pattern.permute.xlu0 0
      %1457 = vperm.xlu0 %1456, %v646
      %v1458 = vpop.permute.xlu0 %1457
      %1461 = vset.pattern.permute.xlu0 0
      %1462 = vperm.xlu0 %1461, %v647
      %v1463 = vpop.permute.xlu0 %1462
      %1466 = vset.pattern.permute.xlu0 0
      %1467 = vperm.xlu0 %1466, %v648
      %v1468 = vpop.permute.xlu0 %1467
      %1471 = vset.pattern.permute.xlu0 0
      %1472 = vperm.xlu0 %1471, %v649
      %v1473 = vpop.permute.xlu0 %1472
      %1476 = vset.pattern.permute.xlu0 0
      %1477 = vperm.xlu0 %1476, %v650
      %v1478 = vpop.permute.xlu0 %1477
      %1481 = vset.pattern.permute.xlu0 0
      %1482 = vperm.xlu0 %1481, %v651
      %v1483 = vpop.permute.xlu0 %1482
      %1486 = vset.pattern.permute.xlu0 0
      %1487 = vperm.xlu0 %1486, %v652
      %v1488 = vpop.permute.xlu0 %1487
      %1491 = vset.pattern.permute.xlu0 0
      %1492 = vperm.xlu0 %1491, %v653
      %v1493 = vpop.permute.xlu0 %1492
      %1496 = vset.pattern.permute.xlu0 0
      %1497 = vperm.xlu0 %1496, %v654
      %v1498 = vpop.permute.xlu0 %1497
      %1501 = vset.pattern.permute.xlu0 0
      %1502 = vperm.xlu0 %1501, %v655
      %v1503 = vpop.permute.xlu0 %1502
      %1506 = vset.pattern.permute.xlu0 0
      %1507 = vperm.xlu0 %1506, %v656
      %v1508 = vpop.permute.xlu0 %1507
      %1511 = vset.pattern.permute.xlu0 0
      %1512 = vperm.xlu0 %1511, %v657
      %v1513 = vpop.permute.xlu0 %1512
      %1516 = vset.pattern.permute.xlu0 0
      %1517 = vperm.xlu0 %1516, %v658
      %v1518 = vpop.permute.xlu0 %1517
      %1521 = vset.pattern.permute.xlu0 0
      %1522 = vperm.xlu0 %1521, %v659
      %v1523 = vpop.permute.xlu0 %1522
      %1526 = vset.pattern.permute.xlu0 0
      %1527 = vperm.xlu0 %1526, %v660
      %v1528 = vpop.permute.xlu0 %1527
      %1531 = vset.pattern.permute.xlu0 0
      %1532 = vperm.xlu0 %1531, %v661
      %v1533 = vpop.permute.xlu0 %1532
      %1536 = vset.pattern.permute.xlu0 0
      %1537 = vperm.xlu0 %1536, %v662
      %v1538 = vpop.permute.xlu0 %1537
      %1541 = vset.pattern.permute.xlu0 0
      %1542 = vperm.xlu0 %1541, %v663
      %v1543 = vpop.permute.xlu0 %1542
      %1546 = vset.pattern.permute.xlu0 0
      %1547 = vperm.xlu0 %1546, %v664
      %v1548 = vpop.permute.xlu0 %1547
      %1551 = vset.pattern.permute.xlu0 0
      %1552 = vperm.xlu0 %1551, %v665
      %v1553 = vpop.permute.xlu0 %1552
      %1556 = vset.pattern.permute.xlu0 0
      %1557 = vperm.xlu0 %1556, %v666
      %v1558 = vpop.permute.xlu0 %1557
      %1561 = vset.pattern.permute.xlu0 0
      %1562 = vperm.xlu0 %1561, %v667
      %v1563 = vpop.permute.xlu0 %1562
      %1566 = vset.pattern.permute.xlu0 0
      %1567 = vperm.xlu0 %1566, %v668
      %v1568 = vpop.permute.xlu0 %1567
      %1571 = vset.pattern.permute.xlu0 0
      %1572 = vperm.xlu0 %1571, %v669
      %v1573 = vpop.permute.xlu0 %1572
      %1576 = vset.pattern.permute.xlu0 0
      %1577 = vperm.xlu0 %1576, %v670
      %v1578 = vpop.permute.xlu0 %1577
      %1581 = vset.pattern.permute.xlu0 0
      %1582 = vperm.xlu0 %1581, %v671
      %v1583 = vpop.permute.xlu0 %1582
      %1586 = vset.pattern.permute.xlu0 0
      %1587 = vperm.xlu0 %1586, %v672
      %v1588 = vpop.permute.xlu0 %1587
      %v1590 = vmul.f32 %v1433, %v1428
      %v1591 = vmul.f32 %v1438, %v1427
      %v1592 = vmul.f32 %v1443, %v1426
      %v1593 = vmul.f32 %v1448, %v1425
      %v1594 = vmul.f32 %v1453, %v1424
      %v1595 = vmul.f32 %v1458, %v1423
      %v1596 = vmul.f32 %v1463, %v1422
      %v1597 = vmul.f32 %v1468, %v1421
      %v1598 = vmul.f32 %v1473, %v1420
      %v1599 = vmul.f32 %v1478, %v1419
      %v1600 = vmul.f32 %v1483, %v1418
      %v1601 = vmul.f32 %v1488, %v1417
      %v1602 = vmul.f32 %v1493, %v1416
      %v1603 = vmul.f32 %v1498, %v1415
      %v1604 = vmul.f32 %v1503, %v1414
      %v1605 = vmul.f32 %v1508, %v1413
      %v1606 = vmul.f32 %v1513, %v1412
      %v1607 = vmul.f32 %v1518, %v1411
      %v1608 = vmul.f32 %v1523, %v1410
      %v1609 = vmul.f32 %v1528, %v1409
      %v1610 = vmul.f32 %v1533, %v1408
      %v1611 = vmul.f32 %v1538, %v1407
      %v1612 = vmul.f32 %v1543, %v1406
      %v1613 = vmul.f32 %v1548, %v1405
      %v1614 = vmul.f32 %v1553, %v1404
      %v1615 = vmul.f32 %v1558, %v1403
      %v1616 = vmul.f32 %v1563, %v1402
      %v1617 = vmul.f32 %v1568, %v1401
      %v1618 = vmul.f32 %v1573, %v1400
      %v1619 = vmul.f32 %v1578, %v1399
      %v1620 = vmul.f32 %v1583, %v1398
      %v1621 = vmul.f32 %v1588, %v1429
      %1654 = vrot.lane.b32.xlu0 %v1074, 8
      %v1655 = vpop.permute.xlu0 %1654
      %1656 = vrot.lane.b32.xlu0 %v1075, 8
      %v1657 = vpop.permute.xlu0 %1656
      %1658 = vrot.lane.b32.xlu0 %v1076, 8
      %v1659 = vpop.permute.xlu0 %1658
      %1660 = vrot.lane.b32.xlu0 %v1077, 8
      %v1661 = vpop.permute.xlu0 %1660
      %1662 = vrot.lane.b32.xlu0 %v1078, 8
      %v1663 = vpop.permute.xlu0 %1662
      %1664 = vrot.lane.b32.xlu0 %v1079, 8
      %v1665 = vpop.permute.xlu0 %1664
      %1666 = vrot.lane.b32.xlu0 %v1080, 8
      %v1667 = vpop.permute.xlu0 %1666
      %1668 = vrot.lane.b32.xlu0 %v1081, 8
      %v1669 = vpop.permute.xlu0 %1668
      %1670 = vrot.lane.b32.xlu0 %v1082, 8
      %v1671 = vpop.permute.xlu0 %1670
      %1672 = vrot.lane.b32.xlu0 %v1083, 8
      %v1673 = vpop.permute.xlu0 %1672
      %1674 = vrot.lane.b32.xlu0 %v1084, 8
      %v1675 = vpop.permute.xlu0 %1674
      %1676 = vrot.lane.b32.xlu0 %v1085, 8
      %v1677 = vpop.permute.xlu0 %1676
      %1678 = vrot.lane.b32.xlu0 %v1086, 8
      %v1679 = vpop.permute.xlu0 %1678
      %1680 = vrot.lane.b32.xlu0 %v1087, 8
      %v1681 = vpop.permute.xlu0 %1680
      %1682 = vrot.lane.b32.xlu0 %v1088, 8
      %v1683 = vpop.permute.xlu0 %1682
      %1684 = vrot.lane.b32.xlu0 %v1089, 8
      %v1685 = vpop.permute.xlu0 %1684
      %1686 = vrot.lane.b32.xlu0 %v1090, 8
      %v1687 = vpop.permute.xlu0 %1686
      %1688 = vrot.lane.b32.xlu0 %v1091, 8
      %v1689 = vpop.permute.xlu0 %1688
      %1690 = vrot.lane.b32.xlu0 %v1092, 8
      %v1691 = vpop.permute.xlu0 %1690
      %1692 = vrot.lane.b32.xlu0 %v1093, 8
      %v1693 = vpop.permute.xlu0 %1692
      %1694 = vrot.lane.b32.xlu0 %v1094, 8
      %v1695 = vpop.permute.xlu0 %1694
      %1696 = vrot.lane.b32.xlu0 %v1095, 8
      %v1697 = vpop.permute.xlu0 %1696
      %1698 = vrot.lane.b32.xlu0 %v1096, 8
      %v1699 = vpop.permute.xlu0 %1698
      %1700 = vrot.lane.b32.xlu0 %v1097, 8
      %v1701 = vpop.permute.xlu0 %1700
      %1702 = vrot.lane.b32.xlu0 %v1098, 8
      %v1703 = vpop.permute.xlu0 %1702
      %1704 = vrot.lane.b32.xlu0 %v1099, 8
      %v1705 = vpop.permute.xlu0 %1704
      %1706 = vrot.lane.b32.xlu0 %v1100, 8
      %v1707 = vpop.permute.xlu0 %1706
      %1708 = vrot.lane.b32.xlu0 %v1101, 8
      %v1709 = vpop.permute.xlu0 %1708
      %1710 = vrot.lane.b32.xlu0 %v1102, 8
      %v1711 = vpop.permute.xlu0 %1710
      %1712 = vrot.lane.b32.xlu0 %v1103, 8
      %v1713 = vpop.permute.xlu0 %1712
      %1714 = vrot.lane.b32.xlu0 %v1104, 8
      %v1715 = vpop.permute.xlu0 %1714
      %1716 = vrot.lane.b32.xlu0 %v1105, 8
      %v1717 = vpop.permute.xlu0 %1716
      %1782 = vrot.lane.b32.xlu0 %v1590, 16
      %v1783 = vpop.permute.xlu0 %1782
      %1784 = vrot.lane.b32.xlu0 %v1591, 16
      %v1785 = vpop.permute.xlu0 %1784
      %1786 = vrot.lane.b32.xlu0 %v1592, 16
      %v1787 = vpop.permute.xlu0 %1786
      %1788 = vrot.lane.b32.xlu0 %v1593, 16
      %v1789 = vpop.permute.xlu0 %1788
      %1790 = vrot.lane.b32.xlu0 %v1594, 16
      %v1791 = vpop.permute.xlu0 %1790
      %1792 = vrot.lane.b32.xlu0 %v1595, 16
      %v1793 = vpop.permute.xlu0 %1792
      %1794 = vrot.lane.b32.xlu0 %v1596, 16
      %v1795 = vpop.permute.xlu0 %1794
      %1796 = vrot.lane.b32.xlu0 %v1597, 16
      %v1797 = vpop.permute.xlu0 %1796
      %1798 = vrot.lane.b32.xlu0 %v1598, 16
      %v1799 = vpop.permute.xlu0 %1798
      %1800 = vrot.lane.b32.xlu0 %v1599, 16
      %v1801 = vpop.permute.xlu0 %1800
      %1802 = vrot.lane.b32.xlu0 %v1600, 16
      %v1803 = vpop.permute.xlu0 %1802
      %1804 = vrot.lane.b32.xlu0 %v1601, 16
      %v1805 = vpop.permute.xlu0 %1804
      %1806 = vrot.lane.b32.xlu0 %v1602, 16
      %v1807 = vpop.permute.xlu0 %1806
      %1808 = vrot.lane.b32.xlu0 %v1603, 16
      %v1809 = vpop.permute.xlu0 %1808
      %1810 = vrot.lane.b32.xlu0 %v1604, 16
      %v1811 = vpop.permute.xlu0 %1810
      %1812 = vrot.lane.b32.xlu0 %v1605, 16
      %v1813 = vpop.permute.xlu0 %1812
      %1814 = vrot.lane.b32.xlu0 %v1606, 16
      %v1815 = vpop.permute.xlu0 %1814
      %1816 = vrot.lane.b32.xlu0 %v1607, 16
      %v1817 = vpop.permute.xlu0 %1816
      %1818 = vrot.lane.b32.xlu0 %v1608, 16
      %v1819 = vpop.permute.xlu0 %1818
      %1820 = vrot.lane.b32.xlu0 %v1609, 16
      %v1821 = vpop.permute.xlu0 %1820
      %1822 = vrot.lane.b32.xlu0 %v1610, 16
      %v1823 = vpop.permute.xlu0 %1822
      %1824 = vrot.lane.b32.xlu0 %v1611, 16
      %v1825 = vpop.permute.xlu0 %1824
      %1826 = vrot.lane.b32.xlu0 %v1612, 16
      %v1827 = vpop.permute.xlu0 %1826
      %1828 = vrot.lane.b32.xlu0 %v1613, 16
      %v1829 = vpop.permute.xlu0 %1828
      %1830 = vrot.lane.b32.xlu0 %v1614, 16
      %v1831 = vpop.permute.xlu0 %1830
      %1832 = vrot.lane.b32.xlu0 %v1615, 16
      %v1833 = vpop.permute.xlu0 %1832
      %1834 = vrot.lane.b32.xlu0 %v1616, 16
      %v1835 = vpop.permute.xlu0 %1834
      %1836 = vrot.lane.b32.xlu0 %v1617, 16
      %v1837 = vpop.permute.xlu0 %1836
      %1838 = vrot.lane.b32.xlu0 %v1618, 16
      %v1839 = vpop.permute.xlu0 %1838
      %1840 = vrot.lane.b32.xlu0 %v1619, 16
      %v1841 = vpop.permute.xlu0 %1840
      %1842 = vrot.lane.b32.xlu0 %v1620, 16
      %v1843 = vpop.permute.xlu0 %1842
      %1844 = vrot.lane.b32.xlu0 %v1621, 16
      %v1845 = vpop.permute.xlu0 %1844
      %vm1878 = vcmask 64512
      %v1879 = vsel %vm1878, %v1333, %v1655
      %v1880 = vsel %vm1878, %v1334, %v1657
      %v1881 = vsel %vm1878, %v1335, %v1659
      %v1882 = vsel %vm1878, %v1336, %v1661
      %v1883 = vsel %vm1878, %v1337, %v1663
      %v1884 = vsel %vm1878, %v1338, %v1665
      %v1885 = vsel %vm1878, %v1339, %v1667
      %v1886 = vsel %vm1878, %v1340, %v1669
      %v1887 = vsel %vm1878, %v1341, %v1671
      %v1888 = vsel %vm1878, %v1342, %v1673
      %v1889 = vsel %vm1878, %v1343, %v1675
      %v1890 = vsel %vm1878, %v1344, %v1677
      %v1891 = vsel %vm1878, %v1345, %v1679
      %v1892 = vsel %vm1878, %v1346, %v1681
      %v1893 = vsel %vm1878, %v1347, %v1683
      %v1894 = vsel %vm1878, %v1348, %v1685
      %v1895 = vsel %vm1878, %v1349, %v1687
      %v1896 = vsel %vm1878, %v1350, %v1689
      %v1897 = vsel %vm1878, %v1351, %v1691
      %v1898 = vsel %vm1878, %v1352, %v1693
      %v1899 = vsel %vm1878, %v1353, %v1695
      %v1900 = vsel %vm1878, %v1354, %v1697
      %v1901 = vsel %vm1878, %v1355, %v1699
      %v1902 = vsel %vm1878, %v1356, %v1701
      %v1903 = vsel %vm1878, %v1357, %v1703
      %v1904 = vsel %vm1878, %v1358, %v1705
      %v1905 = vsel %vm1878, %v1359, %v1707
      %v1906 = vsel %vm1878, %v1360, %v1709
      %v1907 = vsel %vm1878, %v1361, %v1711
      %v1908 = vsel %vm1878, %v1362, %v1713
      %v1909 = vsel %vm1878, %v1363, %v1715
      %v1910 = vsel %vm1878, %v1364, %v1717
      %v1911 = vsel %vm864, %v1879, %v1783
      %v1912 = vsel %vm864, %v1880, %v1785
      %v1913 = vsel %vm864, %v1881, %v1787
      %v1914 = vsel %vm864, %v1882, %v1789
      %v1915 = vsel %vm864, %v1883, %v1791
      %v1916 = vsel %vm864, %v1884, %v1793
      %v1917 = vsel %vm864, %v1885, %v1795
      %v1918 = vsel %vm864, %v1886, %v1797
      %v1919 = vsel %vm864, %v1887, %v1799
      %v1920 = vsel %vm864, %v1888, %v1801
      %v1921 = vsel %vm864, %v1889, %v1803
      %v1922 = vsel %vm864, %v1890, %v1805
      %v1923 = vsel %vm864, %v1891, %v1807
      %v1924 = vsel %vm864, %v1892, %v1809
      %v1925 = vsel %vm864, %v1893, %v1811
      %v1926 = vsel %vm864, %v1894, %v1813
      %v1927 = vsel %vm864, %v1895, %v1815
      %v1928 = vsel %vm864, %v1896, %v1817
      %v1929 = vsel %vm864, %v1897, %v1819
      %v1930 = vsel %vm864, %v1898, %v1821
      %v1931 = vsel %vm864, %v1899, %v1823
      %v1932 = vsel %vm864, %v1900, %v1825
      %v1933 = vsel %vm864, %v1901, %v1827
      %v1934 = vsel %vm864, %v1902, %v1829
      %v1935 = vsel %vm864, %v1903, %v1831
      %v1936 = vsel %vm864, %v1904, %v1833
      %v1937 = vsel %vm864, %v1905, %v1835
      %v1938 = vsel %vm864, %v1906, %v1837
      %v1939 = vsel %vm864, %v1907, %v1839
      %v1940 = vsel %vm864, %v1908, %v1841
      %v1941 = vsel %vm864, %v1909, %v1843
      %v1942 = vsel %vm864, %v1910, %v1845
      %v1943 = vpack.c.bf16 %v1912, %v1911
      %v1944 = vpack.c.bf16 %v1914, %v1913
      %v1945 = vpack.c.bf16 %v1916, %v1915
      %v1946 = vpack.c.bf16 %v1918, %v1917
      %v1947 = vpack.c.bf16 %v1920, %v1919
      %v1948 = vpack.c.bf16 %v1922, %v1921
      %v1949 = vpack.c.bf16 %v1924, %v1923
      %v1950 = vpack.c.bf16 %v1926, %v1925
      %v1951 = vpack.c.bf16 %v1928, %v1927
      %v1952 = vpack.c.bf16 %v1930, %v1929
      %v1953 = vpack.c.bf16 %v1932, %v1931
      %v1954 = vpack.c.bf16 %v1934, %v1933
      %v1955 = vpack.c.bf16 %v1936, %v1935
      %v1956 = vpack.c.bf16 %v1938, %v1937
      %v1957 = vpack.c.bf16 %v1940, %v1939
      %v1958 = vpack.c.bf16 %v1942, %v1941
      %v1959 = vld [vmem:[%s6] sm:$0xf]
      %v1960 = vld [vmem:[%s6 + $0x4] sm:$0xf]
      %v1961 = vld [vmem:[%s6 + $0x8] sm:$0xf]
      %v1965 = vunpack.c.l.b16 %v1959
      %v1966 = vunpack.c.l.b16 %v1960
      %v1967 = vunpack.c.l.b16 %v1961
      %v1968 = vpack.c.b16 %v1966, %v1965
      %v1969 = vpack.c.b16 %v1967, %v1967
      %vm1971 = vcmask 195584
      %v1973 = vsel %vm1971, %v1943, 0
      %v1976 = vsel %vm1971, %v1944, 0
      %v1979 = vsel %vm1971, %v1945, 0
      %v1982 = vsel %vm1971, %v1946, 0
      %v1985 = vsel %vm1971, %v1947, 0
      %v1988 = vsel %vm1971, %v1948, 0
      %v1991 = vsel %vm1971, %v1949, 0
      %v1994 = vsel %vm1971, %v1950, 0
      %v1997 = vsel %vm1971, %v1951, 0
      %v2000 = vsel %vm1971, %v1952, 0
      %v2003 = vsel %vm1971, %v1953, 0
      %v2006 = vsel %vm1971, %v1954, 0
      %v2009 = vsel %vm1971, %v1955, 0
      %v2012 = vsel %vm1971, %v1956, 0
      %v2015 = vsel %vm1971, %v1957, 0
      %v2018 = vsel %vm1971, %v1958, 0
      %vm2020 = vcmask 1043456
      %v2022 = vsel %vm2020, %v1969, 0
      %2024 = vmatprep.subr.bf16.mxu0 0
      %2025 = vmatpush1.bf16.msra.mxu0 0
      %2026 = vmatprep.subr.bf16.mxu0 0
      %2027 = vmatpush1.bf16.msra.mxu0 0
      %2028 = vmatprep.subr.bf16.mxu0 0
      %2029 = vmatpush1.bf16.msra.mxu0 0
      %2030 = vmatprep.subr.bf16.mxu0 0
      %2031 = vmatpush1.bf16.msra.mxu0 0
      %2032 = vmatprep.subr.bf16.mxu0 0
      %2033 = vmatpush1.bf16.msra.mxu0 0
      %2034 = vmatprep.subr.bf16.mxu0 0
      %2035 = vmatpush1.bf16.msra.mxu0 0
      %2036 = vmatprep.subr.bf16.mxu0 0
      %2037 = vmatpush1.bf16.msra.mxu0 %v2022
      %2038 = vmatprep.subr.bf16.mxu0 0
      %2039 = vmatpush1.bf16.msra.mxu0 %v1968
      %2040 = vmatprep.subr.bf16.mxu0 0
      %2041 = vmatpush2.bf16.msra.mxu0 0
      %2042 = vmatprep.subr.bf16.mxu0 0
      %2043 = vmatpush2.bf16.msra.mxu0 0
      %2044 = vmatprep.subr.bf16.mxu0 0
      %2045 = vmatpush2.bf16.msra.mxu0 0
      %2046 = vmatprep.subr.bf16.mxu0 0
      %2047 = vmatpush2.bf16.msra.mxu0 0
      %2048 = vmatprep.subr.bf16.mxu0 0
      %2049 = vmatpush2.bf16.msra.mxu0 0
      %2050 = vmatprep.subr.bf16.mxu0 0
      %2051 = vmatpush2.bf16.msra.mxu0 0
      %2052 = vmatprep.subr.bf16.mxu0 0
      %2053 = vmatpush2.bf16.msra.mxu0 0
      %2054 = vmatprep.subr.bf16.mxu0 0
      %2055 = vmatpush2.bf16.msra.mxu0 0
      %2056 = vmatprep.mubr.bf16.mxu0 0
      %2057 = vmatmul.mubr.bf16.gmra.mxu0 %v1973
      %v2058 = vpop.f32.mrf.mxu0
      %v2059 = vadd.f32 0.0, %v2058
      %v2060 = vpop.f32.mrf.mxu0
      %v2061 = vpop.f32.mrf.mxu0
      %v2062 = vadd.f32 0.0, %v2061
      %v2063 = vpop.f32.mrf.mxu0
      %2064 = vmatprep.mubr.bf16.mxu0 0
      %2065 = vmatmul.mubr.bf16.gmra.mxu0 %v1976
      %v2066 = vpop.f32.mrf.mxu0
      %v2067 = vadd.f32 0.0, %v2066
      %v2068 = vpop.f32.mrf.mxu0
      %v2069 = vpop.f32.mrf.mxu0
      %v2070 = vadd.f32 0.0, %v2069
      %v2071 = vpop.f32.mrf.mxu0
      %2072 = vmatprep.mubr.bf16.mxu0 0
      %2073 = vmatmul.mubr.bf16.gmra.mxu0 %v1979
      %v2074 = vpop.f32.mrf.mxu0
      %v2075 = vadd.f32 0.0, %v2074
      %v2076 = vpop.f32.mrf.mxu0
      %v2077 = vpop.f32.mrf.mxu0
      %v2078 = vadd.f32 0.0, %v2077
      %v2079 = vpop.f32.mrf.mxu0
      %2080 = vmatprep.mubr.bf16.mxu0 0
      %2081 = vmatmul.mubr.bf16.gmra.mxu0 %v1982
      %v2082 = vpop.f32.mrf.mxu0
      %v2083 = vadd.f32 0.0, %v2082
      %v2084 = vpop.f32.mrf.mxu0
      %v2085 = vpop.f32.mrf.mxu0
      %v2086 = vadd.f32 0.0, %v2085
      %v2087 = vpop.f32.mrf.mxu0
      %2088 = vmatprep.mubr.bf16.mxu0 0
      %2089 = vmatmul.mubr.bf16.gmra.mxu0 %v1985
      %v2090 = vpop.f32.mrf.mxu0
      %v2091 = vadd.f32 0.0, %v2090
      %v2092 = vpop.f32.mrf.mxu0
      %v2093 = vpop.f32.mrf.mxu0
      %v2094 = vadd.f32 0.0, %v2093
      %v2095 = vpop.f32.mrf.mxu0
      %2096 = vmatprep.mubr.bf16.mxu0 0
      %2097 = vmatmul.mubr.bf16.gmra.mxu0 %v1988
      %v2098 = vpop.f32.mrf.mxu0
      %v2099 = vadd.f32 0.0, %v2098
      %v2100 = vpop.f32.mrf.mxu0
      %v2101 = vpop.f32.mrf.mxu0
      %v2102 = vadd.f32 0.0, %v2101
      %v2103 = vpop.f32.mrf.mxu0
      %2104 = vmatprep.mubr.bf16.mxu0 0
      %2105 = vmatmul.mubr.bf16.gmra.mxu0 %v1991
      %v2106 = vpop.f32.mrf.mxu0
      %v2107 = vadd.f32 0.0, %v2106
      %v2108 = vpop.f32.mrf.mxu0
      %v2109 = vpop.f32.mrf.mxu0
      %v2110 = vadd.f32 0.0, %v2109
      %v2111 = vpop.f32.mrf.mxu0
      %2112 = vmatprep.mubr.bf16.mxu0 0
      %2113 = vmatmul.mubr.bf16.gmra.mxu0 %v1994
      %v2114 = vpop.f32.mrf.mxu0
      %v2115 = vadd.f32 0.0, %v2114
      %v2116 = vpop.f32.mrf.mxu0
      %v2117 = vpop.f32.mrf.mxu0
      %v2118 = vadd.f32 0.0, %v2117
      %v2119 = vpop.f32.mrf.mxu0
      %2120 = vmatprep.mubr.bf16.mxu0 0
      %2121 = vmatmul.mubr.bf16.gmra.mxu0 %v1997
      %v2122 = vpop.f32.mrf.mxu0
      %v2123 = vadd.f32 0.0, %v2122
      %v2124 = vpop.f32.mrf.mxu0
      %v2125 = vpop.f32.mrf.mxu0
      %v2126 = vadd.f32 0.0, %v2125
      %v2127 = vpop.f32.mrf.mxu0
      %2128 = vmatprep.mubr.bf16.mxu0 0
      %2129 = vmatmul.mubr.bf16.gmra.mxu0 %v2000
      %v2130 = vpop.f32.mrf.mxu0
      %v2131 = vadd.f32 0.0, %v2130
      %v2132 = vpop.f32.mrf.mxu0
      %v2133 = vpop.f32.mrf.mxu0
      %v2134 = vadd.f32 0.0, %v2133
      %v2135 = vpop.f32.mrf.mxu0
      %2136 = vmatprep.mubr.bf16.mxu0 0
      %2137 = vmatmul.mubr.bf16.gmra.mxu0 %v2003
      %v2138 = vpop.f32.mrf.mxu0
      %v2139 = vadd.f32 0.0, %v2138
      %v2140 = vpop.f32.mrf.mxu0
      %v2141 = vpop.f32.mrf.mxu0
      %v2142 = vadd.f32 0.0, %v2141
      %v2143 = vpop.f32.mrf.mxu0
      %2144 = vmatprep.mubr.bf16.mxu0 0
      %2145 = vmatmul.mubr.bf16.gmra.mxu0 %v2006
      %v2146 = vpop.f32.mrf.mxu0
      %v2147 = vadd.f32 0.0, %v2146
      %v2148 = vpop.f32.mrf.mxu0
      %v2149 = vpop.f32.mrf.mxu0
      %v2150 = vadd.f32 0.0, %v2149
      %v2151 = vpop.f32.mrf.mxu0
      %2152 = vmatprep.mubr.bf16.mxu0 0
      %2153 = vmatmul.mubr.bf16.gmra.mxu0 %v2009
      %v2154 = vpop.f32.mrf.mxu0
      %v2155 = vadd.f32 0.0, %v2154
      %v2156 = vpop.f32.mrf.mxu0
      %v2157 = vpop.f32.mrf.mxu0
      %v2158 = vadd.f32 0.0, %v2157
      %v2159 = vpop.f32.mrf.mxu0
      %2160 = vmatprep.mubr.bf16.mxu0 0
      %2161 = vmatmul.mubr.bf16.gmra.mxu0 %v2012
      %v2162 = vpop.f32.mrf.mxu0
      %v2163 = vadd.f32 0.0, %v2162
      %v2164 = vpop.f32.mrf.mxu0
      %v2165 = vpop.f32.mrf.mxu0
      %v2166 = vadd.f32 0.0, %v2165
      %v2167 = vpop.f32.mrf.mxu0
      %2168 = vmatprep.mubr.bf16.mxu0 0
      %2169 = vmatmul.mubr.bf16.gmra.mxu0 %v2015
      %v2170 = vpop.f32.mrf.mxu0
      %v2171 = vadd.f32 0.0, %v2170
      %v2172 = vpop.f32.mrf.mxu0
      %v2173 = vpop.f32.mrf.mxu0
      %v2174 = vadd.f32 0.0, %v2173
      %v2175 = vpop.f32.mrf.mxu0
      %2176 = vmatprep.mubr.bf16.mxu0 0
      %2177 = vmatmul.mubr.bf16.gmra.mxu0 %v2018
      %v2178 = vpop.f32.mrf.mxu0
      %v2179 = vadd.f32 0.0, %v2178
      %v2180 = vpop.f32.mrf.mxu0
      %v2181 = vpop.f32.mrf.mxu0
      %v2182 = vadd.f32 0.0, %v2181
      %v2183 = vpop.f32.mrf.mxu0
      %2184 = vdwg.mxu0
      %2186 = vset.pattern.permute.xlu0 0
      %2187 = vperm.xlu0 %2186, %v673
      %v2188 = vpop.permute.xlu0 %2187
      %2191 = vset.pattern.permute.xlu0 0
      %2192 = vperm.xlu0 %2191, %v674
      %v2193 = vpop.permute.xlu0 %2192
      %2196 = vset.pattern.permute.xlu0 0
      %2197 = vperm.xlu0 %2196, %v675
      %v2198 = vpop.permute.xlu0 %2197
      %2201 = vset.pattern.permute.xlu0 0
      %2202 = vperm.xlu0 %2201, %v676
      %v2203 = vpop.permute.xlu0 %2202
      %2206 = vset.pattern.permute.xlu0 0
      %2207 = vperm.xlu0 %2206, %v677
      %v2208 = vpop.permute.xlu0 %2207
      %2211 = vset.pattern.permute.xlu0 0
      %2212 = vperm.xlu0 %2211, %v678
      %v2213 = vpop.permute.xlu0 %2212
      %2216 = vset.pattern.permute.xlu0 0
      %2217 = vperm.xlu0 %2216, %v679
      %v2218 = vpop.permute.xlu0 %2217
      %2221 = vset.pattern.permute.xlu0 0
      %2222 = vperm.xlu0 %2221, %v680
      %v2223 = vpop.permute.xlu0 %2222
      %2226 = vset.pattern.permute.xlu0 0
      %2227 = vperm.xlu0 %2226, %v681
      %v2228 = vpop.permute.xlu0 %2227
      %2231 = vset.pattern.permute.xlu0 0
      %2232 = vperm.xlu0 %2231, %v682
      %v2233 = vpop.permute.xlu0 %2232
      %2236 = vset.pattern.permute.xlu0 0
      %2237 = vperm.xlu0 %2236, %v683
      %v2238 = vpop.permute.xlu0 %2237
      %2241 = vset.pattern.permute.xlu0 0
      %2242 = vperm.xlu0 %2241, %v684
      %v2243 = vpop.permute.xlu0 %2242
      %2246 = vset.pattern.permute.xlu0 0
      %2247 = vperm.xlu0 %2246, %v685
      %v2248 = vpop.permute.xlu0 %2247
      %2251 = vset.pattern.permute.xlu0 0
      %2252 = vperm.xlu0 %2251, %v686
      %v2253 = vpop.permute.xlu0 %2252
      %2256 = vset.pattern.permute.xlu0 0
      %2257 = vperm.xlu0 %2256, %v687
      %v2258 = vpop.permute.xlu0 %2257
      %2261 = vset.pattern.permute.xlu0 0
      %2262 = vperm.xlu0 %2261, %v688
      %v2263 = vpop.permute.xlu0 %2262
      %2266 = vset.pattern.permute.xlu0 0
      %2267 = vperm.xlu0 %2266, %v689
      %v2268 = vpop.permute.xlu0 %2267
      %2271 = vset.pattern.permute.xlu0 0
      %2272 = vperm.xlu0 %2271, %v690
      %v2273 = vpop.permute.xlu0 %2272
      %2276 = vset.pattern.permute.xlu0 0
      %2277 = vperm.xlu0 %2276, %v691
      %v2278 = vpop.permute.xlu0 %2277
      %2281 = vset.pattern.permute.xlu0 0
      %2282 = vperm.xlu0 %2281, %v692
      %v2283 = vpop.permute.xlu0 %2282
      %2286 = vset.pattern.permute.xlu0 0
      %2287 = vperm.xlu0 %2286, %v693
      %v2288 = vpop.permute.xlu0 %2287
      %2291 = vset.pattern.permute.xlu0 0
      %2292 = vperm.xlu0 %2291, %v694
      %v2293 = vpop.permute.xlu0 %2292
      %2296 = vset.pattern.permute.xlu0 0
      %2297 = vperm.xlu0 %2296, %v695
      %v2298 = vpop.permute.xlu0 %2297
      %2301 = vset.pattern.permute.xlu0 0
      %2302 = vperm.xlu0 %2301, %v696
      %v2303 = vpop.permute.xlu0 %2302
      %2306 = vset.pattern.permute.xlu0 0
      %2307 = vperm.xlu0 %2306, %v697
      %v2308 = vpop.permute.xlu0 %2307
      %2311 = vset.pattern.permute.xlu0 0
      %2312 = vperm.xlu0 %2311, %v698
      %v2313 = vpop.permute.xlu0 %2312
      %2316 = vset.pattern.permute.xlu0 0
      %2317 = vperm.xlu0 %2316, %v699
      %v2318 = vpop.permute.xlu0 %2317
      %2321 = vset.pattern.permute.xlu0 0
      %2322 = vperm.xlu0 %2321, %v700
      %v2323 = vpop.permute.xlu0 %2322
      %2326 = vset.pattern.permute.xlu0 0
      %2327 = vperm.xlu0 %2326, %v701
      %v2328 = vpop.permute.xlu0 %2327
      %2331 = vset.pattern.permute.xlu0 0
      %2332 = vperm.xlu0 %2331, %v702
      %v2333 = vpop.permute.xlu0 %2332
      %2336 = vset.pattern.permute.xlu0 0
      %2337 = vperm.xlu0 %2336, %v703
      %v2338 = vpop.permute.xlu0 %2337
      %2341 = vset.pattern.permute.xlu0 0
      %2342 = vperm.xlu0 %2341, %v704
      %v2343 = vpop.permute.xlu0 %2342
      %v2345 = vmul.f32 %v2188, %v2179
      %v2346 = vmul.f32 %v2193, %v2182
      %v2347 = vmul.f32 %v2198, %v2059
      %v2348 = vmul.f32 %v2203, %v2062
      %v2349 = vmul.f32 %v2208, %v2067
      %v2350 = vmul.f32 %v2213, %v2070
      %v2351 = vmul.f32 %v2218, %v2075
      %v2352 = vmul.f32 %v2223, %v2078
      %v2353 = vmul.f32 %v2228, %v2083
      %v2354 = vmul.f32 %v2233, %v2086
      %v2355 = vmul.f32 %v2238, %v2091
      %v2356 = vmul.f32 %v2243, %v2094
      %v2357 = vmul.f32 %v2248, %v2099
      %v2358 = vmul.f32 %v2253, %v2102
      %v2359 = vmul.f32 %v2258, %v2107
      %v2360 = vmul.f32 %v2263, %v2110
      %v2361 = vmul.f32 %v2268, %v2115
      %v2362 = vmul.f32 %v2273, %v2118
      %v2363 = vmul.f32 %v2278, %v2123
      %v2364 = vmul.f32 %v2283, %v2126
      %v2365 = vmul.f32 %v2288, %v2131
      %v2366 = vmul.f32 %v2293, %v2134
      %v2367 = vmul.f32 %v2298, %v2139
      %v2368 = vmul.f32 %v2303, %v2142
      %v2369 = vmul.f32 %v2308, %v2147
      %v2370 = vmul.f32 %v2313, %v2150
      %v2371 = vmul.f32 %v2318, %v2155
      %v2372 = vmul.f32 %v2323, %v2158
      %v2373 = vmul.f32 %v2328, %v2163
      %v2374 = vmul.f32 %v2333, %v2166
      %v2375 = vmul.f32 %v2338, %v2171
      %v2376 = vmul.f32 %v2343, %v2174
      %2409 = vrot.lane.b32.xlu0 %v2345, 8
      %v2410 = vpop.permute.xlu0 %2409
      %2411 = vrot.lane.b32.xlu0 %v2346, 8
      %v2412 = vpop.permute.xlu0 %2411
      %2413 = vrot.lane.b32.xlu0 %v2347, 8
      %v2414 = vpop.permute.xlu0 %2413
      %2415 = vrot.lane.b32.xlu0 %v2348, 8
      %v2416 = vpop.permute.xlu0 %2415
      %2417 = vrot.lane.b32.xlu0 %v2349, 8
      %v2418 = vpop.permute.xlu0 %2417
      %2419 = vrot.lane.b32.xlu0 %v2350, 8
      %v2420 = vpop.permute.xlu0 %2419
      %2421 = vrot.lane.b32.xlu0 %v2351, 8
      %v2422 = vpop.permute.xlu0 %2421
      %2423 = vrot.lane.b32.xlu0 %v2352, 8
      %v2424 = vpop.permute.xlu0 %2423
      %2425 = vrot.lane.b32.xlu0 %v2353, 8
      %v2426 = vpop.permute.xlu0 %2425
      %2427 = vrot.lane.b32.xlu0 %v2354, 8
      %v2428 = vpop.permute.xlu0 %2427
      %2429 = vrot.lane.b32.xlu0 %v2355, 8
      %v2430 = vpop.permute.xlu0 %2429
      %2431 = vrot.lane.b32.xlu0 %v2356, 8
      %v2432 = vpop.permute.xlu0 %2431
      %2433 = vrot.lane.b32.xlu0 %v2357, 8
      %v2434 = vpop.permute.xlu0 %2433
      %2435 = vrot.lane.b32.xlu0 %v2358, 8
      %v2436 = vpop.permute.xlu0 %2435
      %2437 = vrot.lane.b32.xlu0 %v2359, 8
      %v2438 = vpop.permute.xlu0 %2437
      %2439 = vrot.lane.b32.xlu0 %v2360, 8
      %v2440 = vpop.permute.xlu0 %2439
      %2441 = vrot.lane.b32.xlu0 %v2361, 8
      %v2442 = vpop.permute.xlu0 %2441
      %2443 = vrot.lane.b32.xlu0 %v2362, 8
      %v2444 = vpop.permute.xlu0 %2443
      %2445 = vrot.lane.b32.xlu0 %v2363, 8
      %v2446 = vpop.permute.xlu0 %2445
      %2447 = vrot.lane.b32.xlu0 %v2364, 8
      %v2448 = vpop.permute.xlu0 %2447
      %2449 = vrot.lane.b32.xlu0 %v2365, 8
      %v2450 = vpop.permute.xlu0 %2449
      %2451 = vrot.lane.b32.xlu0 %v2366, 8
      %v2452 = vpop.permute.xlu0 %2451
      %2453 = vrot.lane.b32.xlu0 %v2367, 8
      %v2454 = vpop.permute.xlu0 %2453
      %2455 = vrot.lane.b32.xlu0 %v2368, 8
      %v2456 = vpop.permute.xlu0 %2455
      %2457 = vrot.lane.b32.xlu0 %v2369, 8
      %v2458 = vpop.permute.xlu0 %2457
      %2459 = vrot.lane.b32.xlu0 %v2370, 8
      %v2460 = vpop.permute.xlu0 %2459
      %2461 = vrot.lane.b32.xlu0 %v2371, 8
      %v2462 = vpop.permute.xlu0 %2461
      %2463 = vrot.lane.b32.xlu0 %v2372, 8
      %v2464 = vpop.permute.xlu0 %2463
      %2465 = vrot.lane.b32.xlu0 %v2373, 8
      %v2466 = vpop.permute.xlu0 %2465
      %2467 = vrot.lane.b32.xlu0 %v2374, 8
      %v2468 = vpop.permute.xlu0 %2467
      %2469 = vrot.lane.b32.xlu0 %v2375, 8
      %v2470 = vpop.permute.xlu0 %2469
      %2471 = vrot.lane.b32.xlu0 %v2376, 8
      %v2472 = vpop.permute.xlu0 %2471
      %v2505 = vadd.f32 %v2059, %v2410
      %v2506 = vadd.f32 %v2062, %v2412
      %v2507 = vadd.f32 %v2067, %v2414
      %v2508 = vadd.f32 %v2070, %v2416
      %v2509 = vadd.f32 %v2075, %v2418
      %v2510 = vadd.f32 %v2078, %v2420
      %v2511 = vadd.f32 %v2083, %v2422
      %v2512 = vadd.f32 %v2086, %v2424
      %v2513 = vadd.f32 %v2091, %v2426
      %v2514 = vadd.f32 %v2094, %v2428
      %v2515 = vadd.f32 %v2099, %v2430
      %v2516 = vadd.f32 %v2102, %v2432
      %v2517 = vadd.f32 %v2107, %v2434
      %v2518 = vadd.f32 %v2110, %v2436
      %v2519 = vadd.f32 %v2115, %v2438
      %v2520 = vadd.f32 %v2118, %v2440
      %v2521 = vadd.f32 %v2123, %v2442
      %v2522 = vadd.f32 %v2126, %v2444
      %v2523 = vadd.f32 %v2131, %v2446
      %v2524 = vadd.f32 %v2134, %v2448
      %v2525 = vadd.f32 %v2139, %v2450
      %v2526 = vadd.f32 %v2142, %v2452
      %v2527 = vadd.f32 %v2147, %v2454
      %v2528 = vadd.f32 %v2150, %v2456
      %v2529 = vadd.f32 %v2155, %v2458
      %v2530 = vadd.f32 %v2158, %v2460
      %v2531 = vadd.f32 %v2163, %v2462
      %v2532 = vadd.f32 %v2166, %v2464
      %v2533 = vadd.f32 %v2171, %v2466
      %v2534 = vadd.f32 %v2174, %v2468
      %v2535 = vadd.f32 %v2179, %v2470
      %v2536 = vadd.f32 %v2182, %v2472
      %2569 = vrot.lane.b32.xlu0 %v2059, 112
      %v2570 = vpop.permute.xlu0 %2569
      %2571 = vrot.lane.b32.xlu0 %v2062, 112
      %v2572 = vpop.permute.xlu0 %2571
      %2573 = vrot.lane.b32.xlu0 %v2067, 112
      %v2574 = vpop.permute.xlu0 %2573
      %2575 = vrot.lane.b32.xlu0 %v2070, 112
      %v2576 = vpop.permute.xlu0 %2575
      %2577 = vrot.lane.b32.xlu0 %v2075, 112
      %v2578 = vpop.permute.xlu0 %2577
      %2579 = vrot.lane.b32.xlu0 %v2078, 112
      %v2580 = vpop.permute.xlu0 %2579
      %2581 = vrot.lane.b32.xlu0 %v2083, 112
      %v2582 = vpop.permute.xlu0 %2581
      %2583 = vrot.lane.b32.xlu0 %v2086, 112
      %v2584 = vpop.permute.xlu0 %2583
      %2585 = vrot.lane.b32.xlu0 %v2091, 112
      %v2586 = vpop.permute.xlu0 %2585
      %2587 = vrot.lane.b32.xlu0 %v2094, 112
      %v2588 = vpop.permute.xlu0 %2587
      %2589 = vrot.lane.b32.xlu0 %v2099, 112
      %v2590 = vpop.permute.xlu0 %2589
      %2591 = vrot.lane.b32.xlu0 %v2102, 112
      %v2592 = vpop.permute.xlu0 %2591
      %2593 = vrot.lane.b32.xlu0 %v2107, 112
      %v2594 = vpop.permute.xlu0 %2593
      %2595 = vrot.lane.b32.xlu0 %v2110, 112
      %v2596 = vpop.permute.xlu0 %2595
      %2597 = vrot.lane.b32.xlu0 %v2115, 112
      %v2598 = vpop.permute.xlu0 %2597
      %2599 = vrot.lane.b32.xlu0 %v2118, 112
      %v2600 = vpop.permute.xlu0 %2599
      %2601 = vrot.lane.b32.xlu0 %v2123, 112
      %v2602 = vpop.permute.xlu0 %2601
      %2603 = vrot.lane.b32.xlu0 %v2126, 112
      %v2604 = vpop.permute.xlu0 %2603
      %2605 = vrot.lane.b32.xlu0 %v2131, 112
      %v2606 = vpop.permute.xlu0 %2605
      %2607 = vrot.lane.b32.xlu0 %v2134, 112
      %v2608 = vpop.permute.xlu0 %2607
      %2609 = vrot.lane.b32.xlu0 %v2139, 112
      %v2610 = vpop.permute.xlu0 %2609
      %2611 = vrot.lane.b32.xlu0 %v2142, 112
      %v2612 = vpop.permute.xlu0 %2611
      %2613 = vrot.lane.b32.xlu0 %v2147, 112
      %v2614 = vpop.permute.xlu0 %2613
      %2615 = vrot.lane.b32.xlu0 %v2150, 112
      %v2616 = vpop.permute.xlu0 %2615
      %2617 = vrot.lane.b32.xlu0 %v2155, 112
      %v2618 = vpop.permute.xlu0 %2617
      %2619 = vrot.lane.b32.xlu0 %v2158, 112
      %v2620 = vpop.permute.xlu0 %2619
      %2621 = vrot.lane.b32.xlu0 %v2163, 112
      %v2622 = vpop.permute.xlu0 %2621
      %2623 = vrot.lane.b32.xlu0 %v2166, 112
      %v2624 = vpop.permute.xlu0 %2623
      %2625 = vrot.lane.b32.xlu0 %v2171, 112
      %v2626 = vpop.permute.xlu0 %2625
      %2627 = vrot.lane.b32.xlu0 %v2174, 112
      %v2628 = vpop.permute.xlu0 %2627
      %2629 = vrot.lane.b32.xlu0 %v2179, 112
      %v2630 = vpop.permute.xlu0 %2629
      %2631 = vrot.lane.b32.xlu0 %v2182, 112
      %v2632 = vpop.permute.xlu0 %2631
      %2666 = vset.pattern.permute.xlu0 0
      %2667 = vperm.xlu0 %2666, %v705
      %v2668 = vpop.permute.xlu0 %2667
      %2671 = vset.pattern.permute.xlu0 0
      %2672 = vperm.xlu0 %2671, %v706
      %v2673 = vpop.permute.xlu0 %2672
      %2676 = vset.pattern.permute.xlu0 0
      %2677 = vperm.xlu0 %2676, %v707
      %v2678 = vpop.permute.xlu0 %2677
      %2681 = vset.pattern.permute.xlu0 0
      %2682 = vperm.xlu0 %2681, %v708
      %v2683 = vpop.permute.xlu0 %2682
      %2686 = vset.pattern.permute.xlu0 0
      %2687 = vperm.xlu0 %2686, %v709
      %v2688 = vpop.permute.xlu0 %2687
      %2691 = vset.pattern.permute.xlu0 0
      %2692 = vperm.xlu0 %2691, %v710
      %v2693 = vpop.permute.xlu0 %2692
      %2696 = vset.pattern.permute.xlu0 0
      %2697 = vperm.xlu0 %2696, %v711
      %v2698 = vpop.permute.xlu0 %2697
      %2701 = vset.pattern.permute.xlu0 0
      %2702 = vperm.xlu0 %2701, %v712
      %v2703 = vpop.permute.xlu0 %2702
      %2706 = vset.pattern.permute.xlu0 0
      %2707 = vperm.xlu0 %2706, %v713
      %v2708 = vpop.permute.xlu0 %2707
      %2711 = vset.pattern.permute.xlu0 0
      %2712 = vperm.xlu0 %2711, %v714
      %v2713 = vpop.permute.xlu0 %2712
      %2716 = vset.pattern.permute.xlu0 0
      %2717 = vperm.xlu0 %2716, %v715
      %v2718 = vpop.permute.xlu0 %2717
      %2721 = vset.pattern.permute.xlu0 0
      %2722 = vperm.xlu0 %2721, %v716
      %v2723 = vpop.permute.xlu0 %2722
      %2726 = vset.pattern.permute.xlu0 0
      %2727 = vperm.xlu0 %2726, %v717
      %v2728 = vpop.permute.xlu0 %2727
      %2731 = vset.pattern.permute.xlu0 0
      %2732 = vperm.xlu0 %2731, %v718
      %v2733 = vpop.permute.xlu0 %2732
      %2736 = vset.pattern.permute.xlu0 0
      %2737 = vperm.xlu0 %2736, %v719
      %v2738 = vpop.permute.xlu0 %2737
      %2741 = vset.pattern.permute.xlu0 0
      %2742 = vperm.xlu0 %2741, %v720
      %v2743 = vpop.permute.xlu0 %2742
      %2746 = vset.pattern.permute.xlu0 0
      %2747 = vperm.xlu0 %2746, %v721
      %v2748 = vpop.permute.xlu0 %2747
      %2751 = vset.pattern.permute.xlu0 0
      %2752 = vperm.xlu0 %2751, %v722
      %v2753 = vpop.permute.xlu0 %2752
      %2756 = vset.pattern.permute.xlu0 0
      %2757 = vperm.xlu0 %2756, %v723
      %v2758 = vpop.permute.xlu0 %2757
      %2761 = vset.pattern.permute.xlu0 0
      %2762 = vperm.xlu0 %2761, %v724
      %v2763 = vpop.permute.xlu0 %2762
      %2766 = vset.pattern.permute.xlu0 0
      %2767 = vperm.xlu0 %2766, %v725
      %v2768 = vpop.permute.xlu0 %2767
      %2771 = vset.pattern.permute.xlu0 0
      %2772 = vperm.xlu0 %2771, %v726
      %v2773 = vpop.permute.xlu0 %2772
      %2776 = vset.pattern.permute.xlu0 0
      %2777 = vperm.xlu0 %2776, %v727
      %v2778 = vpop.permute.xlu0 %2777
      %2781 = vset.pattern.permute.xlu0 0
      %2782 = vperm.xlu0 %2781, %v728
      %v2783 = vpop.permute.xlu0 %2782
      %2786 = vset.pattern.permute.xlu0 0
      %2787 = vperm.xlu0 %2786, %v729
      %v2788 = vpop.permute.xlu0 %2787
      %2791 = vset.pattern.permute.xlu0 0
      %2792 = vperm.xlu0 %2791, %v730
      %v2793 = vpop.permute.xlu0 %2792
      %2796 = vset.pattern.permute.xlu0 0
      %2797 = vperm.xlu0 %2796, %v731
      %v2798 = vpop.permute.xlu0 %2797
      %2801 = vset.pattern.permute.xlu0 0
      %2802 = vperm.xlu0 %2801, %v732
      %v2803 = vpop.permute.xlu0 %2802
      %2806 = vset.pattern.permute.xlu0 0
      %2807 = vperm.xlu0 %2806, %v733
      %v2808 = vpop.permute.xlu0 %2807
      %2811 = vset.pattern.permute.xlu0 0
      %2812 = vperm.xlu0 %2811, %v734
      %v2813 = vpop.permute.xlu0 %2812
      %2816 = vset.pattern.permute.xlu0 0
      %2817 = vperm.xlu0 %2816, %v735
      %v2818 = vpop.permute.xlu0 %2817
      %2821 = vset.pattern.permute.xlu0 0
      %2822 = vperm.xlu0 %2821, %v736
      %v2823 = vpop.permute.xlu0 %2822
      %v2825 = vmul.f32 %v2668, %v2574
      %v2826 = vmul.f32 %v2673, %v2576
      %v2827 = vmul.f32 %v2678, %v2578
      %v2828 = vmul.f32 %v2683, %v2580
      %v2829 = vmul.f32 %v2688, %v2582
      %v2830 = vmul.f32 %v2693, %v2584
      %v2831 = vmul.f32 %v2698, %v2586
      %v2832 = vmul.f32 %v2703, %v2588
      %v2833 = vmul.f32 %v2708, %v2590
      %v2834 = vmul.f32 %v2713, %v2592
      %v2835 = vmul.f32 %v2718, %v2594
      %v2836 = vmul.f32 %v2723, %v2596
      %v2837 = vmul.f32 %v2728, %v2598
      %v2838 = vmul.f32 %v2733, %v2600
      %v2839 = vmul.f32 %v2738, %v2602
      %v2840 = vmul.f32 %v2743, %v2604
      %v2841 = vmul.f32 %v2748, %v2606
      %v2842 = vmul.f32 %v2753, %v2608
      %v2843 = vmul.f32 %v2758, %v2610
      %v2844 = vmul.f32 %v2763, %v2612
      %v2845 = vmul.f32 %v2768, %v2614
      %v2846 = vmul.f32 %v2773, %v2616
      %v2847 = vmul.f32 %v2778, %v2618
      %v2848 = vmul.f32 %v2783, %v2620
      %v2849 = vmul.f32 %v2788, %v2622
      %v2850 = vmul.f32 %v2793, %v2624
      %v2851 = vmul.f32 %v2798, %v2626
      %v2852 = vmul.f32 %v2803, %v2628
      %v2853 = vmul.f32 %v2808, %v2630
      %v2854 = vmul.f32 %v2813, %v2632
      %v2855 = vmul.f32 %v2818, %v2570
      %v2856 = vmul.f32 %v2823, %v2572
      %2889 = vrot.lane.b32.xlu0 %v2825, 8
      %v2890 = vpop.permute.xlu0 %2889
      %2891 = vrot.lane.b32.xlu0 %v2826, 8
      %v2892 = vpop.permute.xlu0 %2891
      %2893 = vrot.lane.b32.xlu0 %v2827, 8
      %v2894 = vpop.permute.xlu0 %2893
      %2895 = vrot.lane.b32.xlu0 %v2828, 8
      %v2896 = vpop.permute.xlu0 %2895
      %2897 = vrot.lane.b32.xlu0 %v2829, 8
      %v2898 = vpop.permute.xlu0 %2897
      %2899 = vrot.lane.b32.xlu0 %v2830, 8
      %v2900 = vpop.permute.xlu0 %2899
      %2901 = vrot.lane.b32.xlu0 %v2831, 8
      %v2902 = vpop.permute.xlu0 %2901
      %2903 = vrot.lane.b32.xlu0 %v2832, 8
      %v2904 = vpop.permute.xlu0 %2903
      %2905 = vrot.lane.b32.xlu0 %v2833, 8
      %v2906 = vpop.permute.xlu0 %2905
      %2907 = vrot.lane.b32.xlu0 %v2834, 8
      %v2908 = vpop.permute.xlu0 %2907
      %2909 = vrot.lane.b32.xlu0 %v2835, 8
      %v2910 = vpop.permute.xlu0 %2909
      %2911 = vrot.lane.b32.xlu0 %v2836, 8
      %v2912 = vpop.permute.xlu0 %2911
      %2913 = vrot.lane.b32.xlu0 %v2837, 8
      %v2914 = vpop.permute.xlu0 %2913
      %2915 = vrot.lane.b32.xlu0 %v2838, 8
      %v2916 = vpop.permute.xlu0 %2915
      %2917 = vrot.lane.b32.xlu0 %v2839, 8
      %v2918 = vpop.permute.xlu0 %2917
      %2919 = vrot.lane.b32.xlu0 %v2840, 8
      %v2920 = vpop.permute.xlu0 %2919
      %2921 = vrot.lane.b32.xlu0 %v2841, 8
      %v2922 = vpop.permute.xlu0 %2921
      %2923 = vrot.lane.b32.xlu0 %v2842, 8
      %v2924 = vpop.permute.xlu0 %2923
      %2925 = vrot.lane.b32.xlu0 %v2843, 8
      %v2926 = vpop.permute.xlu0 %2925
      %2927 = vrot.lane.b32.xlu0 %v2844, 8
      %v2928 = vpop.permute.xlu0 %2927
      %2929 = vrot.lane.b32.xlu0 %v2845, 8
      %v2930 = vpop.permute.xlu0 %2929
      %2931 = vrot.lane.b32.xlu0 %v2846, 8
      %v2932 = vpop.permute.xlu0 %2931
      %2933 = vrot.lane.b32.xlu0 %v2847, 8
      %v2934 = vpop.permute.xlu0 %2933
      %2935 = vrot.lane.b32.xlu0 %v2848, 8
      %v2936 = vpop.permute.xlu0 %2935
      %2937 = vrot.lane.b32.xlu0 %v2849, 8
      %v2938 = vpop.permute.xlu0 %2937
      %2939 = vrot.lane.b32.xlu0 %v2850, 8
      %v2940 = vpop.permute.xlu0 %2939
      %2941 = vrot.lane.b32.xlu0 %v2851, 8
      %v2942 = vpop.permute.xlu0 %2941
      %2943 = vrot.lane.b32.xlu0 %v2852, 8
      %v2944 = vpop.permute.xlu0 %2943
      %2945 = vrot.lane.b32.xlu0 %v2853, 8
      %v2946 = vpop.permute.xlu0 %2945
      %2947 = vrot.lane.b32.xlu0 %v2854, 8
      %v2948 = vpop.permute.xlu0 %2947
      %2949 = vrot.lane.b32.xlu0 %v2855, 8
      %v2950 = vpop.permute.xlu0 %2949
      %2951 = vrot.lane.b32.xlu0 %v2856, 8
      %v2952 = vpop.permute.xlu0 %2951
      %v2985 = vadd.f32 %v2505, %v2890
      %v2986 = vadd.f32 %v2506, %v2892
      %v2987 = vadd.f32 %v2507, %v2894
      %v2988 = vadd.f32 %v2508, %v2896
      %v2989 = vadd.f32 %v2509, %v2898
      %v2990 = vadd.f32 %v2510, %v2900
      %v2991 = vadd.f32 %v2511, %v2902
      %v2992 = vadd.f32 %v2512, %v2904
      %v2993 = vadd.f32 %v2513, %v2906
      %v2994 = vadd.f32 %v2514, %v2908
      %v2995 = vadd.f32 %v2515, %v2910
      %v2996 = vadd.f32 %v2516, %v2912
      %v2997 = vadd.f32 %v2517, %v2914
      %v2998 = vadd.f32 %v2518, %v2916
      %v2999 = vadd.f32 %v2519, %v2918
      %v3000 = vadd.f32 %v2520, %v2920
      %v3001 = vadd.f32 %v2521, %v2922
      %v3002 = vadd.f32 %v2522, %v2924
      %v3003 = vadd.f32 %v2523, %v2926
      %v3004 = vadd.f32 %v2524, %v2928
      %v3005 = vadd.f32 %v2525, %v2930
      %v3006 = vadd.f32 %v2526, %v2932
      %v3007 = vadd.f32 %v2527, %v2934
      %v3008 = vadd.f32 %v2528, %v2936
      %v3009 = vadd.f32 %v2529, %v2938
      %v3010 = vadd.f32 %v2530, %v2940
      %v3011 = vadd.f32 %v2531, %v2942
      %v3012 = vadd.f32 %v2532, %v2944
      %v3013 = vadd.f32 %v2533, %v2946
      %v3014 = vadd.f32 %v2534, %v2948
      %v3015 = vadd.f32 %v2535, %v2950
      %v3016 = vadd.f32 %v2536, %v2952
      %v3017 = vld [vmem:[%s13] sm:$0x1]
      %v3019 = vlaneseq
      %v3020 = vshrl.u32 %v3019, 7
      %v3021 = vsub.s32 0, %v3020
      %v3022 = vrot.slane %v3017, %v3021
      %3023 = vrot.lane.b32.xlu0 %v3022, 8
      %v3024 = vpop.permute.xlu0 %3023
      %v3026 = vadd.f32 %v2985, %v3024
      %v3027 = vadd.f32 %v2986, %v3024
      %v3028 = vadd.f32 %v2987, %v3024
      %v3029 = vadd.f32 %v2988, %v3024
      %v3030 = vadd.f32 %v2989, %v3024
      %v3031 = vadd.f32 %v2990, %v3024
      %v3032 = vadd.f32 %v2991, %v3024
      %v3033 = vadd.f32 %v2992, %v3024
      %v3034 = vadd.f32 %v2993, %v3024
      %v3035 = vadd.f32 %v2994, %v3024
      %v3036 = vadd.f32 %v2995, %v3024
      %v3037 = vadd.f32 %v2996, %v3024
      %v3038 = vadd.f32 %v2997, %v3024
      %v3039 = vadd.f32 %v2998, %v3024
      %v3040 = vadd.f32 %v2999, %v3024
      %v3041 = vadd.f32 %v3000, %v3024
      %v3042 = vadd.f32 %v3001, %v3024
      %v3043 = vadd.f32 %v3002, %v3024
      %v3044 = vadd.f32 %v3003, %v3024
      %v3045 = vadd.f32 %v3004, %v3024
      %v3046 = vadd.f32 %v3005, %v3024
      %v3047 = vadd.f32 %v3006, %v3024
      %v3048 = vadd.f32 %v3007, %v3024
      %v3049 = vadd.f32 %v3008, %v3024
      %v3050 = vadd.f32 %v3009, %v3024
      %v3051 = vadd.f32 %v3010, %v3024
      %v3052 = vadd.f32 %v3011, %v3024
      %v3053 = vadd.f32 %v3012, %v3024
      %v3054 = vadd.f32 %v3013, %v3024
      %v3055 = vadd.f32 %v3014, %v3024
      %v3056 = vadd.f32 %v3015, %v3024
      %v3057 = vadd.f32 %v3016, %v3024
      %v3058 = vmax.f32 %v3026, 0.0
      %v3059 = vmax.f32 %v3027, 0.0
      %v3060 = vmax.f32 %v3028, 0.0
      %v3061 = vmax.f32 %v3029, 0.0
      %v3062 = vmax.f32 %v3030, 0.0
      %v3063 = vmax.f32 %v3031, 0.0
      %v3064 = vmax.f32 %v3032, 0.0
      %v3065 = vmax.f32 %v3033, 0.0
      %v3066 = vmax.f32 %v3034, 0.0
      %v3067 = vmax.f32 %v3035, 0.0
      %v3068 = vmax.f32 %v3036, 0.0
      %v3069 = vmax.f32 %v3037, 0.0
      %v3070 = vmax.f32 %v3038, 0.0
      %v3071 = vmax.f32 %v3039, 0.0
      %v3072 = vmax.f32 %v3040, 0.0
      %v3073 = vmax.f32 %v3041, 0.0
      %v3074 = vmax.f32 %v3042, 0.0
      %v3075 = vmax.f32 %v3043, 0.0
      %v3076 = vmax.f32 %v3044, 0.0
      %v3077 = vmax.f32 %v3045, 0.0
      %v3078 = vmax.f32 %v3046, 0.0
      %v3079 = vmax.f32 %v3047, 0.0
      %v3080 = vmax.f32 %v3048, 0.0
      %v3081 = vmax.f32 %v3049, 0.0
      %v3082 = vmax.f32 %v3050, 0.0
      %v3083 = vmax.f32 %v3051, 0.0
      %v3084 = vmax.f32 %v3052, 0.0
      %v3085 = vmax.f32 %v3053, 0.0
      %v3086 = vmax.f32 %v3054, 0.0
      %v3087 = vmax.f32 %v3055, 0.0
      %v3088 = vmax.f32 %v3056, 0.0
      %v3089 = vmax.f32 %v3057, 0.0
      %v3090 = vpack.c.bf16 %v3059, %v3058
      %v3091 = vpack.c.bf16 %v3061, %v3060
      %v3092 = vpack.c.bf16 %v3063, %v3062
      %v3093 = vpack.c.bf16 %v3065, %v3064
      %v3094 = vpack.c.bf16 %v3067, %v3066
      %v3095 = vpack.c.bf16 %v3069, %v3068
      %v3096 = vpack.c.bf16 %v3071, %v3070
      %v3097 = vpack.c.bf16 %v3073, %v3072
      %v3098 = vpack.c.bf16 %v3075, %v3074
      %v3099 = vpack.c.bf16 %v3077, %v3076
      %v3100 = vpack.c.bf16 %v3079, %v3078
      %v3101 = vpack.c.bf16 %v3081, %v3080
      %v3102 = vpack.c.bf16 %v3083, %v3082
      %v3103 = vpack.c.bf16 %v3085, %v3084
      %v3104 = vpack.c.bf16 %v3087, %v3086
      %v3105 = vpack.c.bf16 %v3089, %v3088
      %v3106 = vld [vmem:[%s7] sm:$0xf]
      %v3107 = vld [vmem:[%s14] sm:$0x1]
      %v3109 = vlaneseq
      %v3110 = vshrl.u32 %v3109, 7
      %v3111 = vsub.s32 0, %v3110
      %v3112 = vrot.slane %v3107, %v3111
      %3130 = vrot.lane.b32.xlu0 %v3090, 120
      %v3131 = vpop.permute.xlu0 %3130
      %3132 = vrot.lane.b32.xlu0 %v3091, 120
      %v3133 = vpop.permute.xlu0 %3132
      %3134 = vrot.lane.b32.xlu0 %v3092, 120
      %v3135 = vpop.permute.xlu0 %3134
      %3136 = vrot.lane.b32.xlu0 %v3093, 120
      %v3137 = vpop.permute.xlu0 %3136
      %3138 = vrot.lane.b32.xlu0 %v3094, 120
      %v3139 = vpop.permute.xlu0 %3138
      %3140 = vrot.lane.b32.xlu0 %v3095, 120
      %v3141 = vpop.permute.xlu0 %3140
      %3142 = vrot.lane.b32.xlu0 %v3096, 120
      %v3143 = vpop.permute.xlu0 %3142
      %3144 = vrot.lane.b32.xlu0 %v3097, 120
      %v3145 = vpop.permute.xlu0 %3144
      %3146 = vrot.lane.b32.xlu0 %v3098, 120
      %v3147 = vpop.permute.xlu0 %3146
      %3148 = vrot.lane.b32.xlu0 %v3099, 120
      %v3149 = vpop.permute.xlu0 %3148
      %3150 = vrot.lane.b32.xlu0 %v3100, 120
      %v3151 = vpop.permute.xlu0 %3150
      %3152 = vrot.lane.b32.xlu0 %v3101, 120
      %v3153 = vpop.permute.xlu0 %3152
      %3154 = vrot.lane.b32.xlu0 %v3102, 120
      %v3155 = vpop.permute.xlu0 %3154
      %3156 = vrot.lane.b32.xlu0 %v3103, 120
      %v3157 = vpop.permute.xlu0 %3156
      %3158 = vrot.lane.b32.xlu0 %v3104, 120
      %v3159 = vpop.permute.xlu0 %3158
      %3160 = vrot.lane.b32.xlu0 %v3105, 120
      %v3161 = vpop.permute.xlu0 %3160
      %v3163 = vsel %vm1878, %v3131, 0
      %v3166 = vsel %vm1878, %v3133, 0
      %v3169 = vsel %vm1878, %v3135, 0
      %v3172 = vsel %vm1878, %v3137, 0
      %v3175 = vsel %vm1878, %v3139, 0
      %v3178 = vsel %vm1878, %v3141, 0
      %v3181 = vsel %vm1878, %v3143, 0
      %v3184 = vsel %vm1878, %v3145, 0
      %v3187 = vsel %vm1878, %v3147, 0
      %v3190 = vsel %vm1878, %v3149, 0
      %v3193 = vsel %vm1878, %v3151, 0
      %v3196 = vsel %vm1878, %v3153, 0
      %v3199 = vsel %vm1878, %v3155, 0
      %v3202 = vsel %vm1878, %v3157, 0
      %v3205 = vsel %vm1878, %v3159, 0
      %v3208 = vsel %vm1878, %v3161, 0
      %v3211 = vsel %vm2020, %v3106, 0
      %3213 = vmatprep.subr.bf16.mxu0 0
      %3214 = vmatpush1.bf16.msra.mxu0 0
      %3215 = vmatprep.subr.bf16.mxu0 0
      %3216 = vmatpush1.bf16.msra.mxu0 0
      %3217 = vmatprep.subr.bf16.mxu0 0
      %3218 = vmatpush1.bf16.msra.mxu0 0
      %3219 = vmatprep.subr.bf16.mxu0 0
      %3220 = vmatpush1.bf16.msra.mxu0 0
      %3221 = vmatprep.subr.bf16.mxu0 0
      %3222 = vmatpush1.bf16.msra.mxu0 0
      %3223 = vmatprep.subr.bf16.mxu0 0
      %3224 = vmatpush1.bf16.msra.mxu0 0
      %3225 = vmatprep.subr.bf16.mxu0 0
      %3226 = vmatpush1.bf16.msra.mxu0 0
      %3227 = vmatprep.subr.bf16.mxu0 0
      %3228 = vmatpush1.bf16.msra.mxu0 %v3211
      %3229 = vmatprep.subr.bf16.mxu0 0
      %3230 = vmatpush2.bf16.msra.mxu0 0
      %3231 = vmatprep.subr.bf16.mxu0 0
      %3232 = vmatpush2.bf16.msra.mxu0 0
      %3233 = vmatprep.subr.bf16.mxu0 0
      %3234 = vmatpush2.bf16.msra.mxu0 0
      %3235 = vmatprep.subr.bf16.mxu0 0
      %3236 = vmatpush2.bf16.msra.mxu0 0
      %3237 = vmatprep.subr.bf16.mxu0 0
      %3238 = vmatpush2.bf16.msra.mxu0 0
      %3239 = vmatprep.subr.bf16.mxu0 0
      %3240 = vmatpush2.bf16.msra.mxu0 0
      %3241 = vmatprep.subr.bf16.mxu0 0
      %3242 = vmatpush2.bf16.msra.mxu0 0
      %3243 = vmatprep.subr.bf16.mxu0 0
      %3244 = vmatpush2.bf16.msra.mxu0 0
      %3245 = vmatprep.mubr.bf16.mxu0 0
      %3246 = vmatmul.mubr.bf16.gmra.mxu0 %v3163
      %v3247 = vpop.f32.mrf.mxu0
      %v3248 = vadd.f32 %v3112, %v3247
      %v3249 = vpop.f32.mrf.mxu0
      %v3250 = vpop.f32.mrf.mxu0
      %v3251 = vadd.f32 %v3112, %v3250
      %v3252 = vpop.f32.mrf.mxu0
      %3253 = vmatprep.mubr.bf16.mxu0 0
      %3254 = vmatmul.mubr.bf16.gmra.mxu0 %v3166
      %v3255 = vpop.f32.mrf.mxu0
      %v3256 = vadd.f32 %v3112, %v3255
      %v3257 = vpop.f32.mrf.mxu0
      %v3258 = vpop.f32.mrf.mxu0
      %v3259 = vadd.f32 %v3112, %v3258
      %v3260 = vpop.f32.mrf.mxu0
      %3261 = vmatprep.mubr.bf16.mxu0 0
      %3262 = vmatmul.mubr.bf16.gmra.mxu0 %v3169
      %v3263 = vpop.f32.mrf.mxu0
      %v3264 = vadd.f32 %v3112, %v3263
      %v3265 = vpop.f32.mrf.mxu0
      %v3266 = vpop.f32.mrf.mxu0
      %v3267 = vadd.f32 %v3112, %v3266
      %v3268 = vpop.f32.mrf.mxu0
      %3269 = vmatprep.mubr.bf16.mxu0 0
      %3270 = vmatmul.mubr.bf16.gmra.mxu0 %v3172
      %v3271 = vpop.f32.mrf.mxu0
      %v3272 = vadd.f32 %v3112, %v3271
      %v3273 = vpop.f32.mrf.mxu0
      %v3274 = vpop.f32.mrf.mxu0
      %v3275 = vadd.f32 %v3112, %v3274
      %v3276 = vpop.f32.mrf.mxu0
      %3277 = vmatprep.mubr.bf16.mxu0 0
      %3278 = vmatmul.mubr.bf16.gmra.mxu0 %v3175
      %v3279 = vpop.f32.mrf.mxu0
      %v3280 = vadd.f32 %v3112, %v3279
      %v3281 = vpop.f32.mrf.mxu0
      %v3282 = vpop.f32.mrf.mxu0
      %v3283 = vadd.f32 %v3112, %v3282
      %v3284 = vpop.f32.mrf.mxu0
      %3285 = vmatprep.mubr.bf16.mxu0 0
      %3286 = vmatmul.mubr.bf16.gmra.mxu0 %v3178
      %v3287 = vpop.f32.mrf.mxu0
      %v3288 = vadd.f32 %v3112, %v3287
      %v3289 = vpop.f32.mrf.mxu0
      %v3290 = vpop.f32.mrf.mxu0
      %v3291 = vadd.f32 %v3112, %v3290
      %v3292 = vpop.f32.mrf.mxu0
      %3293 = vmatprep.mubr.bf16.mxu0 0
      %3294 = vmatmul.mubr.bf16.gmra.mxu0 %v3181
      %v3295 = vpop.f32.mrf.mxu0
      %v3296 = vadd.f32 %v3112, %v3295
      %v3297 = vpop.f32.mrf.mxu0
      %v3298 = vpop.f32.mrf.mxu0
      %v3299 = vadd.f32 %v3112, %v3298
      %v3300 = vpop.f32.mrf.mxu0
      %3301 = vmatprep.mubr.bf16.mxu0 0
      %3302 = vmatmul.mubr.bf16.gmra.mxu0 %v3184
      %v3303 = vpop.f32.mrf.mxu0
      %v3304 = vadd.f32 %v3112, %v3303
      %v3305 = vpop.f32.mrf.mxu0
      %v3306 = vpop.f32.mrf.mxu0
      %v3307 = vadd.f32 %v3112, %v3306
      %v3308 = vpop.f32.mrf.mxu0
      %3309 = vmatprep.mubr.bf16.mxu0 0
      %3310 = vmatmul.mubr.bf16.gmra.mxu0 %v3187
      %v3311 = vpop.f32.mrf.mxu0
      %v3312 = vadd.f32 %v3112, %v3311
      %v3313 = vpop.f32.mrf.mxu0
      %v3314 = vpop.f32.mrf.mxu0
      %v3315 = vadd.f32 %v3112, %v3314
      %v3316 = vpop.f32.mrf.mxu0
      %3317 = vmatprep.mubr.bf16.mxu0 0
      %3318 = vmatmul.mubr.bf16.gmra.mxu0 %v3190
      %v3319 = vpop.f32.mrf.mxu0
      %v3320 = vadd.f32 %v3112, %v3319
      %v3321 = vpop.f32.mrf.mxu0
      %v3322 = vpop.f32.mrf.mxu0
      %v3323 = vadd.f32 %v3112, %v3322
      %v3324 = vpop.f32.mrf.mxu0
      %3325 = vmatprep.mubr.bf16.mxu0 0
      %3326 = vmatmul.mubr.bf16.gmra.mxu0 %v3193
      %v3327 = vpop.f32.mrf.mxu0
      %v3328 = vadd.f32 %v3112, %v3327
      %v3329 = vpop.f32.mrf.mxu0
      %v3330 = vpop.f32.mrf.mxu0
      %v3331 = vadd.f32 %v3112, %v3330
      %v3332 = vpop.f32.mrf.mxu0
      %3333 = vmatprep.mubr.bf16.mxu0 0
      %3334 = vmatmul.mubr.bf16.gmra.mxu0 %v3196
      %v3335 = vpop.f32.mrf.mxu0
      %v3336 = vadd.f32 %v3112, %v3335
      %v3337 = vpop.f32.mrf.mxu0
      %v3338 = vpop.f32.mrf.mxu0
      %v3339 = vadd.f32 %v3112, %v3338
      %v3340 = vpop.f32.mrf.mxu0
      %3341 = vmatprep.mubr.bf16.mxu0 0
      %3342 = vmatmul.mubr.bf16.gmra.mxu0 %v3199
      %v3343 = vpop.f32.mrf.mxu0
      %v3344 = vadd.f32 %v3112, %v3343
      %v3345 = vpop.f32.mrf.mxu0
      %v3346 = vpop.f32.mrf.mxu0
      %v3347 = vadd.f32 %v3112, %v3346
      %v3348 = vpop.f32.mrf.mxu0
      %3349 = vmatprep.mubr.bf16.mxu0 0
      %3350 = vmatmul.mubr.bf16.gmra.mxu0 %v3202
      %v3351 = vpop.f32.mrf.mxu0
      %v3352 = vadd.f32 %v3112, %v3351
      %v3353 = vpop.f32.mrf.mxu0
      %v3354 = vpop.f32.mrf.mxu0
      %v3355 = vadd.f32 %v3112, %v3354
      %v3356 = vpop.f32.mrf.mxu0
      %3357 = vmatprep.mubr.bf16.mxu0 0
      %3358 = vmatmul.mubr.bf16.gmra.mxu0 %v3205
      %v3359 = vpop.f32.mrf.mxu0
      %v3360 = vadd.f32 %v3112, %v3359
      %v3361 = vpop.f32.mrf.mxu0
      %v3362 = vpop.f32.mrf.mxu0
      %v3363 = vadd.f32 %v3112, %v3362
      %v3364 = vpop.f32.mrf.mxu0
      %3365 = vmatprep.mubr.bf16.mxu0 0
      %3366 = vmatmul.mubr.bf16.gmra.mxu0 %v3208
      %v3367 = vpop.f32.mrf.mxu0
      %v3368 = vadd.f32 %v3112, %v3367
      %v3369 = vpop.f32.mrf.mxu0
      %v3370 = vpop.f32.mrf.mxu0
      %v3371 = vadd.f32 %v3112, %v3370
      %v3372 = vpop.f32.mrf.mxu0
      %3373 = vdwg.mxu0
      %3406 = vrot.lane.b32.xlu0 %v948, 120
      %v3407 = vpop.permute.xlu0 %3406
      %3408 = vrot.lane.b32.xlu0 %v951, 120
      %v3409 = vpop.permute.xlu0 %3408
      %3410 = vrot.lane.b32.xlu0 %v956, 120
      %v3411 = vpop.permute.xlu0 %3410
      %3412 = vrot.lane.b32.xlu0 %v959, 120
      %v3413 = vpop.permute.xlu0 %3412
      %3414 = vrot.lane.b32.xlu0 %v964, 120
      %v3415 = vpop.permute.xlu0 %3414
      %3416 = vrot.lane.b32.xlu0 %v967, 120
      %v3417 = vpop.permute.xlu0 %3416
      %3418 = vrot.lane.b32.xlu0 %v972, 120
      %v3419 = vpop.permute.xlu0 %3418
      %3420 = vrot.lane.b32.xlu0 %v975, 120
      %v3421 = vpop.permute.xlu0 %3420
      %3422 = vrot.lane.b32.xlu0 %v980, 120
      %v3423 = vpop.permute.xlu0 %3422
      %3424 = vrot.lane.b32.xlu0 %v983, 120
      %v3425 = vpop.permute.xlu0 %3424
      %3426 = vrot.lane.b32.xlu0 %v988, 120
      %v3427 = vpop.permute.xlu0 %3426
      %3428 = vrot.lane.b32.xlu0 %v991, 120
      %v3429 = vpop.permute.xlu0 %3428
      %3430 = vrot.lane.b32.xlu0 %v996, 120
      %v3431 = vpop.permute.xlu0 %3430
      %3432 = vrot.lane.b32.xlu0 %v999, 120
      %v3433 = vpop.permute.xlu0 %3432
      %3434 = vrot.lane.b32.xlu0 %v1004, 120
      %v3435 = vpop.permute.xlu0 %3434
      %3436 = vrot.lane.b32.xlu0 %v1007, 120
      %v3437 = vpop.permute.xlu0 %3436
      %3438 = vrot.lane.b32.xlu0 %v1012, 120
      %v3439 = vpop.permute.xlu0 %3438
      %3440 = vrot.lane.b32.xlu0 %v1015, 120
      %v3441 = vpop.permute.xlu0 %3440
      %3442 = vrot.lane.b32.xlu0 %v1020, 120
      %v3443 = vpop.permute.xlu0 %3442
      %3444 = vrot.lane.b32.xlu0 %v1023, 120
      %v3445 = vpop.permute.xlu0 %3444
      %3446 = vrot.lane.b32.xlu0 %v1028, 120
      %v3447 = vpop.permute.xlu0 %3446
      %3448 = vrot.lane.b32.xlu0 %v1031, 120
      %v3449 = vpop.permute.xlu0 %3448
      %3450 = vrot.lane.b32.xlu0 %v1036, 120
      %v3451 = vpop.permute.xlu0 %3450
      %3452 = vrot.lane.b32.xlu0 %v1039, 120
      %v3453 = vpop.permute.xlu0 %3452
      %3454 = vrot.lane.b32.xlu0 %v1044, 120
      %v3455 = vpop.permute.xlu0 %3454
      %3456 = vrot.lane.b32.xlu0 %v1047, 120
      %v3457 = vpop.permute.xlu0 %3456
      %3458 = vrot.lane.b32.xlu0 %v1052, 120
      %v3459 = vpop.permute.xlu0 %3458
      %3460 = vrot.lane.b32.xlu0 %v1055, 120
      %v3461 = vpop.permute.xlu0 %3460
      %3462 = vrot.lane.b32.xlu0 %v1060, 120
      %v3463 = vpop.permute.xlu0 %3462
      %3464 = vrot.lane.b32.xlu0 %v1063, 120
      %v3465 = vpop.permute.xlu0 %3464
      %3466 = vrot.lane.b32.xlu0 %v1068, 120
      %v3467 = vpop.permute.xlu0 %3466
      %3468 = vrot.lane.b32.xlu0 %v1071, 120
      %v3469 = vpop.permute.xlu0 %3468
      %v3502 = vadd.f32 %v3248, %v3407
      %v3503 = vadd.f32 %v3251, %v3409
      %v3504 = vadd.f32 %v3256, %v3411
      %v3505 = vadd.f32 %v3259, %v3413
      %v3506 = vadd.f32 %v3264, %v3415
      %v3507 = vadd.f32 %v3267, %v3417
      %v3508 = vadd.f32 %v3272, %v3419
      %v3509 = vadd.f32 %v3275, %v3421
      %v3510 = vadd.f32 %v3280, %v3423
      %v3511 = vadd.f32 %v3283, %v3425
      %v3512 = vadd.f32 %v3288, %v3427
      %v3513 = vadd.f32 %v3291, %v3429
      %v3514 = vadd.f32 %v3296, %v3431
      %v3515 = vadd.f32 %v3299, %v3433
      %v3516 = vadd.f32 %v3304, %v3435
      %v3517 = vadd.f32 %v3307, %v3437
      %v3518 = vadd.f32 %v3312, %v3439
      %v3519 = vadd.f32 %v3315, %v3441
      %v3520 = vadd.f32 %v3320, %v3443
      %v3521 = vadd.f32 %v3323, %v3445
      %v3522 = vadd.f32 %v3328, %v3447
      %v3523 = vadd.f32 %v3331, %v3449
      %v3524 = vadd.f32 %v3336, %v3451
      %v3525 = vadd.f32 %v3339, %v3453
      %v3526 = vadd.f32 %v3344, %v3455
      %v3527 = vadd.f32 %v3347, %v3457
      %v3528 = vadd.f32 %v3352, %v3459
      %v3529 = vadd.f32 %v3355, %v3461
      %v3530 = vadd.f32 %v3360, %v3463
      %v3531 = vadd.f32 %v3363, %v3465
      %v3532 = vadd.f32 %v3368, %v3467
      %v3533 = vadd.f32 %v3371, %v3469
      %v3534 = vmax.f32 %v3502, 0.0
      %v3535 = vmax.f32 %v3503, 0.0
      %v3536 = vmax.f32 %v3504, 0.0
      %v3537 = vmax.f32 %v3505, 0.0
      %v3538 = vmax.f32 %v3506, 0.0
      %v3539 = vmax.f32 %v3507, 0.0
      %v3540 = vmax.f32 %v3508, 0.0
      %v3541 = vmax.f32 %v3509, 0.0
      %v3542 = vmax.f32 %v3510, 0.0
      %v3543 = vmax.f32 %v3511, 0.0
      %v3544 = vmax.f32 %v3512, 0.0
      %v3545 = vmax.f32 %v3513, 0.0
      %v3546 = vmax.f32 %v3514, 0.0
      %v3547 = vmax.f32 %v3515, 0.0
      %v3548 = vmax.f32 %v3516, 0.0
      %v3549 = vmax.f32 %v3517, 0.0
      %v3550 = vmax.f32 %v3518, 0.0
      %v3551 = vmax.f32 %v3519, 0.0
      %v3552 = vmax.f32 %v3520, 0.0
      %v3553 = vmax.f32 %v3521, 0.0
      %v3554 = vmax.f32 %v3522, 0.0
      %v3555 = vmax.f32 %v3523, 0.0
      %v3556 = vmax.f32 %v3524, 0.0
      %v3557 = vmax.f32 %v3525, 0.0
      %v3558 = vmax.f32 %v3526, 0.0
      %v3559 = vmax.f32 %v3527, 0.0
      %v3560 = vmax.f32 %v3528, 0.0
      %v3561 = vmax.f32 %v3529, 0.0
      %v3562 = vmax.f32 %v3530, 0.0
      %v3563 = vmax.f32 %v3531, 0.0
      %v3564 = vmax.f32 %v3532, 0.0
      %v3565 = vmax.f32 %v3533, 0.0
      %v3566 = vpack.c.bf16 %v3535, %v3534
      %v3567 = vpack.c.bf16 %v3537, %v3536
      %v3568 = vpack.c.bf16 %v3539, %v3538
      %v3569 = vpack.c.bf16 %v3541, %v3540
      %v3570 = vpack.c.bf16 %v3543, %v3542
      %v3571 = vpack.c.bf16 %v3545, %v3544
      %v3572 = vpack.c.bf16 %v3547, %v3546
      %v3573 = vpack.c.bf16 %v3549, %v3548
      %v3574 = vpack.c.bf16 %v3551, %v3550
      %v3575 = vpack.c.bf16 %v3553, %v3552
      %v3576 = vpack.c.bf16 %v3555, %v3554
      %v3577 = vpack.c.bf16 %v3557, %v3556
      %v3578 = vpack.c.bf16 %v3559, %v3558
      %v3579 = vpack.c.bf16 %v3561, %v3560
      %v3580 = vpack.c.bf16 %v3563, %v3562
      %v3581 = vpack.c.bf16 %v3565, %v3564
      %v3582 = vld [vmem:[%s8] sm:$0xf]
      %v3583 = vld [vmem:[%s8 + $0x4] sm:$0xf]
      %v3584 = vld [vmem:[%s8 + $0x8] sm:$0xf]
      %v3585 = vld [vmem:[%s8 + $0xc] sm:$0xf]
      %v3586 = vld [vmem:[%s15] sm:$0x1]
      %v3588 = vlaneseq
      %v3589 = vshrl.u32 %v3588, 7
      %v3590 = vsub.s32 0, %v3589
      %v3591 = vrot.slane %v3586, %v3590
      %v3597 = vunpack.c.l.b16 %v3582
      %v3598 = vunpack.c.l.b16 %v3583
      %v3599 = vunpack.c.l.b16 %v3584
      %v3600 = vunpack.c.l.b16 %v3585
      %v3601 = vpack.c.b16 %v3598, %v3597
      %v3602 = vpack.c.b16 %v3600, %v3599
      %vm3605 = vcmask 261120
      %v3607 = vsel %vm3605, %v3566, 0
      %v3610 = vsel %vm3605, %v3567, 0
      %v3613 = vsel %vm3605, %v3568, 0
      %v3616 = vsel %vm3605, %v3569, 0
      %v3619 = vsel %vm3605, %v3570, 0
      %v3622 = vsel %vm3605, %v3571, 0
      %v3625 = vsel %vm3605, %v3572, 0
      %v3628 = vsel %vm3605, %v3573, 0
      %v3631 = vsel %vm3605, %v3574, 0
      %v3634 = vsel %vm3605, %v3575, 0
      %v3637 = vsel %vm3605, %v3576, 0
      %v3640 = vsel %vm3605, %v3577, 0
      %v3643 = vsel %vm3605, %v3578, 0
      %v3646 = vsel %vm3605, %v3579, 0
      %v3649 = vsel %vm3605, %v3580, 0
      %v3652 = vsel %vm3605, %v3581, 0
      %3654 = vmatprep.subr.bf16.mxu0 0
      %3655 = vmatpush1.bf16.msra.mxu0 0
      %3656 = vmatprep.subr.bf16.mxu0 0
      %3657 = vmatpush1.bf16.msra.mxu0 0
      %3658 = vmatprep.subr.bf16.mxu0 0
      %3659 = vmatpush1.bf16.msra.mxu0 0
      %3660 = vmatprep.subr.bf16.mxu0 0
      %3661 = vmatpush1.bf16.msra.mxu0 0
      %3662 = vmatprep.subr.bf16.mxu0 0
      %3663 = vmatpush1.bf16.msra.mxu0 0
      %3664 = vmatprep.subr.bf16.mxu0 0
      %3665 = vmatpush1.bf16.msra.mxu0 0
      %3666 = vmatprep.subr.bf16.mxu0 0
      %3667 = vmatpush1.bf16.msra.mxu0 %v3602
      %3668 = vmatprep.subr.bf16.mxu0 0
      %3669 = vmatpush1.bf16.msra.mxu0 %v3601
      %3670 = vmatprep.subr.bf16.mxu0 0
      %3671 = vmatpush2.bf16.msra.mxu0 0
      %3672 = vmatprep.subr.bf16.mxu0 0
      %3673 = vmatpush2.bf16.msra.mxu0 0
      %3674 = vmatprep.subr.bf16.mxu0 0
      %3675 = vmatpush2.bf16.msra.mxu0 0
      %3676 = vmatprep.subr.bf16.mxu0 0
      %3677 = vmatpush2.bf16.msra.mxu0 0
      %3678 = vmatprep.subr.bf16.mxu0 0
      %3679 = vmatpush2.bf16.msra.mxu0 0
      %3680 = vmatprep.subr.bf16.mxu0 0
      %3681 = vmatpush2.bf16.msra.mxu0 0
      %3682 = vmatprep.subr.bf16.mxu0 0
      %3683 = vmatpush2.bf16.msra.mxu0 0
      %3684 = vmatprep.subr.bf16.mxu0 0
      %3685 = vmatpush2.bf16.msra.mxu0 0
      %3686 = vmatprep.mubr.bf16.mxu0 0
      %3687 = vmatmul.mubr.bf16.gmra.mxu0 %v3607
      %v3688 = vpop.f32.mrf.mxu0
      %v3689 = vadd.f32 %v3591, %v3688
      %v3690 = vpop.f32.mrf.mxu0
      %v3691 = vpop.f32.mrf.mxu0
      %v3692 = vadd.f32 %v3591, %v3691
      %v3693 = vpop.f32.mrf.mxu0
      %3694 = vmatprep.mubr.bf16.mxu0 0
      %3695 = vmatmul.mubr.bf16.gmra.mxu0 %v3610
      %v3696 = vpop.f32.mrf.mxu0
      %v3697 = vadd.f32 %v3591, %v3696
      %v3698 = vpop.f32.mrf.mxu0
      %v3699 = vpop.f32.mrf.mxu0
      %v3700 = vadd.f32 %v3591, %v3699
      %v3701 = vpop.f32.mrf.mxu0
      %3702 = vmatprep.mubr.bf16.mxu0 0
      %3703 = vmatmul.mubr.bf16.gmra.mxu0 %v3613
      %v3704 = vpop.f32.mrf.mxu0
      %v3705 = vadd.f32 %v3591, %v3704
      %v3706 = vpop.f32.mrf.mxu0
      %v3707 = vpop.f32.mrf.mxu0
      %v3708 = vadd.f32 %v3591, %v3707
      %v3709 = vpop.f32.mrf.mxu0
      %3710 = vmatprep.mubr.bf16.mxu0 0
      %3711 = vmatmul.mubr.bf16.gmra.mxu0 %v3616
      %v3712 = vpop.f32.mrf.mxu0
      %v3713 = vadd.f32 %v3591, %v3712
      %v3714 = vpop.f32.mrf.mxu0
      %v3715 = vpop.f32.mrf.mxu0
      %v3716 = vadd.f32 %v3591, %v3715
      %v3717 = vpop.f32.mrf.mxu0
      %3718 = vmatprep.mubr.bf16.mxu0 0
      %3719 = vmatmul.mubr.bf16.gmra.mxu0 %v3619
      %v3720 = vpop.f32.mrf.mxu0
      %v3721 = vadd.f32 %v3591, %v3720
      %v3722 = vpop.f32.mrf.mxu0
      %v3723 = vpop.f32.mrf.mxu0
      %v3724 = vadd.f32 %v3591, %v3723
      %v3725 = vpop.f32.mrf.mxu0
      %3726 = vmatprep.mubr.bf16.mxu0 0
      %3727 = vmatmul.mubr.bf16.gmra.mxu0 %v3622
      %v3728 = vpop.f32.mrf.mxu0
      %v3729 = vadd.f32 %v3591, %v3728
      %v3730 = vpop.f32.mrf.mxu0
      %v3731 = vpop.f32.mrf.mxu0
      %v3732 = vadd.f32 %v3591, %v3731
      %v3733 = vpop.f32.mrf.mxu0
      %3734 = vmatprep.mubr.bf16.mxu0 0
      %3735 = vmatmul.mubr.bf16.gmra.mxu0 %v3625
      %v3736 = vpop.f32.mrf.mxu0
      %v3737 = vadd.f32 %v3591, %v3736
      %v3738 = vpop.f32.mrf.mxu0
      %v3739 = vpop.f32.mrf.mxu0
      %v3740 = vadd.f32 %v3591, %v3739
      %v3741 = vpop.f32.mrf.mxu0
      %3742 = vmatprep.mubr.bf16.mxu0 0
      %3743 = vmatmul.mubr.bf16.gmra.mxu0 %v3628
      %v3744 = vpop.f32.mrf.mxu0
      %v3745 = vadd.f32 %v3591, %v3744
      %v3746 = vpop.f32.mrf.mxu0
      %v3747 = vpop.f32.mrf.mxu0
      %v3748 = vadd.f32 %v3591, %v3747
      %v3749 = vpop.f32.mrf.mxu0
      %3750 = vmatprep.mubr.bf16.mxu0 0
      %3751 = vmatmul.mubr.bf16.gmra.mxu0 %v3631
      %v3752 = vpop.f32.mrf.mxu0
      %v3753 = vadd.f32 %v3591, %v3752
      %v3754 = vpop.f32.mrf.mxu0
      %v3755 = vpop.f32.mrf.mxu0
      %v3756 = vadd.f32 %v3591, %v3755
      %v3757 = vpop.f32.mrf.mxu0
      %3758 = vmatprep.mubr.bf16.mxu0 0
      %3759 = vmatmul.mubr.bf16.gmra.mxu0 %v3634
      %v3760 = vpop.f32.mrf.mxu0
      %v3761 = vadd.f32 %v3591, %v3760
      %v3762 = vpop.f32.mrf.mxu0
      %v3763 = vpop.f32.mrf.mxu0
      %v3764 = vadd.f32 %v3591, %v3763
      %v3765 = vpop.f32.mrf.mxu0
      %3766 = vmatprep.mubr.bf16.mxu0 0
      %3767 = vmatmul.mubr.bf16.gmra.mxu0 %v3637
      %v3768 = vpop.f32.mrf.mxu0
      %v3769 = vadd.f32 %v3591, %v3768
      %v3770 = vpop.f32.mrf.mxu0
      %v3771 = vpop.f32.mrf.mxu0
      %v3772 = vadd.f32 %v3591, %v3771
      %v3773 = vpop.f32.mrf.mxu0
      %3774 = vmatprep.mubr.bf16.mxu0 0
      %3775 = vmatmul.mubr.bf16.gmra.mxu0 %v3640
      %v3776 = vpop.f32.mrf.mxu0
      %v3777 = vadd.f32 %v3591, %v3776
      %v3778 = vpop.f32.mrf.mxu0
      %v3779 = vpop.f32.mrf.mxu0
      %v3780 = vadd.f32 %v3591, %v3779
      %v3781 = vpop.f32.mrf.mxu0
      %3782 = vmatprep.mubr.bf16.mxu0 0
      %3783 = vmatmul.mubr.bf16.gmra.mxu0 %v3643
      %v3784 = vpop.f32.mrf.mxu0
      %v3785 = vadd.f32 %v3591, %v3784
      %v3786 = vpop.f32.mrf.mxu0
      %v3787 = vpop.f32.mrf.mxu0
      %v3788 = vadd.f32 %v3591, %v3787
      %v3789 = vpop.f32.mrf.mxu0
      %3790 = vmatprep.mubr.bf16.mxu0 0
      %3791 = vmatmul.mubr.bf16.gmra.mxu0 %v3646
      %v3792 = vpop.f32.mrf.mxu0
      %v3793 = vadd.f32 %v3591, %v3792
      %v3794 = vpop.f32.mrf.mxu0
      %v3795 = vpop.f32.mrf.mxu0
      %v3796 = vadd.f32 %v3591, %v3795
      %v3797 = vpop.f32.mrf.mxu0
      %3798 = vmatprep.mubr.bf16.mxu0 0
      %3799 = vmatmul.mubr.bf16.gmra.mxu0 %v3649
      %v3800 = vpop.f32.mrf.mxu0
      %v3801 = vadd.f32 %v3591, %v3800
      %v3802 = vpop.f32.mrf.mxu0
      %v3803 = vpop.f32.mrf.mxu0
      %v3804 = vadd.f32 %v3591, %v3803
      %v3805 = vpop.f32.mrf.mxu0
      %3806 = vmatprep.mubr.bf16.mxu0 0
      %3807 = vmatmul.mubr.bf16.gmra.mxu0 %v3652
      %v3808 = vpop.f32.mrf.mxu0
      %v3809 = vadd.f32 %v3591, %v3808
      %v3810 = vpop.f32.mrf.mxu0
      %v3811 = vpop.f32.mrf.mxu0
      %v3812 = vadd.f32 %v3591, %v3811
      %v3813 = vpop.f32.mrf.mxu0
      %3814 = vdwg.mxu0
      %v3815 = vmax.f32 %v3689, 0.0
      %v3816 = vmax.f32 %v3692, 0.0
      %v3817 = vmax.f32 %v3697, 0.0
      %v3818 = vmax.f32 %v3700, 0.0
      %v3819 = vmax.f32 %v3705, 0.0
      %v3820 = vmax.f32 %v3708, 0.0
      %v3821 = vmax.f32 %v3713, 0.0
      %v3822 = vmax.f32 %v3716, 0.0
      %v3823 = vmax.f32 %v3721, 0.0
      %v3824 = vmax.f32 %v3724, 0.0
      %v3825 = vmax.f32 %v3729, 0.0
      %v3826 = vmax.f32 %v3732, 0.0
      %v3827 = vmax.f32 %v3737, 0.0
      %v3828 = vmax.f32 %v3740, 0.0
      %v3829 = vmax.f32 %v3745, 0.0
      %v3830 = vmax.f32 %v3748, 0.0
      %v3831 = vmax.f32 %v3753, 0.0
      %v3832 = vmax.f32 %v3756, 0.0
      %v3833 = vmax.f32 %v3761, 0.0
      %v3834 = vmax.f32 %v3764, 0.0
      %v3835 = vmax.f32 %v3769, 0.0
      %v3836 = vmax.f32 %v3772, 0.0
      %v3837 = vmax.f32 %v3777, 0.0
      %v3838 = vmax.f32 %v3780, 0.0
      %v3839 = vmax.f32 %v3785, 0.0
      %v3840 = vmax.f32 %v3788, 0.0
      %v3841 = vmax.f32 %v3793, 0.0
      %v3842 = vmax.f32 %v3796, 0.0
      %v3843 = vmax.f32 %v3801, 0.0
      %v3844 = vmax.f32 %v3804, 0.0
      %v3845 = vmax.f32 %v3809, 0.0
      %v3846 = vmax.f32 %v3812, 0.0
      %v3847 = vrot.slane %v3815, 7
      %v3848 = vrot.slane %v3816, 7
      %v3849 = vrot.slane %v3817, 7
      %v3850 = vrot.slane %v3818, 7
      %v3851 = vrot.slane %v3819, 7
      %v3852 = vrot.slane %v3820, 7
      %v3853 = vrot.slane %v3821, 7
      %v3854 = vrot.slane %v3822, 7
      %v3855 = vrot.slane %v3823, 7
      %v3856 = vrot.slane %v3824, 7
      %v3857 = vrot.slane %v3825, 7
      %v3858 = vrot.slane %v3826, 7
      %v3859 = vrot.slane %v3827, 7
      %v3860 = vrot.slane %v3828, 7
      %v3861 = vrot.slane %v3829, 7
      %v3862 = vrot.slane %v3830, 7
      %v3863 = vrot.slane %v3831, 7
      %v3864 = vrot.slane %v3832, 7
      %v3865 = vrot.slane %v3833, 7
      %v3866 = vrot.slane %v3834, 7
      %v3867 = vrot.slane %v3835, 7
      %v3868 = vrot.slane %v3836, 7
      %v3869 = vrot.slane %v3837, 7
      %v3870 = vrot.slane %v3838, 7
      %v3871 = vrot.slane %v3839, 7
      %v3872 = vrot.slane %v3840, 7
      %v3873 = vrot.slane %v3841, 7
      %v3874 = vrot.slane %v3842, 7
      %v3875 = vrot.slane %v3843, 7
      %v3876 = vrot.slane %v3844, 7
      %v3877 = vrot.slane %v3845, 7
      %v3878 = vrot.slane %v3846, 7
      %v3879 = vsel %vm1140, %v3877, %v3878
      %v3880 = vsel %vm1140, %v3876, %v3877
      %v3881 = vsel %vm1140, %v3875, %v3876
      %v3882 = vsel %vm1140, %v3874, %v3875
      %v3883 = vsel %vm1140, %v3873, %v3874
      %v3884 = vsel %vm1140, %v3872, %v3873
      %v3885 = vsel %vm1140, %v3871, %v3872
      %v3886 = vsel %vm1140, %v3870, %v3871
      %v3887 = vsel %vm1140, %v3869, %v3870
      %v3888 = vsel %vm1140, %v3868, %v3869
      %v3889 = vsel %vm1140, %v3867, %v3868
      %v3890 = vsel %vm1140, %v3866, %v3867
      %v3891 = vsel %vm1140, %v3865, %v3866
      %v3892 = vsel %vm1140, %v3864, %v3865
      %v3893 = vsel %vm1140, %v3863, %v3864
      %v3894 = vsel %vm1140, %v3862, %v3863
      %v3895 = vsel %vm1140, %v3861, %v3862
      %v3896 = vsel %vm1140, %v3860, %v3861
      %v3897 = vsel %vm1140, %v3859, %v3860
      %v3898 = vsel %vm1140, %v3858, %v3859
      %v3899 = vsel %vm1140, %v3857, %v3858
      %v3900 = vsel %vm1140, %v3856, %v3857
      %v3901 = vsel %vm1140, %v3855, %v3856
      %v3902 = vsel %vm1140, %v3854, %v3855
      %v3903 = vsel %vm1140, %v3853, %v3854
      %v3904 = vsel %vm1140, %v3852, %v3853
      %v3905 = vsel %vm1140, %v3851, %v3852
      %v3906 = vsel %vm1140, %v3850, %v3851
      %v3907 = vsel %vm1140, %v3849, %v3850
      %v3908 = vsel %vm1140, %v3848, %v3849
      %v3909 = vsel %vm1140, %v3847, %v3848
      %v3910 = vsel %vm1140, %v3878, %v3847
      %v3911 = vmul.f32 %v1176, %v3910
      %v3912 = vmul.f32 %v1181, %v3909
      %v3913 = vmul.f32 %v1186, %v3908
      %v3914 = vmul.f32 %v1191, %v3907
      %v3915 = vmul.f32 %v1196, %v3906
      %v3916 = vmul.f32 %v1201, %v3905
      %v3917 = vmul.f32 %v1206, %v3904
      %v3918 = vmul.f32 %v1211, %v3903
      %v3919 = vmul.f32 %v1216, %v3902
      %v3920 = vmul.f32 %v1221, %v3901
      %v3921 = vmul.f32 %v1226, %v3900
      %v3922 = vmul.f32 %v1231, %v3899
      %v3923 = vmul.f32 %v1236, %v3898
      %v3924 = vmul.f32 %v1241, %v3897
      %v3925 = vmul.f32 %v1246, %v3896
      %v3926 = vmul.f32 %v1251, %v3895
      %v3927 = vmul.f32 %v1256, %v3894
      %v3928 = vmul.f32 %v1261, %v3893
      %v3929 = vmul.f32 %v1266, %v3892
      %v3930 = vmul.f32 %v1271, %v3891
      %v3931 = vmul.f32 %v1276, %v3890
      %v3932 = vmul.f32 %v1281, %v3889
      %v3933 = vmul.f32 %v1286, %v3888
      %v3934 = vmul.f32 %v1291, %v3887
      %v3935 = vmul.f32 %v1296, %v3886
      %v3936 = vmul.f32 %v1301, %v3885
      %v3937 = vmul.f32 %v1306, %v3884
      %v3938 = vmul.f32 %v1311, %v3883
      %v3939 = vmul.f32 %v1316, %v3882
      %v3940 = vmul.f32 %v1321, %v3881
      %v3941 = vmul.f32 %v1326, %v3880
      %v3942 = vmul.f32 %v1331, %v3879
      %v3943 = vrot.slane %v3815, 1
      %v3944 = vrot.slane %v3816, 1
      %v3945 = vrot.slane %v3817, 1
      %v3946 = vrot.slane %v3818, 1
      %v3947 = vrot.slane %v3819, 1
      %v3948 = vrot.slane %v3820, 1
      %v3949 = vrot.slane %v3821, 1
      %v3950 = vrot.slane %v3822, 1
      %v3951 = vrot.slane %v3823, 1
      %v3952 = vrot.slane %v3824, 1
      %v3953 = vrot.slane %v3825, 1
      %v3954 = vrot.slane %v3826, 1
      %v3955 = vrot.slane %v3827, 1
      %v3956 = vrot.slane %v3828, 1
      %v3957 = vrot.slane %v3829, 1
      %v3958 = vrot.slane %v3830, 1
      %v3959 = vrot.slane %v3831, 1
      %v3960 = vrot.slane %v3832, 1
      %v3961 = vrot.slane %v3833, 1
      %v3962 = vrot.slane %v3834, 1
      %v3963 = vrot.slane %v3835, 1
      %v3964 = vrot.slane %v3836, 1
      %v3965 = vrot.slane %v3837, 1
      %v3966 = vrot.slane %v3838, 1
      %v3967 = vrot.slane %v3839, 1
      %v3968 = vrot.slane %v3840, 1
      %v3969 = vrot.slane %v3841, 1
      %v3970 = vrot.slane %v3842, 1
      %v3971 = vrot.slane %v3843, 1
      %v3972 = vrot.slane %v3844, 1
      %v3973 = vrot.slane %v3845, 1
      %v3974 = vrot.slane %v3846, 1
      %v3975 = vsel %vm1397, %v3973, %v3974
      %v3976 = vsel %vm1397, %v3972, %v3973
      %v3977 = vsel %vm1397, %v3971, %v3972
      %v3978 = vsel %vm1397, %v3970, %v3971
      %v3979 = vsel %vm1397, %v3969, %v3970
      %v3980 = vsel %vm1397, %v3968, %v3969
      %v3981 = vsel %vm1397, %v3967, %v3968
      %v3982 = vsel %vm1397, %v3966, %v3967
      %v3983 = vsel %vm1397, %v3965, %v3966
      %v3984 = vsel %vm1397, %v3964, %v3965
      %v3985 = vsel %vm1397, %v3963, %v3964
      %v3986 = vsel %vm1397, %v3962, %v3963
      %v3987 = vsel %vm1397, %v3961, %v3962
      %v3988 = vsel %vm1397, %v3960, %v3961
      %v3989 = vsel %vm1397, %v3959, %v3960
      %v3990 = vsel %vm1397, %v3958, %v3959
      %v3991 = vsel %vm1397, %v3957, %v3958
      %v3992 = vsel %vm1397, %v3956, %v3957
      %v3993 = vsel %vm1397, %v3955, %v3956
      %v3994 = vsel %vm1397, %v3954, %v3955
      %v3995 = vsel %vm1397, %v3953, %v3954
      %v3996 = vsel %vm1397, %v3952, %v3953
      %v3997 = vsel %vm1397, %v3951, %v3952
      %v3998 = vsel %vm1397, %v3950, %v3951
      %v3999 = vsel %vm1397, %v3949, %v3950
      %v4000 = vsel %vm1397, %v3948, %v3949
      %v4001 = vsel %vm1397, %v3947, %v3948
      %v4002 = vsel %vm1397, %v3946, %v3947
      %v4003 = vsel %vm1397, %v3945, %v3946
      %v4004 = vsel %vm1397, %v3944, %v3945
      %v4005 = vsel %vm1397, %v3943, %v3944
      %v4006 = vsel %vm1397, %v3974, %v3943
      %v4007 = vmul.f32 %v1433, %v4005
      %v4008 = vmul.f32 %v1438, %v4004
      %v4009 = vmul.f32 %v1443, %v4003
      %v4010 = vmul.f32 %v1448, %v4002
      %v4011 = vmul.f32 %v1453, %v4001
      %v4012 = vmul.f32 %v1458, %v4000
      %v4013 = vmul.f32 %v1463, %v3999
      %v4014 = vmul.f32 %v1468, %v3998
      %v4015 = vmul.f32 %v1473, %v3997
      %v4016 = vmul.f32 %v1478, %v3996
      %v4017 = vmul.f32 %v1483, %v3995
      %v4018 = vmul.f32 %v1488, %v3994
      %v4019 = vmul.f32 %v1493, %v3993
      %v4020 = vmul.f32 %v1498, %v3992
      %v4021 = vmul.f32 %v1503, %v3991
      %v4022 = vmul.f32 %v1508, %v3990
      %v4023 = vmul.f32 %v1513, %v3989
      %v4024 = vmul.f32 %v1518, %v3988
      %v4025 = vmul.f32 %v1523, %v3987
      %v4026 = vmul.f32 %v1528, %v3986
      %v4027 = vmul.f32 %v1533, %v3985
      %v4028 = vmul.f32 %v1538, %v3984
      %v4029 = vmul.f32 %v1543, %v3983
      %v4030 = vmul.f32 %v1548, %v3982
      %v4031 = vmul.f32 %v1553, %v3981
      %v4032 = vmul.f32 %v1558, %v3980
      %v4033 = vmul.f32 %v1563, %v3979
      %v4034 = vmul.f32 %v1568, %v3978
      %v4035 = vmul.f32 %v1573, %v3977
      %v4036 = vmul.f32 %v1578, %v3976
      %v4037 = vmul.f32 %v1583, %v3975
      %v4038 = vmul.f32 %v1588, %v4006
      %4071 = vrot.lane.b32.xlu0 %v3815, 8
      %v4072 = vpop.permute.xlu0 %4071
      %4073 = vrot.lane.b32.xlu0 %v3816, 8
      %v4074 = vpop.permute.xlu0 %4073
      %4075 = vrot.lane.b32.xlu0 %v3817, 8
      %v4076 = vpop.permute.xlu0 %4075
      %4077 = vrot.lane.b32.xlu0 %v3818, 8
      %v4078 = vpop.permute.xlu0 %4077
      %4079 = vrot.lane.b32.xlu0 %v3819, 8
      %v4080 = vpop.permute.xlu0 %4079
      %4081 = vrot.lane.b32.xlu0 %v3820, 8
      %v4082 = vpop.permute.xlu0 %4081
      %4083 = vrot.lane.b32.xlu0 %v3821, 8
      %v4084 = vpop.permute.xlu0 %4083
      %4085 = vrot.lane.b32.xlu0 %v3822, 8
      %v4086 = vpop.permute.xlu0 %4085
      %4087 = vrot.lane.b32.xlu0 %v3823, 8
      %v4088 = vpop.permute.xlu0 %4087
      %4089 = vrot.lane.b32.xlu0 %v3824, 8
      %v4090 = vpop.permute.xlu0 %4089
      %4091 = vrot.lane.b32.xlu0 %v3825, 8
      %v4092 = vpop.permute.xlu0 %4091
      %4093 = vrot.lane.b32.xlu0 %v3826, 8
      %v4094 = vpop.permute.xlu0 %4093
      %4095 = vrot.lane.b32.xlu0 %v3827, 8
      %v4096 = vpop.permute.xlu0 %4095
      %4097 = vrot.lane.b32.xlu0 %v3828, 8
      %v4098 = vpop.permute.xlu0 %4097
      %4099 = vrot.lane.b32.xlu0 %v3829, 8
      %v4100 = vpop.permute.xlu0 %4099
      %4101 = vrot.lane.b32.xlu0 %v3830, 8
      %v4102 = vpop.permute.xlu0 %4101
      %4103 = vrot.lane.b32.xlu0 %v3831, 8
      %v4104 = vpop.permute.xlu0 %4103
      %4105 = vrot.lane.b32.xlu0 %v3832, 8
      %v4106 = vpop.permute.xlu0 %4105
      %4107 = vrot.lane.b32.xlu0 %v3833, 8
      %v4108 = vpop.permute.xlu0 %4107
      %4109 = vrot.lane.b32.xlu0 %v3834, 8
      %v4110 = vpop.permute.xlu0 %4109
      %4111 = vrot.lane.b32.xlu0 %v3835, 8
      %v4112 = vpop.permute.xlu0 %4111
      %4113 = vrot.lane.b32.xlu0 %v3836, 8
      %v4114 = vpop.permute.xlu0 %4113
      %4115 = vrot.lane.b32.xlu0 %v3837, 8
      %v4116 = vpop.permute.xlu0 %4115
      %4117 = vrot.lane.b32.xlu0 %v3838, 8
      %v4118 = vpop.permute.xlu0 %4117
      %4119 = vrot.lane.b32.xlu0 %v3839, 8
      %v4120 = vpop.permute.xlu0 %4119
      %4121 = vrot.lane.b32.xlu0 %v3840, 8
      %v4122 = vpop.permute.xlu0 %4121
      %4123 = vrot.lane.b32.xlu0 %v3841, 8
      %v4124 = vpop.permute.xlu0 %4123
      %4125 = vrot.lane.b32.xlu0 %v3842, 8
      %v4126 = vpop.permute.xlu0 %4125
      %4127 = vrot.lane.b32.xlu0 %v3843, 8
      %v4128 = vpop.permute.xlu0 %4127
      %4129 = vrot.lane.b32.xlu0 %v3844, 8
      %v4130 = vpop.permute.xlu0 %4129
      %4131 = vrot.lane.b32.xlu0 %v3845, 8
      %v4132 = vpop.permute.xlu0 %4131
      %4133 = vrot.lane.b32.xlu0 %v3846, 8
      %v4134 = vpop.permute.xlu0 %4133
      %4199 = vrot.lane.b32.xlu0 %v4007, 16
      %v4200 = vpop.permute.xlu0 %4199
      %4201 = vrot.lane.b32.xlu0 %v4008, 16
      %v4202 = vpop.permute.xlu0 %4201
      %4203 = vrot.lane.b32.xlu0 %v4009, 16
      %v4204 = vpop.permute.xlu0 %4203
      %4205 = vrot.lane.b32.xlu0 %v4010, 16
      %v4206 = vpop.permute.xlu0 %4205
      %4207 = vrot.lane.b32.xlu0 %v4011, 16
      %v4208 = vpop.permute.xlu0 %4207
      %4209 = vrot.lane.b32.xlu0 %v4012, 16
      %v4210 = vpop.permute.xlu0 %4209
      %4211 = vrot.lane.b32.xlu0 %v4013, 16
      %v4212 = vpop.permute.xlu0 %4211
      %4213 = vrot.lane.b32.xlu0 %v4014, 16
      %v4214 = vpop.permute.xlu0 %4213
      %4215 = vrot.lane.b32.xlu0 %v4015, 16
      %v4216 = vpop.permute.xlu0 %4215
      %4217 = vrot.lane.b32.xlu0 %v4016, 16
      %v4218 = vpop.permute.xlu0 %4217
      %4219 = vrot.lane.b32.xlu0 %v4017, 16
      %v4220 = vpop.permute.xlu0 %4219
      %4221 = vrot.lane.b32.xlu0 %v4018, 16
      %v4222 = vpop.permute.xlu0 %4221
      %4223 = vrot.lane.b32.xlu0 %v4019, 16
      %v4224 = vpop.permute.xlu0 %4223
      %4225 = vrot.lane.b32.xlu0 %v4020, 16
      %v4226 = vpop.permute.xlu0 %4225
      %4227 = vrot.lane.b32.xlu0 %v4021, 16
      %v4228 = vpop.permute.xlu0 %4227
      %4229 = vrot.lane.b32.xlu0 %v4022, 16
      %v4230 = vpop.permute.xlu0 %4229
      %4231 = vrot.lane.b32.xlu0 %v4023, 16
      %v4232 = vpop.permute.xlu0 %4231
      %4233 = vrot.lane.b32.xlu0 %v4024, 16
      %v4234 = vpop.permute.xlu0 %4233
      %4235 = vrot.lane.b32.xlu0 %v4025, 16
      %v4236 = vpop.permute.xlu0 %4235
      %4237 = vrot.lane.b32.xlu0 %v4026, 16
      %v4238 = vpop.permute.xlu0 %4237
      %4239 = vrot.lane.b32.xlu0 %v4027, 16
      %v4240 = vpop.permute.xlu0 %4239
      %4241 = vrot.lane.b32.xlu0 %v4028, 16
      %v4242 = vpop.permute.xlu0 %4241
      %4243 = vrot.lane.b32.xlu0 %v4029, 16
      %v4244 = vpop.permute.xlu0 %4243
      %4245 = vrot.lane.b32.xlu0 %v4030, 16
      %v4246 = vpop.permute.xlu0 %4245
      %4247 = vrot.lane.b32.xlu0 %v4031, 16
      %v4248 = vpop.permute.xlu0 %4247
      %4249 = vrot.lane.b32.xlu0 %v4032, 16
      %v4250 = vpop.permute.xlu0 %4249
      %4251 = vrot.lane.b32.xlu0 %v4033, 16
      %v4252 = vpop.permute.xlu0 %4251
      %4253 = vrot.lane.b32.xlu0 %v4034, 16
      %v4254 = vpop.permute.xlu0 %4253
      %4255 = vrot.lane.b32.xlu0 %v4035, 16
      %v4256 = vpop.permute.xlu0 %4255
      %4257 = vrot.lane.b32.xlu0 %v4036, 16
      %v4258 = vpop.permute.xlu0 %4257
      %4259 = vrot.lane.b32.xlu0 %v4037, 16
      %v4260 = vpop.permute.xlu0 %4259
      %4261 = vrot.lane.b32.xlu0 %v4038, 16
      %v4262 = vpop.permute.xlu0 %4261
      %v4295 = vsel %vm1878, %v3911, %v4072
      %v4296 = vsel %vm1878, %v3912, %v4074
      %v4297 = vsel %vm1878, %v3913, %v4076
      %v4298 = vsel %vm1878, %v3914, %v4078
      %v4299 = vsel %vm1878, %v3915, %v4080
      %v4300 = vsel %vm1878, %v3916, %v4082
      %v4301 = vsel %vm1878, %v3917, %v4084
      %v4302 = vsel %vm1878, %v3918, %v4086
      %v4303 = vsel %vm1878, %v3919, %v4088
      %v4304 = vsel %vm1878, %v3920, %v4090
      %v4305 = vsel %vm1878, %v3921, %v4092
      %v4306 = vsel %vm1878, %v3922, %v4094
      %v4307 = vsel %vm1878, %v3923, %v4096
      %v4308 = vsel %vm1878, %v3924, %v4098
      %v4309 = vsel %vm1878, %v3925, %v4100
      %v4310 = vsel %vm1878, %v3926, %v4102
      %v4311 = vsel %vm1878, %v3927, %v4104
      %v4312 = vsel %vm1878, %v3928, %v4106
      %v4313 = vsel %vm1878, %v3929, %v4108
      %v4314 = vsel %vm1878, %v3930, %v4110
      %v4315 = vsel %vm1878, %v3931, %v4112
      %v4316 = vsel %vm1878, %v3932, %v4114
      %v4317 = vsel %vm1878, %v3933, %v4116
      %v4318 = vsel %vm1878, %v3934, %v4118
      %v4319 = vsel %vm1878, %v3935, %v4120
      %v4320 = vsel %vm1878, %v3936, %v4122
      %v4321 = vsel %vm1878, %v3937, %v4124
      %v4322 = vsel %vm1878, %v3938, %v4126
      %v4323 = vsel %vm1878, %v3939, %v4128
      %v4324 = vsel %vm1878, %v3940, %v4130
      %v4325 = vsel %vm1878, %v3941, %v4132
      %v4326 = vsel %vm1878, %v3942, %v4134
      %v4327 = vsel %vm864, %v4295, %v4200
      %v4328 = vsel %vm864, %v4296, %v4202
      %v4329 = vsel %vm864, %v4297, %v4204
      %v4330 = vsel %vm864, %v4298, %v4206
      %v4331 = vsel %vm864, %v4299, %v4208
      %v4332 = vsel %vm864, %v4300, %v4210
      %v4333 = vsel %vm864, %v4301, %v4212
      %v4334 = vsel %vm864, %v4302, %v4214
      %v4335 = vsel %vm864, %v4303, %v4216
      %v4336 = vsel %vm864, %v4304, %v4218
      %v4337 = vsel %vm864, %v4305, %v4220
      %v4338 = vsel %vm864, %v4306, %v4222
      %v4339 = vsel %vm864, %v4307, %v4224
      %v4340 = vsel %vm864, %v4308, %v4226
      %v4341 = vsel %vm864, %v4309, %v4228
      %v4342 = vsel %vm864, %v4310, %v4230
      %v4343 = vsel %vm864, %v4311, %v4232
      %v4344 = vsel %vm864, %v4312, %v4234
      %v4345 = vsel %vm864, %v4313, %v4236
      %v4346 = vsel %vm864, %v4314, %v4238
      %v4347 = vsel %vm864, %v4315, %v4240
      %v4348 = vsel %vm864, %v4316, %v4242
      %v4349 = vsel %vm864, %v4317, %v4244
      %v4350 = vsel %vm864, %v4318, %v4246
      %v4351 = vsel %vm864, %v4319, %v4248
      %v4352 = vsel %vm864, %v4320, %v4250
      %v4353 = vsel %vm864, %v4321, %v4252
      %v4354 = vsel %vm864, %v4322, %v4254
      %v4355 = vsel %vm864, %v4323, %v4256
      %v4356 = vsel %vm864, %v4324, %v4258
      %v4357 = vsel %vm864, %v4325, %v4260
      %v4358 = vsel %vm864, %v4326, %v4262
      %v4359 = vpack.c.bf16 %v4328, %v4327
      %v4360 = vpack.c.bf16 %v4330, %v4329
      %v4361 = vpack.c.bf16 %v4332, %v4331
      %v4362 = vpack.c.bf16 %v4334, %v4333
      %v4363 = vpack.c.bf16 %v4336, %v4335
      %v4364 = vpack.c.bf16 %v4338, %v4337
      %v4365 = vpack.c.bf16 %v4340, %v4339
      %v4366 = vpack.c.bf16 %v4342, %v4341
      %v4367 = vpack.c.bf16 %v4344, %v4343
      %v4368 = vpack.c.bf16 %v4346, %v4345
      %v4369 = vpack.c.bf16 %v4348, %v4347
      %v4370 = vpack.c.bf16 %v4350, %v4349
      %v4371 = vpack.c.bf16 %v4352, %v4351
      %v4372 = vpack.c.bf16 %v4354, %v4353
      %v4373 = vpack.c.bf16 %v4356, %v4355
      %v4374 = vpack.c.bf16 %v4358, %v4357
      %v4375 = vld [vmem:[%s9] sm:$0xf]
      %v4376 = vld [vmem:[%s9 + $0x4] sm:$0xf]
      %v4377 = vld [vmem:[%s9 + $0x8] sm:$0xf]
      %v4381 = vunpack.c.l.b16 %v4375
      %v4382 = vunpack.c.l.b16 %v4376
      %v4383 = vunpack.c.l.b16 %v4377
      %v4384 = vpack.c.b16 %v4382, %v4381
      %v4385 = vpack.c.b16 %v4383, %v4383
      %v4388 = vsel %vm1971, %v4359, 0
      %v4391 = vsel %vm1971, %v4360, 0
      %v4394 = vsel %vm1971, %v4361, 0
      %v4397 = vsel %vm1971, %v4362, 0
      %v4400 = vsel %vm1971, %v4363, 0
      %v4403 = vsel %vm1971, %v4364, 0
      %v4406 = vsel %vm1971, %v4365, 0
      %v4409 = vsel %vm1971, %v4366, 0
      %v4412 = vsel %vm1971, %v4367, 0
      %v4415 = vsel %vm1971, %v4368, 0
      %v4418 = vsel %vm1971, %v4369, 0
      %v4421 = vsel %vm1971, %v4370, 0
      %v4424 = vsel %vm1971, %v4371, 0
      %v4427 = vsel %vm1971, %v4372, 0
      %v4430 = vsel %vm1971, %v4373, 0
      %v4433 = vsel %vm1971, %v4374, 0
      %v4436 = vsel %vm2020, %v4385, 0
      %4438 = vmatprep.subr.bf16.mxu0 0
      %4439 = vmatpush1.bf16.msra.mxu0 0
      %4440 = vmatprep.subr.bf16.mxu0 0
      %4441 = vmatpush1.bf16.msra.mxu0 0
      %4442 = vmatprep.subr.bf16.mxu0 0
      %4443 = vmatpush1.bf16.msra.mxu0 0
      %4444 = vmatprep.subr.bf16.mxu0 0
      %4445 = vmatpush1.bf16.msra.mxu0 0
      %4446 = vmatprep.subr.bf16.mxu0 0
      %4447 = vmatpush1.bf16.msra.mxu0 0
      %4448 = vmatprep.subr.bf16.mxu0 0
      %4449 = vmatpush1.bf16.msra.mxu0 0
      %4450 = vmatprep.subr.bf16.mxu0 0
      %4451 = vmatpush1.bf16.msra.mxu0 %v4436
      %4452 = vmatprep.subr.bf16.mxu0 0
      %4453 = vmatpush1.bf16.msra.mxu0 %v4384
      %4454 = vmatprep.subr.bf16.mxu0 0
      %4455 = vmatpush2.bf16.msra.mxu0 0
      %4456 = vmatprep.subr.bf16.mxu0 0
      %4457 = vmatpush2.bf16.msra.mxu0 0
      %4458 = vmatprep.subr.bf16.mxu0 0
      %4459 = vmatpush2.bf16.msra.mxu0 0
      %4460 = vmatprep.subr.bf16.mxu0 0
      %4461 = vmatpush2.bf16.msra.mxu0 0
      %4462 = vmatprep.subr.bf16.mxu0 0
      %4463 = vmatpush2.bf16.msra.mxu0 0
      %4464 = vmatprep.subr.bf16.mxu0 0
      %4465 = vmatpush2.bf16.msra.mxu0 0
      %4466 = vmatprep.subr.bf16.mxu0 0
      %4467 = vmatpush2.bf16.msra.mxu0 0
      %4468 = vmatprep.subr.bf16.mxu0 0
      %4469 = vmatpush2.bf16.msra.mxu0 0
      %4470 = vmatprep.mubr.bf16.mxu0 0
      %4471 = vmatmul.mubr.bf16.gmra.mxu0 %v4388
      %v4472 = vpop.f32.mrf.mxu0
      %v4473 = vadd.f32 0.0, %v4472
      %v4474 = vpop.f32.mrf.mxu0
      %v4475 = vpop.f32.mrf.mxu0
      %v4476 = vadd.f32 0.0, %v4475
      %v4477 = vpop.f32.mrf.mxu0
      %4478 = vmatprep.mubr.bf16.mxu0 0
      %4479 = vmatmul.mubr.bf16.gmra.mxu0 %v4391
      %v4480 = vpop.f32.mrf.mxu0
      %v4481 = vadd.f32 0.0, %v4480
      %v4482 = vpop.f32.mrf.mxu0
      %v4483 = vpop.f32.mrf.mxu0
      %v4484 = vadd.f32 0.0, %v4483
      %v4485 = vpop.f32.mrf.mxu0
      %4486 = vmatprep.mubr.bf16.mxu0 0
      %4487 = vmatmul.mubr.bf16.gmra.mxu0 %v4394
      %v4488 = vpop.f32.mrf.mxu0
      %v4489 = vadd.f32 0.0, %v4488
      %v4490 = vpop.f32.mrf.mxu0
      %v4491 = vpop.f32.mrf.mxu0
      %v4492 = vadd.f32 0.0, %v4491
      %v4493 = vpop.f32.mrf.mxu0
      %4494 = vmatprep.mubr.bf16.mxu0 0
      %4495 = vmatmul.mubr.bf16.gmra.mxu0 %v4397
      %v4496 = vpop.f32.mrf.mxu0
      %v4497 = vadd.f32 0.0, %v4496
      %v4498 = vpop.f32.mrf.mxu0
      %v4499 = vpop.f32.mrf.mxu0
      %v4500 = vadd.f32 0.0, %v4499
      %v4501 = vpop.f32.mrf.mxu0
      %4502 = vmatprep.mubr.bf16.mxu0 0
      %4503 = vmatmul.mubr.bf16.gmra.mxu0 %v4400
      %v4504 = vpop.f32.mrf.mxu0
      %v4505 = vadd.f32 0.0, %v4504
      %v4506 = vpop.f32.mrf.mxu0
      %v4507 = vpop.f32.mrf.mxu0
      %v4508 = vadd.f32 0.0, %v4507
      %v4509 = vpop.f32.mrf.mxu0
      %4510 = vmatprep.mubr.bf16.mxu0 0
      %4511 = vmatmul.mubr.bf16.gmra.mxu0 %v4403
      %v4512 = vpop.f32.mrf.mxu0
      %v4513 = vadd.f32 0.0, %v4512
      %v4514 = vpop.f32.mrf.mxu0
      %v4515 = vpop.f32.mrf.mxu0
      %v4516 = vadd.f32 0.0, %v4515
      %v4517 = vpop.f32.mrf.mxu0
      %4518 = vmatprep.mubr.bf16.mxu0 0
      %4519 = vmatmul.mubr.bf16.gmra.mxu0 %v4406
      %v4520 = vpop.f32.mrf.mxu0
      %v4521 = vadd.f32 0.0, %v4520
      %v4522 = vpop.f32.mrf.mxu0
      %v4523 = vpop.f32.mrf.mxu0
      %v4524 = vadd.f32 0.0, %v4523
      %v4525 = vpop.f32.mrf.mxu0
      %4526 = vmatprep.mubr.bf16.mxu0 0
      %4527 = vmatmul.mubr.bf16.gmra.mxu0 %v4409
      %v4528 = vpop.f32.mrf.mxu0
      %v4529 = vadd.f32 0.0, %v4528
      %v4530 = vpop.f32.mrf.mxu0
      %v4531 = vpop.f32.mrf.mxu0
      %v4532 = vadd.f32 0.0, %v4531
      %v4533 = vpop.f32.mrf.mxu0
      %4534 = vmatprep.mubr.bf16.mxu0 0
      %4535 = vmatmul.mubr.bf16.gmra.mxu0 %v4412
      %v4536 = vpop.f32.mrf.mxu0
      %v4537 = vadd.f32 0.0, %v4536
      %v4538 = vpop.f32.mrf.mxu0
      %v4539 = vpop.f32.mrf.mxu0
      %v4540 = vadd.f32 0.0, %v4539
      %v4541 = vpop.f32.mrf.mxu0
      %4542 = vmatprep.mubr.bf16.mxu0 0
      %4543 = vmatmul.mubr.bf16.gmra.mxu0 %v4415
      %v4544 = vpop.f32.mrf.mxu0
      %v4545 = vadd.f32 0.0, %v4544
      %v4546 = vpop.f32.mrf.mxu0
      %v4547 = vpop.f32.mrf.mxu0
      %v4548 = vadd.f32 0.0, %v4547
      %v4549 = vpop.f32.mrf.mxu0
      %4550 = vmatprep.mubr.bf16.mxu0 0
      %4551 = vmatmul.mubr.bf16.gmra.mxu0 %v4418
      %v4552 = vpop.f32.mrf.mxu0
      %v4553 = vadd.f32 0.0, %v4552
      %v4554 = vpop.f32.mrf.mxu0
      %v4555 = vpop.f32.mrf.mxu0
      %v4556 = vadd.f32 0.0, %v4555
      %v4557 = vpop.f32.mrf.mxu0
      %4558 = vmatprep.mubr.bf16.mxu0 0
      %4559 = vmatmul.mubr.bf16.gmra.mxu0 %v4421
      %v4560 = vpop.f32.mrf.mxu0
      %v4561 = vadd.f32 0.0, %v4560
      %v4562 = vpop.f32.mrf.mxu0
      %v4563 = vpop.f32.mrf.mxu0
      %v4564 = vadd.f32 0.0, %v4563
      %v4565 = vpop.f32.mrf.mxu0
      %4566 = vmatprep.mubr.bf16.mxu0 0
      %4567 = vmatmul.mubr.bf16.gmra.mxu0 %v4424
      %v4568 = vpop.f32.mrf.mxu0
      %v4569 = vadd.f32 0.0, %v4568
      %v4570 = vpop.f32.mrf.mxu0
      %v4571 = vpop.f32.mrf.mxu0
      %v4572 = vadd.f32 0.0, %v4571
      %v4573 = vpop.f32.mrf.mxu0
      %4574 = vmatprep.mubr.bf16.mxu0 0
      %4575 = vmatmul.mubr.bf16.gmra.mxu0 %v4427
      %v4576 = vpop.f32.mrf.mxu0
      %v4577 = vadd.f32 0.0, %v4576
      %v4578 = vpop.f32.mrf.mxu0
      %v4579 = vpop.f32.mrf.mxu0
      %v4580 = vadd.f32 0.0, %v4579
      %v4581 = vpop.f32.mrf.mxu0
      %4582 = vmatprep.mubr.bf16.mxu0 0
      %4583 = vmatmul.mubr.bf16.gmra.mxu0 %v4430
      %v4584 = vpop.f32.mrf.mxu0
      %v4585 = vadd.f32 0.0, %v4584
      %v4586 = vpop.f32.mrf.mxu0
      %v4587 = vpop.f32.mrf.mxu0
      %v4588 = vadd.f32 0.0, %v4587
      %v4589 = vpop.f32.mrf.mxu0
      %4590 = vmatprep.mubr.bf16.mxu0 0
      %4591 = vmatmul.mubr.bf16.gmra.mxu0 %v4433
      %v4592 = vpop.f32.mrf.mxu0
      %v4593 = vadd.f32 0.0, %v4592
      %v4594 = vpop.f32.mrf.mxu0
      %v4595 = vpop.f32.mrf.mxu0
      %v4596 = vadd.f32 0.0, %v4595
      %v4597 = vpop.f32.mrf.mxu0
      %4598 = vdwg.mxu0
      %v4599 = vmul.f32 %v2188, %v4593
      %v4600 = vmul.f32 %v2193, %v4596
      %v4601 = vmul.f32 %v2198, %v4473
      %v4602 = vmul.f32 %v2203, %v4476
      %v4603 = vmul.f32 %v2208, %v4481
      %v4604 = vmul.f32 %v2213, %v4484
      %v4605 = vmul.f32 %v2218, %v4489
      %v4606 = vmul.f32 %v2223, %v4492
      %v4607 = vmul.f32 %v2228, %v4497
      %v4608 = vmul.f32 %v2233, %v4500
      %v4609 = vmul.f32 %v2238, %v4505
      %v4610 = vmul.f32 %v2243, %v4508
      %v4611 = vmul.f32 %v2248, %v4513
      %v4612 = vmul.f32 %v2253, %v4516
      %v4613 = vmul.f32 %v2258, %v4521
      %v4614 = vmul.f32 %v2263, %v4524
      %v4615 = vmul.f32 %v2268, %v4529
      %v4616 = vmul.f32 %v2273, %v4532
      %v4617 = vmul.f32 %v2278, %v4537
      %v4618 = vmul.f32 %v2283, %v4540
      %v4619 = vmul.f32 %v2288, %v4545
      %v4620 = vmul.f32 %v2293, %v4548
      %v4621 = vmul.f32 %v2298, %v4553
      %v4622 = vmul.f32 %v2303, %v4556
      %v4623 = vmul.f32 %v2308, %v4561
      %v4624 = vmul.f32 %v2313, %v4564
      %v4625 = vmul.f32 %v2318, %v4569
      %v4626 = vmul.f32 %v2323, %v4572
      %v4627 = vmul.f32 %v2328, %v4577
      %v4628 = vmul.f32 %v2333, %v4580
      %v4629 = vmul.f32 %v2338, %v4585
      %v4630 = vmul.f32 %v2343, %v4588
      %4663 = vrot.lane.b32.xlu0 %v4599, 8
      %v4664 = vpop.permute.xlu0 %4663
      %4665 = vrot.lane.b32.xlu0 %v4600, 8
      %v4666 = vpop.permute.xlu0 %4665
      %4667 = vrot.lane.b32.xlu0 %v4601, 8
      %v4668 = vpop.permute.xlu0 %4667
      %4669 = vrot.lane.b32.xlu0 %v4602, 8
      %v4670 = vpop.permute.xlu0 %4669
      %4671 = vrot.lane.b32.xlu0 %v4603, 8
      %v4672 = vpop.permute.xlu0 %4671
      %4673 = vrot.lane.b32.xlu0 %v4604, 8
      %v4674 = vpop.permute.xlu0 %4673
      %4675 = vrot.lane.b32.xlu0 %v4605, 8
      %v4676 = vpop.permute.xlu0 %4675
      %4677 = vrot.lane.b32.xlu0 %v4606, 8
      %v4678 = vpop.permute.xlu0 %4677
      %4679 = vrot.lane.b32.xlu0 %v4607, 8
      %v4680 = vpop.permute.xlu0 %4679
      %4681 = vrot.lane.b32.xlu0 %v4608, 8
      %v4682 = vpop.permute.xlu0 %4681
      %4683 = vrot.lane.b32.xlu0 %v4609, 8
      %v4684 = vpop.permute.xlu0 %4683
      %4685 = vrot.lane.b32.xlu0 %v4610, 8
      %v4686 = vpop.permute.xlu0 %4685
      %4687 = vrot.lane.b32.xlu0 %v4611, 8
      %v4688 = vpop.permute.xlu0 %4687
      %4689 = vrot.lane.b32.xlu0 %v4612, 8
      %v4690 = vpop.permute.xlu0 %4689
      %4691 = vrot.lane.b32.xlu0 %v4613, 8
      %v4692 = vpop.permute.xlu0 %4691
      %4693 = vrot.lane.b32.xlu0 %v4614, 8
      %v4694 = vpop.permute.xlu0 %4693
      %4695 = vrot.lane.b32.xlu0 %v4615, 8
      %v4696 = vpop.permute.xlu0 %4695
      %4697 = vrot.lane.b32.xlu0 %v4616, 8
      %v4698 = vpop.permute.xlu0 %4697
      %4699 = vrot.lane.b32.xlu0 %v4617, 8
      %v4700 = vpop.permute.xlu0 %4699
      %4701 = vrot.lane.b32.xlu0 %v4618, 8
      %v4702 = vpop.permute.xlu0 %4701
      %4703 = vrot.lane.b32.xlu0 %v4619, 8
      %v4704 = vpop.permute.xlu0 %4703
      %4705 = vrot.lane.b32.xlu0 %v4620, 8
      %v4706 = vpop.permute.xlu0 %4705
      %4707 = vrot.lane.b32.xlu0 %v4621, 8
      %v4708 = vpop.permute.xlu0 %4707
      %4709 = vrot.lane.b32.xlu0 %v4622, 8
      %v4710 = vpop.permute.xlu0 %4709
      %4711 = vrot.lane.b32.xlu0 %v4623, 8
      %v4712 = vpop.permute.xlu0 %4711
      %4713 = vrot.lane.b32.xlu0 %v4624, 8
      %v4714 = vpop.permute.xlu0 %4713
      %4715 = vrot.lane.b32.xlu0 %v4625, 8
      %v4716 = vpop.permute.xlu0 %4715
      %4717 = vrot.lane.b32.xlu0 %v4626, 8
      %v4718 = vpop.permute.xlu0 %4717
      %4719 = vrot.lane.b32.xlu0 %v4627, 8
      %v4720 = vpop.permute.xlu0 %4719
      %4721 = vrot.lane.b32.xlu0 %v4628, 8
      %v4722 = vpop.permute.xlu0 %4721
      %4723 = vrot.lane.b32.xlu0 %v4629, 8
      %v4724 = vpop.permute.xlu0 %4723
      %4725 = vrot.lane.b32.xlu0 %v4630, 8
      %v4726 = vpop.permute.xlu0 %4725
      %v4759 = vadd.f32 %v4473, %v4664
      %v4760 = vadd.f32 %v4476, %v4666
      %v4761 = vadd.f32 %v4481, %v4668
      %v4762 = vadd.f32 %v4484, %v4670
      %v4763 = vadd.f32 %v4489, %v4672
      %v4764 = vadd.f32 %v4492, %v4674
      %v4765 = vadd.f32 %v4497, %v4676
      %v4766 = vadd.f32 %v4500, %v4678
      %v4767 = vadd.f32 %v4505, %v4680
      %v4768 = vadd.f32 %v4508, %v4682
      %v4769 = vadd.f32 %v4513, %v4684
      %v4770 = vadd.f32 %v4516, %v4686
      %v4771 = vadd.f32 %v4521, %v4688
      %v4772 = vadd.f32 %v4524, %v4690
      %v4773 = vadd.f32 %v4529, %v4692
      %v4774 = vadd.f32 %v4532, %v4694
      %v4775 = vadd.f32 %v4537, %v4696
      %v4776 = vadd.f32 %v4540, %v4698
      %v4777 = vadd.f32 %v4545, %v4700
      %v4778 = vadd.f32 %v4548, %v4702
      %v4779 = vadd.f32 %v4553, %v4704
      %v4780 = vadd.f32 %v4556, %v4706
      %v4781 = vadd.f32 %v4561, %v4708
      %v4782 = vadd.f32 %v4564, %v4710
      %v4783 = vadd.f32 %v4569, %v4712
      %v4784 = vadd.f32 %v4572, %v4714
      %v4785 = vadd.f32 %v4577, %v4716
      %v4786 = vadd.f32 %v4580, %v4718
      %v4787 = vadd.f32 %v4585, %v4720
      %v4788 = vadd.f32 %v4588, %v4722
      %v4789 = vadd.f32 %v4593, %v4724
      %v4790 = vadd.f32 %v4596, %v4726
      %4823 = vrot.lane.b32.xlu0 %v4473, 112
      %v4824 = vpop.permute.xlu0 %4823
      %4825 = vrot.lane.b32.xlu0 %v4476, 112
      %v4826 = vpop.permute.xlu0 %4825
      %4827 = vrot.lane.b32.xlu0 %v4481, 112
      %v4828 = vpop.permute.xlu0 %4827
      %4829 = vrot.lane.b32.xlu0 %v4484, 112
      %v4830 = vpop.permute.xlu0 %4829
      %4831 = vrot.lane.b32.xlu0 %v4489, 112
      %v4832 = vpop.permute.xlu0 %4831
      %4833 = vrot.lane.b32.xlu0 %v4492, 112
      %v4834 = vpop.permute.xlu0 %4833
      %4835 = vrot.lane.b32.xlu0 %v4497, 112
      %v4836 = vpop.permute.xlu0 %4835
      %4837 = vrot.lane.b32.xlu0 %v4500, 112
      %v4838 = vpop.permute.xlu0 %4837
      %4839 = vrot.lane.b32.xlu0 %v4505, 112
      %v4840 = vpop.permute.xlu0 %4839
      %4841 = vrot.lane.b32.xlu0 %v4508, 112
      %v4842 = vpop.permute.xlu0 %4841
      %4843 = vrot.lane.b32.xlu0 %v4513, 112
      %v4844 = vpop.permute.xlu0 %4843
      %4845 = vrot.lane.b32.xlu0 %v4516, 112
      %v4846 = vpop.permute.xlu0 %4845
      %4847 = vrot.lane.b32.xlu0 %v4521, 112
      %v4848 = vpop.permute.xlu0 %4847
      %4849 = vrot.lane.b32.xlu0 %v4524, 112
      %v4850 = vpop.permute.xlu0 %4849
      %4851 = vrot.lane.b32.xlu0 %v4529, 112
      %v4852 = vpop.permute.xlu0 %4851
      %4853 = vrot.lane.b32.xlu0 %v4532, 112
      %v4854 = vpop.permute.xlu0 %4853
      %4855 = vrot.lane.b32.xlu0 %v4537, 112
      %v4856 = vpop.permute.xlu0 %4855
      %4857 = vrot.lane.b32.xlu0 %v4540, 112
      %v4858 = vpop.permute.xlu0 %4857
      %4859 = vrot.lane.b32.xlu0 %v4545, 112
      %v4860 = vpop.permute.xlu0 %4859
      %4861 = vrot.lane.b32.xlu0 %v4548, 112
      %v4862 = vpop.permute.xlu0 %4861
      %4863 = vrot.lane.b32.xlu0 %v4553, 112
      %v4864 = vpop.permute.xlu0 %4863
      %4865 = vrot.lane.b32.xlu0 %v4556, 112
      %v4866 = vpop.permute.xlu0 %4865
      %4867 = vrot.lane.b32.xlu0 %v4561, 112
      %v4868 = vpop.permute.xlu0 %4867
      %4869 = vrot.lane.b32.xlu0 %v4564, 112
      %v4870 = vpop.permute.xlu0 %4869
      %4871 = vrot.lane.b32.xlu0 %v4569, 112
      %v4872 = vpop.permute.xlu0 %4871
      %4873 = vrot.lane.b32.xlu0 %v4572, 112
      %v4874 = vpop.permute.xlu0 %4873
      %4875 = vrot.lane.b32.xlu0 %v4577, 112
      %v4876 = vpop.permute.xlu0 %4875
      %4877 = vrot.lane.b32.xlu0 %v4580, 112
      %v4878 = vpop.permute.xlu0 %4877
      %4879 = vrot.lane.b32.xlu0 %v4585, 112
      %v4880 = vpop.permute.xlu0 %4879
      %4881 = vrot.lane.b32.xlu0 %v4588, 112
      %v4882 = vpop.permute.xlu0 %4881
      %4883 = vrot.lane.b32.xlu0 %v4593, 112
      %v4884 = vpop.permute.xlu0 %4883
      %4885 = vrot.lane.b32.xlu0 %v4596, 112
      %v4886 = vpop.permute.xlu0 %4885
      %v4919 = vmul.f32 %v2668, %v4828
      %v4920 = vmul.f32 %v2673, %v4830
      %v4921 = vmul.f32 %v2678, %v4832
      %v4922 = vmul.f32 %v2683, %v4834
      %v4923 = vmul.f32 %v2688, %v4836
      %v4924 = vmul.f32 %v2693, %v4838
      %v4925 = vmul.f32 %v2698, %v4840
      %v4926 = vmul.f32 %v2703, %v4842
      %v4927 = vmul.f32 %v2708, %v4844
      %v4928 = vmul.f32 %v2713, %v4846
      %v4929 = vmul.f32 %v2718, %v4848
      %v4930 = vmul.f32 %v2723, %v4850
      %v4931 = vmul.f32 %v2728, %v4852
      %v4932 = vmul.f32 %v2733, %v4854
      %v4933 = vmul.f32 %v2738, %v4856
      %v4934 = vmul.f32 %v2743, %v4858
      %v4935 = vmul.f32 %v2748, %v4860
      %v4936 = vmul.f32 %v2753, %v4862
      %v4937 = vmul.f32 %v2758, %v4864
      %v4938 = vmul.f32 %v2763, %v4866
      %v4939 = vmul.f32 %v2768, %v4868
      %v4940 = vmul.f32 %v2773, %v4870
      %v4941 = vmul.f32 %v2778, %v4872
      %v4942 = vmul.f32 %v2783, %v4874
      %v4943 = vmul.f32 %v2788, %v4876
      %v4944 = vmul.f32 %v2793, %v4878
      %v4945 = vmul.f32 %v2798, %v4880
      %v4946 = vmul.f32 %v2803, %v4882
      %v4947 = vmul.f32 %v2808, %v4884
      %v4948 = vmul.f32 %v2813, %v4886
      %v4949 = vmul.f32 %v2818, %v4824
      %v4950 = vmul.f32 %v2823, %v4826
      %4983 = vrot.lane.b32.xlu0 %v4919, 8
      %v4984 = vpop.permute.xlu0 %4983
      %4985 = vrot.lane.b32.xlu0 %v4920, 8
      %v4986 = vpop.permute.xlu0 %4985
      %4987 = vrot.lane.b32.xlu0 %v4921, 8
      %v4988 = vpop.permute.xlu0 %4987
      %4989 = vrot.lane.b32.xlu0 %v4922, 8
      %v4990 = vpop.permute.xlu0 %4989
      %4991 = vrot.lane.b32.xlu0 %v4923, 8
      %v4992 = vpop.permute.xlu0 %4991
      %4993 = vrot.lane.b32.xlu0 %v4924, 8
      %v4994 = vpop.permute.xlu0 %4993
      %4995 = vrot.lane.b32.xlu0 %v4925, 8
      %v4996 = vpop.permute.xlu0 %4995
      %4997 = vrot.lane.b32.xlu0 %v4926, 8
      %v4998 = vpop.permute.xlu0 %4997
      %4999 = vrot.lane.b32.xlu0 %v4927, 8
      %v5000 = vpop.permute.xlu0 %4999
      %5001 = vrot.lane.b32.xlu0 %v4928, 8
      %v5002 = vpop.permute.xlu0 %5001
      %5003 = vrot.lane.b32.xlu0 %v4929, 8
      %v5004 = vpop.permute.xlu0 %5003
      %5005 = vrot.lane.b32.xlu0 %v4930, 8
      %v5006 = vpop.permute.xlu0 %5005
      %5007 = vrot.lane.b32.xlu0 %v4931, 8
      %v5008 = vpop.permute.xlu0 %5007
      %5009 = vrot.lane.b32.xlu0 %v4932, 8
      %v5010 = vpop.permute.xlu0 %5009
      %5011 = vrot.lane.b32.xlu0 %v4933, 8
      %v5012 = vpop.permute.xlu0 %5011
      %5013 = vrot.lane.b32.xlu0 %v4934, 8
      %v5014 = vpop.permute.xlu0 %5013
      %5015 = vrot.lane.b32.xlu0 %v4935, 8
      %v5016 = vpop.permute.xlu0 %5015
      %5017 = vrot.lane.b32.xlu0 %v4936, 8
      %v5018 = vpop.permute.xlu0 %5017
      %5019 = vrot.lane.b32.xlu0 %v4937, 8
      %v5020 = vpop.permute.xlu0 %5019
      %5021 = vrot.lane.b32.xlu0 %v4938, 8
      %v5022 = vpop.permute.xlu0 %5021
      %5023 = vrot.lane.b32.xlu0 %v4939, 8
      %v5024 = vpop.permute.xlu0 %5023
      %5025 = vrot.lane.b32.xlu0 %v4940, 8
      %v5026 = vpop.permute.xlu0 %5025
      %5027 = vrot.lane.b32.xlu0 %v4941, 8
      %v5028 = vpop.permute.xlu0 %5027
      %5029 = vrot.lane.b32.xlu0 %v4942, 8
      %v5030 = vpop.permute.xlu0 %5029
      %5031 = vrot.lane.b32.xlu0 %v4943, 8
      %v5032 = vpop.permute.xlu0 %5031
      %5033 = vrot.lane.b32.xlu0 %v4944, 8
      %v5034 = vpop.permute.xlu0 %5033
      %5035 = vrot.lane.b32.xlu0 %v4945, 8
      %v5036 = vpop.permute.xlu0 %5035
      %5037 = vrot.lane.b32.xlu0 %v4946, 8
      %v5038 = vpop.permute.xlu0 %5037
      %5039 = vrot.lane.b32.xlu0 %v4947, 8
      %v5040 = vpop.permute.xlu0 %5039
      %5041 = vrot.lane.b32.xlu0 %v4948, 8
      %v5042 = vpop.permute.xlu0 %5041
      %5043 = vrot.lane.b32.xlu0 %v4949, 8
      %v5044 = vpop.permute.xlu0 %5043
      %5045 = vrot.lane.b32.xlu0 %v4950, 8
      %v5046 = vpop.permute.xlu0 %5045
      %v5079 = vadd.f32 %v4759, %v4984
      %v5080 = vadd.f32 %v4760, %v4986
      %v5081 = vadd.f32 %v4761, %v4988
      %v5082 = vadd.f32 %v4762, %v4990
      %v5083 = vadd.f32 %v4763, %v4992
      %v5084 = vadd.f32 %v4764, %v4994
      %v5085 = vadd.f32 %v4765, %v4996
      %v5086 = vadd.f32 %v4766, %v4998
      %v5087 = vadd.f32 %v4767, %v5000
      %v5088 = vadd.f32 %v4768, %v5002
      %v5089 = vadd.f32 %v4769, %v5004
      %v5090 = vadd.f32 %v4770, %v5006
      %v5091 = vadd.f32 %v4771, %v5008
      %v5092 = vadd.f32 %v4772, %v5010
      %v5093 = vadd.f32 %v4773, %v5012
      %v5094 = vadd.f32 %v4774, %v5014
      %v5095 = vadd.f32 %v4775, %v5016
      %v5096 = vadd.f32 %v4776, %v5018
      %v5097 = vadd.f32 %v4777, %v5020
      %v5098 = vadd.f32 %v4778, %v5022
      %v5099 = vadd.f32 %v4779, %v5024
      %v5100 = vadd.f32 %v4780, %v5026
      %v5101 = vadd.f32 %v4781, %v5028
      %v5102 = vadd.f32 %v4782, %v5030
      %v5103 = vadd.f32 %v4783, %v5032
      %v5104 = vadd.f32 %v4784, %v5034
      %v5105 = vadd.f32 %v4785, %v5036
      %v5106 = vadd.f32 %v4786, %v5038
      %v5107 = vadd.f32 %v4787, %v5040
      %v5108 = vadd.f32 %v4788, %v5042
      %v5109 = vadd.f32 %v4789, %v5044
      %v5110 = vadd.f32 %v4790, %v5046
      %v5111 = vld [vmem:[%s16] sm:$0x1]
      %v5113 = vlaneseq
      %v5114 = vshrl.u32 %v5113, 7
      %v5115 = vsub.s32 0, %v5114
      %v5116 = vrot.slane %v5111, %v5115
      %5117 = vrot.lane.b32.xlu0 %v5116, 8
      %v5118 = vpop.permute.xlu0 %5117
      %v5120 = vadd.f32 %v5079, %v5118
      %v5121 = vadd.f32 %v5080, %v5118
      %v5122 = vadd.f32 %v5081, %v5118
      %v5123 = vadd.f32 %v5082, %v5118
      %v5124 = vadd.f32 %v5083, %v5118
      %v5125 = vadd.f32 %v5084, %v5118
      %v5126 = vadd.f32 %v5085, %v5118
      %v5127 = vadd.f32 %v5086, %v5118
      %v5128 = vadd.f32 %v5087, %v5118
      %v5129 = vadd.f32 %v5088, %v5118
      %v5130 = vadd.f32 %v5089, %v5118
      %v5131 = vadd.f32 %v5090, %v5118
      %v5132 = vadd.f32 %v5091, %v5118
      %v5133 = vadd.f32 %v5092, %v5118
      %v5134 = vadd.f32 %v5093, %v5118
      %v5135 = vadd.f32 %v5094, %v5118
      %v5136 = vadd.f32 %v5095, %v5118
      %v5137 = vadd.f32 %v5096, %v5118
      %v5138 = vadd.f32 %v5097, %v5118
      %v5139 = vadd.f32 %v5098, %v5118
      %v5140 = vadd.f32 %v5099, %v5118
      %v5141 = vadd.f32 %v5100, %v5118
      %v5142 = vadd.f32 %v5101, %v5118
      %v5143 = vadd.f32 %v5102, %v5118
      %v5144 = vadd.f32 %v5103, %v5118
      %v5145 = vadd.f32 %v5104, %v5118
      %v5146 = vadd.f32 %v5105, %v5118
      %v5147 = vadd.f32 %v5106, %v5118
      %v5148 = vadd.f32 %v5107, %v5118
      %v5149 = vadd.f32 %v5108, %v5118
      %v5150 = vadd.f32 %v5109, %v5118
      %v5151 = vadd.f32 %v5110, %v5118
      %v5152 = vmax.f32 %v5120, 0.0
      %v5153 = vmax.f32 %v5121, 0.0
      %v5154 = vmax.f32 %v5122, 0.0
      %v5155 = vmax.f32 %v5123, 0.0
      %v5156 = vmax.f32 %v5124, 0.0
      %v5157 = vmax.f32 %v5125, 0.0
      %v5158 = vmax.f32 %v5126, 0.0
      %v5159 = vmax.f32 %v5127, 0.0
      %v5160 = vmax.f32 %v5128, 0.0
      %v5161 = vmax.f32 %v5129, 0.0
      %v5162 = vmax.f32 %v5130, 0.0
      %v5163 = vmax.f32 %v5131, 0.0
      %v5164 = vmax.f32 %v5132, 0.0
      %v5165 = vmax.f32 %v5133, 0.0
      %v5166 = vmax.f32 %v5134, 0.0
      %v5167 = vmax.f32 %v5135, 0.0
      %v5168 = vmax.f32 %v5136, 0.0
      %v5169 = vmax.f32 %v5137, 0.0
      %v5170 = vmax.f32 %v5138, 0.0
      %v5171 = vmax.f32 %v5139, 0.0
      %v5172 = vmax.f32 %v5140, 0.0
      %v5173 = vmax.f32 %v5141, 0.0
      %v5174 = vmax.f32 %v5142, 0.0
      %v5175 = vmax.f32 %v5143, 0.0
      %v5176 = vmax.f32 %v5144, 0.0
      %v5177 = vmax.f32 %v5145, 0.0
      %v5178 = vmax.f32 %v5146, 0.0
      %v5179 = vmax.f32 %v5147, 0.0
      %v5180 = vmax.f32 %v5148, 0.0
      %v5181 = vmax.f32 %v5149, 0.0
      %v5182 = vmax.f32 %v5150, 0.0
      %v5183 = vmax.f32 %v5151, 0.0
      %v5184 = vpack.c.bf16 %v5153, %v5152
      %v5185 = vpack.c.bf16 %v5155, %v5154
      %v5186 = vpack.c.bf16 %v5157, %v5156
      %v5187 = vpack.c.bf16 %v5159, %v5158
      %v5188 = vpack.c.bf16 %v5161, %v5160
      %v5189 = vpack.c.bf16 %v5163, %v5162
      %v5190 = vpack.c.bf16 %v5165, %v5164
      %v5191 = vpack.c.bf16 %v5167, %v5166
      %v5192 = vpack.c.bf16 %v5169, %v5168
      %v5193 = vpack.c.bf16 %v5171, %v5170
      %v5194 = vpack.c.bf16 %v5173, %v5172
      %v5195 = vpack.c.bf16 %v5175, %v5174
      %v5196 = vpack.c.bf16 %v5177, %v5176
      %v5197 = vpack.c.bf16 %v5179, %v5178
      %v5198 = vpack.c.bf16 %v5181, %v5180
      %v5199 = vpack.c.bf16 %v5183, %v5182
      %v5200 = vld [vmem:[%s10] sm:$0xf]
      %v5201 = vld [vmem:[%s17] sm:$0x1]
      %v5203 = vlaneseq
      %v5204 = vshrl.u32 %v5203, 7
      %v5205 = vsub.s32 0, %v5204
      %v5206 = vrot.slane %v5201, %v5205
      %5224 = vrot.lane.b32.xlu0 %v5184, 120
      %v5225 = vpop.permute.xlu0 %5224
      %5226 = vrot.lane.b32.xlu0 %v5185, 120
      %v5227 = vpop.permute.xlu0 %5226
      %5228 = vrot.lane.b32.xlu0 %v5186, 120
      %v5229 = vpop.permute.xlu0 %5228
      %5230 = vrot.lane.b32.xlu0 %v5187, 120
      %v5231 = vpop.permute.xlu0 %5230
      %5232 = vrot.lane.b32.xlu0 %v5188, 120
      %v5233 = vpop.permute.xlu0 %5232
      %5234 = vrot.lane.b32.xlu0 %v5189, 120
      %v5235 = vpop.permute.xlu0 %5234
      %5236 = vrot.lane.b32.xlu0 %v5190, 120
      %v5237 = vpop.permute.xlu0 %5236
      %5238 = vrot.lane.b32.xlu0 %v5191, 120
      %v5239 = vpop.permute.xlu0 %5238
      %5240 = vrot.lane.b32.xlu0 %v5192, 120
      %v5241 = vpop.permute.xlu0 %5240
      %5242 = vrot.lane.b32.xlu0 %v5193, 120
      %v5243 = vpop.permute.xlu0 %5242
      %5244 = vrot.lane.b32.xlu0 %v5194, 120
      %v5245 = vpop.permute.xlu0 %5244
      %5246 = vrot.lane.b32.xlu0 %v5195, 120
      %v5247 = vpop.permute.xlu0 %5246
      %5248 = vrot.lane.b32.xlu0 %v5196, 120
      %v5249 = vpop.permute.xlu0 %5248
      %5250 = vrot.lane.b32.xlu0 %v5197, 120
      %v5251 = vpop.permute.xlu0 %5250
      %5252 = vrot.lane.b32.xlu0 %v5198, 120
      %v5253 = vpop.permute.xlu0 %5252
      %5254 = vrot.lane.b32.xlu0 %v5199, 120
      %v5255 = vpop.permute.xlu0 %5254
      %v5257 = vsel %vm1878, %v5225, 0
      %v5260 = vsel %vm1878, %v5227, 0
      %v5263 = vsel %vm1878, %v5229, 0
      %v5266 = vsel %vm1878, %v5231, 0
      %v5269 = vsel %vm1878, %v5233, 0
      %v5272 = vsel %vm1878, %v5235, 0
      %v5275 = vsel %vm1878, %v5237, 0
      %v5278 = vsel %vm1878, %v5239, 0
      %v5281 = vsel %vm1878, %v5241, 0
      %v5284 = vsel %vm1878, %v5243, 0
      %v5287 = vsel %vm1878, %v5245, 0
      %v5290 = vsel %vm1878, %v5247, 0
      %v5293 = vsel %vm1878, %v5249, 0
      %v5296 = vsel %vm1878, %v5251, 0
      %v5299 = vsel %vm1878, %v5253, 0
      %v5302 = vsel %vm1878, %v5255, 0
      %v5305 = vsel %vm2020, %v5200, 0
      %5307 = vmatprep.subr.bf16.mxu0 0
      %5308 = vmatpush1.bf16.msra.mxu0 0
      %5309 = vmatprep.subr.bf16.mxu0 0
      %5310 = vmatpush1.bf16.msra.mxu0 0
      %5311 = vmatprep.subr.bf16.mxu0 0
      %5312 = vmatpush1.bf16.msra.mxu0 0
      %5313 = vmatprep.subr.bf16.mxu0 0
      %5314 = vmatpush1.bf16.msra.mxu0 0
      %5315 = vmatprep.subr.bf16.mxu0 0
      %5316 = vmatpush1.bf16.msra.mxu0 0
      %5317 = vmatprep.subr.bf16.mxu0 0
      %5318 = vmatpush1.bf16.msra.mxu0 0
      %5319 = vmatprep.subr.bf16.mxu0 0
      %5320 = vmatpush1.bf16.msra.mxu0 0
      %5321 = vmatprep.subr.bf16.mxu0 0
      %5322 = vmatpush1.bf16.msra.mxu0 %v5305
      %5323 = vmatprep.subr.bf16.mxu0 0
      %5324 = vmatpush2.bf16.msra.mxu0 0
      %5325 = vmatprep.subr.bf16.mxu0 0
      %5326 = vmatpush2.bf16.msra.mxu0 0
      %5327 = vmatprep.subr.bf16.mxu0 0
      %5328 = vmatpush2.bf16.msra.mxu0 0
      %5329 = vmatprep.subr.bf16.mxu0 0
      %5330 = vmatpush2.bf16.msra.mxu0 0
      %5331 = vmatprep.subr.bf16.mxu0 0
      %5332 = vmatpush2.bf16.msra.mxu0 0
      %5333 = vmatprep.subr.bf16.mxu0 0
      %5334 = vmatpush2.bf16.msra.mxu0 0
      %5335 = vmatprep.subr.bf16.mxu0 0
      %5336 = vmatpush2.bf16.msra.mxu0 0
      %5337 = vmatprep.subr.bf16.mxu0 0
      %5338 = vmatpush2.bf16.msra.mxu0 0
      %5339 = vmatprep.mubr.bf16.mxu0 0
      %5340 = vmatmul.mubr.bf16.gmra.mxu0 %v5257
      %v5341 = vpop.f32.mrf.mxu0
      %v5342 = vadd.f32 %v5206, %v5341
      %v5343 = vpop.f32.mrf.mxu0
      %v5344 = vpop.f32.mrf.mxu0
      %v5345 = vadd.f32 %v5206, %v5344
      %v5346 = vpop.f32.mrf.mxu0
      %5347 = vmatprep.mubr.bf16.mxu0 0
      %5348 = vmatmul.mubr.bf16.gmra.mxu0 %v5260
      %v5349 = vpop.f32.mrf.mxu0
      %v5350 = vadd.f32 %v5206, %v5349
      %v5351 = vpop.f32.mrf.mxu0
      %v5352 = vpop.f32.mrf.mxu0
      %v5353 = vadd.f32 %v5206, %v5352
      %v5354 = vpop.f32.mrf.mxu0
      %5355 = vmatprep.mubr.bf16.mxu0 0
      %5356 = vmatmul.mubr.bf16.gmra.mxu0 %v5263
      %v5357 = vpop.f32.mrf.mxu0
      %v5358 = vadd.f32 %v5206, %v5357
      %v5359 = vpop.f32.mrf.mxu0
      %v5360 = vpop.f32.mrf.mxu0
      %v5361 = vadd.f32 %v5206, %v5360
      %v5362 = vpop.f32.mrf.mxu0
      %5363 = vmatprep.mubr.bf16.mxu0 0
      %5364 = vmatmul.mubr.bf16.gmra.mxu0 %v5266
      %v5365 = vpop.f32.mrf.mxu0
      %v5366 = vadd.f32 %v5206, %v5365
      %v5367 = vpop.f32.mrf.mxu0
      %v5368 = vpop.f32.mrf.mxu0
      %v5369 = vadd.f32 %v5206, %v5368
      %v5370 = vpop.f32.mrf.mxu0
      %5371 = vmatprep.mubr.bf16.mxu0 0
      %5372 = vmatmul.mubr.bf16.gmra.mxu0 %v5269
      %v5373 = vpop.f32.mrf.mxu0
      %v5374 = vadd.f32 %v5206, %v5373
      %v5375 = vpop.f32.mrf.mxu0
      %v5376 = vpop.f32.mrf.mxu0
      %v5377 = vadd.f32 %v5206, %v5376
      %v5378 = vpop.f32.mrf.mxu0
      %5379 = vmatprep.mubr.bf16.mxu0 0
      %5380 = vmatmul.mubr.bf16.gmra.mxu0 %v5272
      %v5381 = vpop.f32.mrf.mxu0
      %v5382 = vadd.f32 %v5206, %v5381
      %v5383 = vpop.f32.mrf.mxu0
      %v5384 = vpop.f32.mrf.mxu0
      %v5385 = vadd.f32 %v5206, %v5384
      %v5386 = vpop.f32.mrf.mxu0
      %5387 = vmatprep.mubr.bf16.mxu0 0
      %5388 = vmatmul.mubr.bf16.gmra.mxu0 %v5275
      %v5389 = vpop.f32.mrf.mxu0
      %v5390 = vadd.f32 %v5206, %v5389
      %v5391 = vpop.f32.mrf.mxu0
      %v5392 = vpop.f32.mrf.mxu0
      %v5393 = vadd.f32 %v5206, %v5392
      %v5394 = vpop.f32.mrf.mxu0
      %5395 = vmatprep.mubr.bf16.mxu0 0
      %5396 = vmatmul.mubr.bf16.gmra.mxu0 %v5278
      %v5397 = vpop.f32.mrf.mxu0
      %v5398 = vadd.f32 %v5206, %v5397
      %v5399 = vpop.f32.mrf.mxu0
      %v5400 = vpop.f32.mrf.mxu0
      %v5401 = vadd.f32 %v5206, %v5400
      %v5402 = vpop.f32.mrf.mxu0
      %5403 = vmatprep.mubr.bf16.mxu0 0
      %5404 = vmatmul.mubr.bf16.gmra.mxu0 %v5281
      %v5405 = vpop.f32.mrf.mxu0
      %v5406 = vadd.f32 %v5206, %v5405
      %v5407 = vpop.f32.mrf.mxu0
      %v5408 = vpop.f32.mrf.mxu0
      %v5409 = vadd.f32 %v5206, %v5408
      %v5410 = vpop.f32.mrf.mxu0
      %5411 = vmatprep.mubr.bf16.mxu0 0
      %5412 = vmatmul.mubr.bf16.gmra.mxu0 %v5284
      %v5413 = vpop.f32.mrf.mxu0
      %v5414 = vadd.f32 %v5206, %v5413
      %v5415 = vpop.f32.mrf.mxu0
      %v5416 = vpop.f32.mrf.mxu0
      %v5417 = vadd.f32 %v5206, %v5416
      %v5418 = vpop.f32.mrf.mxu0
      %5419 = vmatprep.mubr.bf16.mxu0 0
      %5420 = vmatmul.mubr.bf16.gmra.mxu0 %v5287
      %v5421 = vpop.f32.mrf.mxu0
      %v5422 = vadd.f32 %v5206, %v5421
      %v5423 = vpop.f32.mrf.mxu0
      %v5424 = vpop.f32.mrf.mxu0
      %v5425 = vadd.f32 %v5206, %v5424
      %v5426 = vpop.f32.mrf.mxu0
      %5427 = vmatprep.mubr.bf16.mxu0 0
      %5428 = vmatmul.mubr.bf16.gmra.mxu0 %v5290
      %v5429 = vpop.f32.mrf.mxu0
      %v5430 = vadd.f32 %v5206, %v5429
      %v5431 = vpop.f32.mrf.mxu0
      %v5432 = vpop.f32.mrf.mxu0
      %v5433 = vadd.f32 %v5206, %v5432
      %v5434 = vpop.f32.mrf.mxu0
      %5435 = vmatprep.mubr.bf16.mxu0 0
      %5436 = vmatmul.mubr.bf16.gmra.mxu0 %v5293
      %v5437 = vpop.f32.mrf.mxu0
      %v5438 = vadd.f32 %v5206, %v5437
      %v5439 = vpop.f32.mrf.mxu0
      %v5440 = vpop.f32.mrf.mxu0
      %v5441 = vadd.f32 %v5206, %v5440
      %v5442 = vpop.f32.mrf.mxu0
      %5443 = vmatprep.mubr.bf16.mxu0 0
      %5444 = vmatmul.mubr.bf16.gmra.mxu0 %v5296
      %v5445 = vpop.f32.mrf.mxu0
      %v5446 = vadd.f32 %v5206, %v5445
      %v5447 = vpop.f32.mrf.mxu0
      %v5448 = vpop.f32.mrf.mxu0
      %v5449 = vadd.f32 %v5206, %v5448
      %v5450 = vpop.f32.mrf.mxu0
      %5451 = vmatprep.mubr.bf16.mxu0 0
      %5452 = vmatmul.mubr.bf16.gmra.mxu0 %v5299
      %v5453 = vpop.f32.mrf.mxu0
      %v5454 = vadd.f32 %v5206, %v5453
      %v5455 = vpop.f32.mrf.mxu0
      %v5456 = vpop.f32.mrf.mxu0
      %v5457 = vadd.f32 %v5206, %v5456
      %v5458 = vpop.f32.mrf.mxu0
      %5459 = vmatprep.mubr.bf16.mxu0 0
      %5460 = vmatmul.mubr.bf16.gmra.mxu0 %v5302
      %v5461 = vpop.f32.mrf.mxu0
      %v5462 = vadd.f32 %v5206, %v5461
      %v5463 = vpop.f32.mrf.mxu0
      %v5464 = vpop.f32.mrf.mxu0
      %v5465 = vadd.f32 %v5206, %v5464
      %v5466 = vpop.f32.mrf.mxu0
      %5467 = vdwg.mxu0
      %v5468 = vadd.f32 %v5342, %v3534
      %v5469 = vadd.f32 %v5345, %v3535
      %v5470 = vadd.f32 %v5350, %v3536
      %v5471 = vadd.f32 %v5353, %v3537
      %v5472 = vadd.f32 %v5358, %v3538
      %v5473 = vadd.f32 %v5361, %v3539
      %v5474 = vadd.f32 %v5366, %v3540
      %v5475 = vadd.f32 %v5369, %v3541
      %v5476 = vadd.f32 %v5374, %v3542
      %v5477 = vadd.f32 %v5377, %v3543
      %v5478 = vadd.f32 %v5382, %v3544
      %v5479 = vadd.f32 %v5385, %v3545
      %v5480 = vadd.f32 %v5390, %v3546
      %v5481 = vadd.f32 %v5393, %v3547
      %v5482 = vadd.f32 %v5398, %v3548
      %v5483 = vadd.f32 %v5401, %v3549
      %v5484 = vadd.f32 %v5406, %v3550
      %v5485 = vadd.f32 %v5409, %v3551
      %v5486 = vadd.f32 %v5414, %v3552
      %v5487 = vadd.f32 %v5417, %v3553
      %v5488 = vadd.f32 %v5422, %v3554
      %v5489 = vadd.f32 %v5425, %v3555
      %v5490 = vadd.f32 %v5430, %v3556
      %v5491 = vadd.f32 %v5433, %v3557
      %v5492 = vadd.f32 %v5438, %v3558
      %v5493 = vadd.f32 %v5441, %v3559
      %v5494 = vadd.f32 %v5446, %v3560
      %v5495 = vadd.f32 %v5449, %v3561
      %v5496 = vadd.f32 %v5454, %v3562
      %v5497 = vadd.f32 %v5457, %v3563
      %v5498 = vadd.f32 %v5462, %v3564
      %v5499 = vadd.f32 %v5465, %v3565
      %v5500 = vmax.f32 %v5468, 0.0
      %v5501 = vmax.f32 %v5469, 0.0
      %v5502 = vmax.f32 %v5470, 0.0
      %v5503 = vmax.f32 %v5471, 0.0
      %v5504 = vmax.f32 %v5472, 0.0
      %v5505 = vmax.f32 %v5473, 0.0
      %v5506 = vmax.f32 %v5474, 0.0
      %v5507 = vmax.f32 %v5475, 0.0
      %v5508 = vmax.f32 %v5476, 0.0
      %v5509 = vmax.f32 %v5477, 0.0
      %v5510 = vmax.f32 %v5478, 0.0
      %v5511 = vmax.f32 %v5479, 0.0
      %v5512 = vmax.f32 %v5480, 0.0
      %v5513 = vmax.f32 %v5481, 0.0
      %v5514 = vmax.f32 %v5482, 0.0
      %v5515 = vmax.f32 %v5483, 0.0
      %v5516 = vmax.f32 %v5484, 0.0
      %v5517 = vmax.f32 %v5485, 0.0
      %v5518 = vmax.f32 %v5486, 0.0
      %v5519 = vmax.f32 %v5487, 0.0
      %v5520 = vmax.f32 %v5488, 0.0
      %v5521 = vmax.f32 %v5489, 0.0
      %v5522 = vmax.f32 %v5490, 0.0
      %v5523 = vmax.f32 %v5491, 0.0
      %v5524 = vmax.f32 %v5492, 0.0
      %v5525 = vmax.f32 %v5493, 0.0
      %v5526 = vmax.f32 %v5494, 0.0
      %v5527 = vmax.f32 %v5495, 0.0
      %v5528 = vmax.f32 %v5496, 0.0
      %v5529 = vmax.f32 %v5497, 0.0
      %v5530 = vmax.f32 %v5498, 0.0
      %v5531 = vmax.f32 %v5499, 0.0
      %v5532 = vpack.c.bf16 %v5501, %v5500
      %v5533 = vpack.c.bf16 %v5503, %v5502
      %v5534 = vpack.c.bf16 %v5505, %v5504
      %v5535 = vpack.c.bf16 %v5507, %v5506
      %v5536 = vpack.c.bf16 %v5509, %v5508
      %v5537 = vpack.c.bf16 %v5511, %v5510
      %v5538 = vpack.c.bf16 %v5513, %v5512
      %v5539 = vpack.c.bf16 %v5515, %v5514
      %v5540 = vpack.c.bf16 %v5517, %v5516
      %v5541 = vpack.c.bf16 %v5519, %v5518
      %v5542 = vpack.c.bf16 %v5521, %v5520
      %v5543 = vpack.c.bf16 %v5523, %v5522
      %v5544 = vpack.c.bf16 %v5525, %v5524
      %v5545 = vpack.c.bf16 %v5527, %v5526
      %v5546 = vpack.c.bf16 %v5529, %v5528
      %v5547 = vpack.c.bf16 %v5531, %v5530
      %v5548 = vld [vmem:[%s11] sm:$0xf]
      %v5549 = vld [vmem:[%s11 + $0x4] sm:$0xf]
      %v5550 = vld [vmem:[%s11 + $0x8] sm:$0xf]
      %v5551 = vld [vmem:[%s11 + $0xc] sm:$0xf]
      %v5552 = vld [vmem:[#allocation2] sm:$0x1]
      %v5554 = vlaneseq
      %v5555 = vshrl.u32 %v5554, 7
      %v5556 = vsub.s32 0, %v5555
      %v5557 = vrot.slane %v5552, %v5556
      %v5563 = vunpack.c.l.b16 %v5548
      %v5564 = vunpack.c.l.b16 %v5549
      %v5565 = vunpack.c.l.b16 %v5550
      %v5566 = vunpack.c.l.b16 %v5551
      %v5567 = vpack.c.b16 %v5564, %v5563
      %v5568 = vpack.c.b16 %v5566, %v5565
      %v5572 = vsel %vm3605, %v5532, 0
      %v5575 = vsel %vm3605, %v5533, 0
      %v5578 = vsel %vm3605, %v5534, 0
      %v5581 = vsel %vm3605, %v5535, 0
      %v5584 = vsel %vm3605, %v5536, 0
      %v5587 = vsel %vm3605, %v5537, 0
      %v5590 = vsel %vm3605, %v5538, 0
      %v5593 = vsel %vm3605, %v5539, 0
      %v5596 = vsel %vm3605, %v5540, 0
      %v5599 = vsel %vm3605, %v5541, 0
      %v5602 = vsel %vm3605, %v5542, 0
      %v5605 = vsel %vm3605, %v5543, 0
      %v5608 = vsel %vm3605, %v5544, 0
      %v5611 = vsel %vm3605, %v5545, 0
      %v5614 = vsel %vm3605, %v5546, 0
      %v5617 = vsel %vm3605, %v5547, 0
      %5619 = vmatprep.subr.bf16.mxu0 0
      %5620 = vmatpush1.bf16.msra.mxu0 0
      %5621 = vmatprep.subr.bf16.mxu0 0
      %5622 = vmatpush1.bf16.msra.mxu0 0
      %5623 = vmatprep.subr.bf16.mxu0 0
      %5624 = vmatpush1.bf16.msra.mxu0 0
      %5625 = vmatprep.subr.bf16.mxu0 0
      %5626 = vmatpush1.bf16.msra.mxu0 0
      %5627 = vmatprep.subr.bf16.mxu0 0
      %5628 = vmatpush1.bf16.msra.mxu0 0
      %5629 = vmatprep.subr.bf16.mxu0 0
      %5630 = vmatpush1.bf16.msra.mxu0 0
      %5631 = vmatprep.subr.bf16.mxu0 0
      %5632 = vmatpush1.bf16.msra.mxu0 %v5568
      %5633 = vmatprep.subr.bf16.mxu0 0
      %5634 = vmatpush1.bf16.msra.mxu0 %v5567
      %5635 = vmatprep.subr.bf16.mxu0 0
      %5636 = vmatpush2.bf16.msra.mxu0 0
      %5637 = vmatprep.subr.bf16.mxu0 0
      %5638 = vmatpush2.bf16.msra.mxu0 0
      %5639 = vmatprep.subr.bf16.mxu0 0
      %5640 = vmatpush2.bf16.msra.mxu0 0
      %5641 = vmatprep.subr.bf16.mxu0 0
      %5642 = vmatpush2.bf16.msra.mxu0 0
      %5643 = vmatprep.subr.bf16.mxu0 0
      %5644 = vmatpush2.bf16.msra.mxu0 0
      %5645 = vmatprep.subr.bf16.mxu0 0
      %5646 = vmatpush2.bf16.msra.mxu0 0
      %5647 = vmatprep.subr.bf16.mxu0 0
      %5648 = vmatpush2.bf16.msra.mxu0 0
      %5649 = vmatprep.subr.bf16.mxu0 0
      %5650 = vmatpush2.bf16.msra.mxu0 0
      %5651 = vmatprep.mubr.bf16.mxu0 0
      %5652 = vmatmul.mubr.bf16.gmra.mxu0 %v5572
      %v5653 = vpop.f32.mrf.mxu0
      %v5654 = vadd.f32 %v5557, %v5653
      %v5655 = vpop.f32.mrf.mxu0
      %v5656 = vpop.f32.mrf.mxu0
      %v5657 = vadd.f32 %v5557, %v5656
      %v5658 = vpop.f32.mrf.mxu0
      %5659 = vmatprep.mubr.bf16.mxu0 0
      %5660 = vmatmul.mubr.bf16.gmra.mxu0 %v5575
      %v5661 = vpop.f32.mrf.mxu0
      %v5662 = vadd.f32 %v5557, %v5661
      %v5663 = vpop.f32.mrf.mxu0
      %v5664 = vpop.f32.mrf.mxu0
      %v5665 = vadd.f32 %v5557, %v5664
      %v5666 = vpop.f32.mrf.mxu0
      %5667 = vmatprep.mubr.bf16.mxu0 0
      %5668 = vmatmul.mubr.bf16.gmra.mxu0 %v5578
      %v5669 = vpop.f32.mrf.mxu0
      %v5670 = vadd.f32 %v5557, %v5669
      %v5671 = vpop.f32.mrf.mxu0
      %v5672 = vpop.f32.mrf.mxu0
      %v5673 = vadd.f32 %v5557, %v5672
      %v5674 = vpop.f32.mrf.mxu0
      %5675 = vmatprep.mubr.bf16.mxu0 0
      %5676 = vmatmul.mubr.bf16.gmra.mxu0 %v5581
      %v5677 = vpop.f32.mrf.mxu0
      %v5678 = vadd.f32 %v5557, %v5677
      %v5679 = vpop.f32.mrf.mxu0
      %v5680 = vpop.f32.mrf.mxu0
      %v5681 = vadd.f32 %v5557, %v5680
      %v5682 = vpop.f32.mrf.mxu0
      %5683 = vmatprep.mubr.bf16.mxu0 0
      %5684 = vmatmul.mubr.bf16.gmra.mxu0 %v5584
      %v5685 = vpop.f32.mrf.mxu0
      %v5686 = vadd.f32 %v5557, %v5685
      %v5687 = vpop.f32.mrf.mxu0
      %v5688 = vpop.f32.mrf.mxu0
      %v5689 = vadd.f32 %v5557, %v5688
      %v5690 = vpop.f32.mrf.mxu0
      %5691 = vmatprep.mubr.bf16.mxu0 0
      %5692 = vmatmul.mubr.bf16.gmra.mxu0 %v5587
      %v5693 = vpop.f32.mrf.mxu0
      %v5694 = vadd.f32 %v5557, %v5693
      %v5695 = vpop.f32.mrf.mxu0
      %v5696 = vpop.f32.mrf.mxu0
      %v5697 = vadd.f32 %v5557, %v5696
      %v5698 = vpop.f32.mrf.mxu0
      %5699 = vmatprep.mubr.bf16.mxu0 0
      %5700 = vmatmul.mubr.bf16.gmra.mxu0 %v5590
      %v5701 = vpop.f32.mrf.mxu0
      %v5702 = vadd.f32 %v5557, %v5701
      %v5703 = vpop.f32.mrf.mxu0
      %v5704 = vpop.f32.mrf.mxu0
      %v5705 = vadd.f32 %v5557, %v5704
      %v5706 = vpop.f32.mrf.mxu0
      %5707 = vmatprep.mubr.bf16.mxu0 0
      %5708 = vmatmul.mubr.bf16.gmra.mxu0 %v5593
      %v5709 = vpop.f32.mrf.mxu0
      %v5710 = vadd.f32 %v5557, %v5709
      %v5711 = vpop.f32.mrf.mxu0
      %v5712 = vpop.f32.mrf.mxu0
      %v5713 = vadd.f32 %v5557, %v5712
      %v5714 = vpop.f32.mrf.mxu0
      %5715 = vmatprep.mubr.bf16.mxu0 0
      %5716 = vmatmul.mubr.bf16.gmra.mxu0 %v5596
      %v5717 = vpop.f32.mrf.mxu0
      %v5718 = vadd.f32 %v5557, %v5717
      %v5719 = vpop.f32.mrf.mxu0
      %v5720 = vpop.f32.mrf.mxu0
      %v5721 = vadd.f32 %v5557, %v5720
      %v5722 = vpop.f32.mrf.mxu0
      %5723 = vmatprep.mubr.bf16.mxu0 0
      %5724 = vmatmul.mubr.bf16.gmra.mxu0 %v5599
      %v5725 = vpop.f32.mrf.mxu0
      %v5726 = vadd.f32 %v5557, %v5725
      %v5727 = vpop.f32.mrf.mxu0
      %v5728 = vpop.f32.mrf.mxu0
      %v5729 = vadd.f32 %v5557, %v5728
      %v5730 = vpop.f32.mrf.mxu0
      %5731 = vmatprep.mubr.bf16.mxu0 0
      %5732 = vmatmul.mubr.bf16.gmra.mxu0 %v5602
      %v5733 = vpop.f32.mrf.mxu0
      %v5734 = vadd.f32 %v5557, %v5733
      %v5735 = vpop.f32.mrf.mxu0
      %v5736 = vpop.f32.mrf.mxu0
      %v5737 = vadd.f32 %v5557, %v5736
      %v5738 = vpop.f32.mrf.mxu0
      %5739 = vmatprep.mubr.bf16.mxu0 0
      %5740 = vmatmul.mubr.bf16.gmra.mxu0 %v5605
      %v5741 = vpop.f32.mrf.mxu0
      %v5742 = vadd.f32 %v5557, %v5741
      %v5743 = vpop.f32.mrf.mxu0
      %v5744 = vpop.f32.mrf.mxu0
      %v5745 = vadd.f32 %v5557, %v5744
      %v5746 = vpop.f32.mrf.mxu0
      %5747 = vmatprep.mubr.bf16.mxu0 0
      %5748 = vmatmul.mubr.bf16.gmra.mxu0 %v5608
      %v5749 = vpop.f32.mrf.mxu0
      %v5750 = vadd.f32 %v5557, %v5749
      %v5751 = vpop.f32.mrf.mxu0
      %v5752 = vpop.f32.mrf.mxu0
      %v5753 = vadd.f32 %v5557, %v5752
      %v5754 = vpop.f32.mrf.mxu0
      %5755 = vmatprep.mubr.bf16.mxu0 0
      %5756 = vmatmul.mubr.bf16.gmra.mxu0 %v5611
      %v5757 = vpop.f32.mrf.mxu0
      %v5758 = vadd.f32 %v5557, %v5757
      %v5759 = vpop.f32.mrf.mxu0
      %v5760 = vpop.f32.mrf.mxu0
      %v5761 = vadd.f32 %v5557, %v5760
      %v5762 = vpop.f32.mrf.mxu0
      %5763 = vmatprep.mubr.bf16.mxu0 0
      %5764 = vmatmul.mubr.bf16.gmra.mxu0 %v5614
      %v5765 = vpop.f32.mrf.mxu0
      %v5766 = vadd.f32 %v5557, %v5765
      %v5767 = vpop.f32.mrf.mxu0
      %v5768 = vpop.f32.mrf.mxu0
      %v5769 = vadd.f32 %v5557, %v5768
      %v5770 = vpop.f32.mrf.mxu0
      %5771 = vmatprep.mubr.bf16.mxu0 0
      %5772 = vmatmul.mubr.bf16.gmra.mxu0 %v5617
      %v5773 = vpop.f32.mrf.mxu0
      %v5774 = vadd.f32 %v5557, %v5773
      %v5775 = vpop.f32.mrf.mxu0
      %v5776 = vpop.f32.mrf.mxu0
      %v5777 = vadd.f32 %v5557, %v5776
      %v5778 = vpop.f32.mrf.mxu0
      %5779 = vdwg.mxu0
      %vm5780 = vcmask 7168
      %5781 = vst.msk [vmem:[%s606] sm:$0xff] %vm5780, %v5654
      %5782 = vst.msk [vmem:[%s606 + $0x8] sm:$0xff] %vm5780, %v5657
      %5783 = vst.msk [vmem:[%s606 + $0x10] sm:$0xff] %vm5780, %v5662
      %5784 = vst.msk [vmem:[%s606 + $0x18] sm:$0xff] %vm5780, %v5665
      %5785 = vst.msk [vmem:[%s606 + $0x20] sm:$0xff] %vm5780, %v5670
      %5786 = vst.msk [vmem:[%s606 + $0x28] sm:$0xff] %vm5780, %v5673
      %5787 = vst.msk [vmem:[%s606 + $0x30] sm:$0xff] %vm5780, %v5678
      %5788 = vst.msk [vmem:[%s606 + $0x38] sm:$0xff] %vm5780, %v5681
      %5789 = vst.msk [vmem:[%s606 + $0x40] sm:$0xff] %vm5780, %v5686
      %5790 = vst.msk [vmem:[%s606 + $0x48] sm:$0xff] %vm5780, %v5689
      %5791 = vst.msk [vmem:[%s606 + $0x50] sm:$0xff] %vm5780, %v5694
      %5792 = vst.msk [vmem:[%s606 + $0x58] sm:$0xff] %vm5780, %v5697
      %5793 = vst.msk [vmem:[%s606 + $0x60] sm:$0xff] %vm5780, %v5702
      %5794 = vst.msk [vmem:[%s606 + $0x68] sm:$0xff] %vm5780, %v5705
      %5795 = vst.msk [vmem:[%s606 + $0x70] sm:$0xff] %vm5780, %v5710
      %5796 = vst.msk [vmem:[%s606 + $0x78] sm:$0xff] %vm5780, %v5713
      %5797 = vst.msk [vmem:[%s606 + $0x80] sm:$0xff] %vm5780, %v5718
      %5798 = vst.msk [vmem:[%s606 + $0x88] sm:$0xff] %vm5780, %v5721
      %5799 = vst.msk [vmem:[%s606 + $0x90] sm:$0xff] %vm5780, %v5726
      %5800 = vst.msk [vmem:[%s606 + $0x98] sm:$0xff] %vm5780, %v5729
      %5801 = vst.msk [vmem:[%s606 + $0xa0] sm:$0xff] %vm5780, %v5734
      %5802 = vst.msk [vmem:[%s606 + $0xa8] sm:$0xff] %vm5780, %v5737
      %5803 = vst.msk [vmem:[%s606 + $0xb0] sm:$0xff] %vm5780, %v5742
      %5804 = vst.msk [vmem:[%s606 + $0xb8] sm:$0xff] %vm5780, %v5745
      %5805 = vst.msk [vmem:[%s606 + $0xc0] sm:$0xff] %vm5780, %v5750
      %5806 = vst.msk [vmem:[%s606 + $0xc8] sm:$0xff] %vm5780, %v5753
      %5807 = vst.msk [vmem:[%s606 + $0xd0] sm:$0xff] %vm5780, %v5758
      %5808 = vst.msk [vmem:[%s606 + $0xd8] sm:$0xff] %vm5780, %v5761
      %5809 = vst.msk [vmem:[%s606 + $0xe0] sm:$0xff] %vm5780, %v5766
      %5810 = vst.msk [vmem:[%s606 + $0xe8] sm:$0xff] %vm5780, %v5769
      %5811 = vst.msk [vmem:[%s606 + $0xf0] sm:$0xff] %vm5780, %v5774
      %5812 = vst.msk [vmem:[%s606 + $0xf8] sm:$0xff] %vm5780, %v5777
      %s5813 = smul.u32 32, %s32
      %p5814 = scmp.lt.s32.totalorder %s5813, 63
      %s5815 = scalar_select %p5814, %s5813, 63
      %s5816 = smul.addr %s5815, 8
      %s5817 = scalar_lea.vmem %s19, %s5816
      // Predicated region
      $region97: #{initial_task_prediction_forward.1} parent=95 // pred_check
        %p5818 = pneg %p454
      $region98: #{initial_task_prediction_forward.1} parent=95 // pred_check_branch
        %5820 = sbr.rel (%p5818) target = $region100
      $region99: #{initial_task_prediction_forward.1} parent=95 // pred_region
        %s5821 = smul.u32 32, %s32
      $region100: #{initial_task_prediction_forward.1} parent=95 // pred_fallthru
        _
    $region96: #{initial_task_prediction_forward.1} parent=5 // pred_fallthru
      _
    %p5822 = scmp.le.s32.totalorder 2, %s27
    // Predicated region
    $region101: #{initial_task_prediction_forward.1} parent=5 // pred_check
      %p5823 = pneg %p5822
    $region102: #{initial_task_prediction_forward.1} parent=5 // pred_check_branch
      %5825 = sbr.rel (%p5823) target = $region104
    $region103: #{initial_task_prediction_forward.1} parent=5 // pred_region
      %s5826 = ssub.s32 %s27, 2
      // Predicated region
      $region105: #{initial_task_prediction_forward.1} parent=103 // pred_check
        %p5827 = pneg %p460
      $region106: #{initial_task_prediction_forward.1} parent=103 // pred_check_branch
        %5829 = sbr.rel (%p5827) target = $region108
      $region107: #{initial_task_prediction_forward.1} parent=103 // pred_region
        %s5830 = smul.u32 32, %s33
        %p5831 = scmp.lt.s32.totalorder %s5830, 63
        %s5832 = scalar_select %p5831, %s5830, 63
        %s5833 = smul.addr %s5832, 8
        %s5834 = scalar_lea.vmem %s19, %s5833
      $region108: #{initial_task_prediction_forward.1} parent=103 // pred_fallthru
        _
    $region104: #{initial_task_prediction_forward.1} parent=5 // pred_fallthru
      _
  $region6: #{initial_task_prediction_forward.1} parent=0 // loop_footer
    %s31 = sadd.s32 1, %s27
  $region7: #{initial_task_prediction_forward.1} parent=0 // loop_footer_branch
    %26 = sbr.rel target = $region3
  $region8: #{initial_task_prediction_forward.1} parent=0 // loop_exit
    _

</llo_original>
